<compile_context>
chip_gen: v7x
topology: tpu7x:2x2x1
jax: 0.10.0
libtpu: 0.0.40
codegen_flags: <defaults>
</compile_context>

<pallas_src>
import math

import jax
import jax.numpy as jnp
from jax.experimental import pallas as pl
from jax.experimental.pallas import tpu as pltpu

# ---- small synthetic config (same structure as the PyTorch config) ----
EMBED = 128          # config.embedd_dim
N_HEAD = 4           # config.n_head   (EMBED % N_HEAD == 0)
HEAD = EMBED // N_HEAD
N_LAYER = 2          # config.n_layer
VOCAB = 100          # config.vocab_size
BLOCK_SIZE = 64      # config.block_size
HIDDEN = 256         # config.hidden_dimension
EPS = 1e-5           # nn.LayerNorm default eps


# ----------------------------- in-kernel helpers -----------------------------

def _layernorm(x, gamma, beta):
    # one-pass variance: E[x^2] - mean^2  (half the lane reductions)
    mean = jnp.mean(x, axis=-1, keepdims=True)
    meansq = jnp.mean(x * x, axis=-1, keepdims=True)
    var = meansq - mean * mean
    inv = jax.lax.rsqrt(var + EPS)
    return (x - mean) * inv * gamma + beta


_ERF_P = 0.3275911
_ERF_A1 = 0.254829592
_ERF_A2 = -0.284496736
_ERF_A3 = 1.421413741
_ERF_A4 = -1.453152027
_ERF_A5 = 1.061405429


def _erf(x):
    """Abramowitz & Stegun 7.1.26 rational approximation, |err| <= 1.5e-7.
    Built only from elementwise ops guaranteed to lower in Mosaic."""
    a = jnp.abs(x)
    t = 1.0 / (1.0 + _ERF_P * a)
    poly = t * (_ERF_A1 + t * (_ERF_A2 + t * (_ERF_A3 + t * (_ERF_A4 + t * _ERF_A5))))
    y = 1.0 - poly * jnp.exp(-a * a)
    return jnp.where(x >= 0, y, -y)


def _gelu_exact(x):
    # matches nn.GELU() (erf form) to ~1.5e-7
    return 0.5 * x * (1.0 + _erf(x * (1.0 / math.sqrt(2.0))))


# ----------------------------- fused kernel -----------------------------

def encoder_kernel(x_ref, wqkv_ref, bqkv_ref, ln0g_ref, ln0b_ref,
                   w1_ref, b1_ref, w2_ref, b2_ref, ln1g_ref, ln1b_ref,
                   wp_ref, bp_ref, hid_ref, pool_ref):
    """One batch row per grid step: N_LAYER x (attn + LN residual,
    MLP + LN residual), then pooler tanh(x[0] @ Wp + bp)."""
    T, C = x_ref.shape[1], x_ref.shape[2]
    x = x_ref[0]                                              # (T, C)  f32

    for l in range(N_LAYER):                                  # static unroll
        # ---- fused QKV projection (scale folded into Wq/bq); bf16 weights ----
        w_qkv = wqkv_ref[l].astype(jnp.float32)               # (C, 3C)
        qkv = jnp.dot(x, w_qkv,
                      preferred_element_type=jnp.float32) + bqkv_ref[l]
        q = qkv[:, 0:C]                                       # (T, C)
        k = qkv[:, C:2 * C]
        v = qkv[:, 2 * C:3 * C]

        # ---- head-batched attention: build (H, T, hd) once ----
        qh = jnp.stack([q[:, h * HEAD:(h + 1) * HEAD] for h in range(N_HEAD)], axis=0)
        kh = jnp.stack([k[:, h * HEAD:(h + 1) * HEAD] for h in range(N_HEAD)], axis=0)
        vh = jnp.stack([v[:, h * HEAD:(h + 1) * HEAD] for h in range(N_HEAD)], axis=0)

        s = jnp.einsum('hqd,hkd->hqk', qh, kh,
                       preferred_element_type=jnp.float32)    # (H, T, T)
        # single softmax over the combined (H, T, T) scores
        s = s - jnp.max(s, axis=-1, keepdims=True)
        p = jnp.exp(s)
        p = p * pl.reciprocal(jnp.sum(p, axis=-1, keepdims=True), approx=True)
        o = jnp.einsum('hqk,hkd->hqd', p, vh,
                       preferred_element_type=jnp.float32)    # (H, T, hd)
        attn = jnp.concatenate([o[h] for h in range(N_HEAD)], axis=-1)  # (T, C)

        # residual + LayerNorm (dropout = identity in inference)
        x = x + _layernorm(attn, ln0g_ref[l], ln0b_ref[l])

        # ---- MLP: linear1 -> GELU(exact) -> linear2 ----
        h1 = jnp.dot(x, w1_ref[l].astype(jnp.float32),
                     preferred_element_type=jnp.float32) + b1_ref[l]
        h1 = _gelu_exact(h1)
        m = jnp.dot(h1, w2_ref[l].astype(jnp.float32),
                    preferred_element_type=jnp.float32) + b2_ref[l]
        x = x + _layernorm(m, ln1g_ref[l], ln1b_ref[l])

    # ---- outputs: hidden states + pooled tanh head ----
    hid_ref[...] = x.reshape(1, T, C)
    pooled = jnp.tanh(
        jnp.dot(x[0:1, :], wp_ref[...].astype(jnp.float32),
                preferred_element_type=jnp.float32) + bp_ref[...])       # (1, C)
    pool_ref[...] = pooled.reshape(1, 1, C)


# ----------------------------- wrapper -----------------------------

def _const_spec(shape):
    # weight spec: full array, constant block index -> resident across grid steps
    return pl.BlockSpec(shape, lambda b, _n=len(shape): (0,) * _n)


def encoder_blocks(x, fp):
    B, T, C = x.shape
    args = (x, fp["wqkv"], fp["bqkv"], fp["ln0_g"], fp["ln0_b"],
            fp["w1"], fp["b1"], fp["w2"], fp["b2"], fp["ln1_g"], fp["ln1_b"],
            fp["wp"], fp["bp"])
    in_specs = [pl.BlockSpec((1, T, C), lambda b: (b, 0, 0))]            # x
    in_specs += [_const_spec(a.shape) for a in args[1:]]                 # weights
    out_specs = (pl.BlockSpec((1, T, C), lambda b: (b, 0, 0)),           # hidden
                 pl.BlockSpec((1, 1, C), lambda b: (b, 0, 0)))           # pooled
    hidden, pooled3 = pl.pallas_call(
        encoder_kernel,
        grid=(B,),
        out_shape=(jax.ShapeDtypeStruct((B, T, C), jnp.float32),
                   jax.ShapeDtypeStruct((B, 1, C), jnp.float32)),
        in_specs=in_specs,
        out_specs=out_specs,
        compiler_params=pltpu.CompilerParams(
            dimension_semantics=("parallel",),          # megacore sharding on v7x
            vmem_limit_bytes=32 * 1024 * 1024),
    )(*args)
    return hidden, pooled3[:, 0, :]


@jax.jit
def encoder_forward(fused, tokens):
    """pooled_activation, hidden_states = Encoder(tokens)."""
    T = tokens.shape[1]
    # embedding gathers kept in plain JAX (single XLA gather feeding the kernel)
    x = jnp.take(fused["word_emb"], tokens, axis=0) \
        + fused["pos_emb"][:T][None, :, :]
    hidden, pooled = encoder_blocks(x, fused)
    return pooled, hidden


# ----------------------------- parameters -----------------------------

def init_params(key):
    keys = list(jax.random.split(key, 2 + N_LAYER * 7 + 1))
    it = iter(keys)
    nxt = lambda: next(it)

    def lin(k, din, dout, scale=0.02):
        return (scale * jax.random.normal(k, (din, dout), jnp.float32),
                jnp.zeros((1, dout), jnp.float32))

    params = {
        "word_emb": 0.02 * jax.random.normal(nxt(), (VOCAB, EMBED), jnp.float32),
        "pos_emb": 0.02 * jax.random.normal(nxt(), (BLOCK_SIZE, EMBED), jnp.float32),
        "layers": [],
    }
    for _ in range(N_LAYER):
        wq, bq = lin(nxt(), EMBED, EMBED)
        wk, bk = lin(nxt(), EMBED, EMBED)
        wv, bv = lin(nxt(), EMBED, EMBED)
        w1, b1 = lin(nxt(), EMBED, HIDDEN)
        w2, b2 = lin(nxt(), HIDDEN, EMBED)
        g0 = 1.0 + 0.01 * jax.random.normal(nxt(), (1, EMBED), jnp.float32)
        g1 = 1.0 + 0.01 * jax.random.normal(nxt(), (1, EMBED), jnp.float32)
        params["layers"].append(dict(
            wq=wq, bq=bq, wk=wk, bk=bk, wv=wv, bv=bv,
            ln0_g=g0, ln0_b=jnp.zeros((1, EMBED), jnp.float32),
            w1=w1, b1=b1, w2=w2, b2=b2,
            ln1_g=g1, ln1_b=jnp.zeros((1, EMBED), jnp.float32)))
    wp, bp = lin(nxt(), EMBED, EMBED)
    params["pool"] = (wp, bp)
    return params


def fuse_params(params):
    """Host-side, one-time prep:
      * stack per-layer weights along a leading layer axis,
      * fuse Wq|Wk|Wv -> (C, 3C) and fold 1/sqrt(head_dim) into the Q path,
      * store the large matmul weights in bf16 (halves the weight HBM bytes);
        biases / LN params stay f32."""
    scale = 1.0 / math.sqrt(HEAD)
    layers = params["layers"]
    stack = lambda f: jnp.stack([f(lp) for lp in layers], axis=0)
    wp, bp = params["pool"]
    return {
        "word_emb": params["word_emb"],
        "pos_emb": params["pos_emb"],
        "wqkv": stack(lambda lp: jnp.concatenate(
            [lp["wq"] * scale, lp["wk"], lp["wv"]], axis=1)
        ).astype(jnp.bfloat16),                                    # (L, C, 3C) bf16
        "bqkv": stack(lambda lp: jnp.concatenate(
            [lp["bq"] * scale, lp["bk"], lp["bv"]], axis=1)),      # (L, 1, 3C) f32
        "ln0_g": stack(lambda lp: lp["ln0_g"]),
        "ln0_b": stack(lambda lp: lp["ln0_b"]),
        "w1": stack(lambda lp: lp["w1"]).astype(jnp.bfloat16),     # (L, C, H) bf16
        "b1": stack(lambda lp: lp["b1"]),
        "w2": stack(lambda lp: lp["w2"]).astype(jnp.bfloat16),     # (L, H, C) bf16
        "b2": stack(lambda lp: lp["b2"]),
        "ln1_g": stack(lambda lp: lp["ln1_g"]),
        "ln1_b": stack(lambda lp: lp["ln1_b"]),
        "wp": wp.astype(jnp.bfloat16),
        "bp": bp,
    }


# -------------------- pure-JAX reference (for sanity) --------------------

def encoder_reference(params, tokens):
    B, T = tokens.shape
    x = jnp.take(params["word_emb"], tokens, axis=0) + params["pos_emb"][:T][None]

    def ln(v, g, b):
        mean = jnp.mean(v, axis=-1, keepdims=True)
        var = jnp.mean((v - mean) ** 2, axis=-1, keepdims=True)
        return (v - mean) * jax.lax.rsqrt(var + EPS) * g + b

    for lp in params["layers"]:
        q = x @ lp["wq"] + lp["bq"]
        k = x @ lp["wk"] + lp["bk"]
        v = x @ lp["wv"] + lp["bv"]
        q = q.reshape(B, T, N_HEAD, HEAD).transpose(0, 2, 1, 3)
        k = k.reshape(B, T, N_HEAD, HEAD).transpose(0, 2, 1, 3)
        v = v.reshape(B, T, N_HEAD, HEAD).transpose(0, 2, 1, 3)
        s = jnp.einsum("bhqd,bhkd->bhqk", q, k) / jnp.sqrt(jnp.float32(HEAD))
        p = jax.nn.softmax(s, axis=-1)
        attn = jnp.einsum("bhqk,bhkd->bhqd", p, v)
        attn = attn.transpose(0, 2, 1, 3).reshape(B, T, EMBED)
        x = x + ln(attn, lp["ln0_g"][0], lp["ln0_b"][0])
        h = jax.nn.gelu(x @ lp["w1"] + lp["b1"], approximate=False)
        m = h @ lp["w2"] + lp["b2"]
        x = x + ln(m, lp["ln1_g"][0], lp["ln1_b"][0])
    wp, bp = params["pool"]
    pooled = jnp.tanh(x[:, 0, :] @ wp + bp)
    return pooled, x


# ----------------------------- main -----------------------------

if __name__ == "__main__":
    key = jax.random.PRNGKey(0)
    pkey, tkey = jax.random.split(key)
    params = init_params(pkey)
    fused = fuse_params(params)

    B, T = 2, 8
    tokens = jax.random.randint(tkey, (B, T), 0, VOCAB, dtype=jnp.int32)

    pooled, hidden = encoder_forward(fused, tokens)
    pooled = jax.block_until_ready(pooled)
    hidden = jax.block_until_ready(hidden)

    pooled_ref, hidden_ref = encoder_reference(params, tokens)
    assert pooled.shape == (B, EMBED) and hidden.shape == (B, T, EMBED)
    # tolerance covers the deliberate bf16 weight storage plus the EUP
    # approximate-reciprocal softmax path (reference is full f32)
    assert jnp.allclose(pooled, pooled_ref, rtol=2e-2, atol=2e-2)
    assert jnp.allclose(hidden, hidden_ref, rtol=2e-2, atol=2e-2)

    print("KERNEL_OK")
</pallas_src>

<mosaic_0001>
module attributes {stable_mosaic.version = 11 : i64} {
  func.func @encoder_kernel(%arg0: i32, %arg1: memref<1x8x128xf32, #tpu.memory_space<vmem>>, %arg2: memref<2x128x384xbf16, #tpu.memory_space<vmem>>, %arg3: memref<2x1x384xf32, #tpu.memory_space<vmem>>, %arg4: memref<2x1x128xf32, #tpu.memory_space<vmem>>, %arg5: memref<2x1x128xf32, #tpu.memory_space<vmem>>, %arg6: memref<2x128x256xbf16, #tpu.memory_space<vmem>>, %arg7: memref<2x1x256xf32, #tpu.memory_space<vmem>>, %arg8: memref<2x256x128xbf16, #tpu.memory_space<vmem>>, %arg9: memref<2x1x128xf32, #tpu.memory_space<vmem>>, %arg10: memref<2x1x128xf32, #tpu.memory_space<vmem>>, %arg11: memref<2x1x128xf32, #tpu.memory_space<vmem>>, %arg12: memref<128x128xbf16, #tpu.memory_space<vmem>>, %arg13: memref<1x128xf32, #tpu.memory_space<vmem>>, %arg14: memref<1x8x128xf32, #tpu.memory_space<vmem>>, %arg15: memref<1x1x128xf32, #tpu.memory_space<vmem>>) attributes {dimension_semantics = [#tpu.dimension_semantics<parallel>], iteration_bounds = array<i64: 2>, scalar_prefetch = 0 : i64, scratch_operands = 0 : i64, tpu.core_type = #tpu.core_type<tc>, window_params = [{transform_indices = @transform_0, window_bounds = array<i64: 1, 8, 128>}, {pipeline_mode = #tpu.pipeline_mode<synchronous>, transform_indices = @transform_1, window_bounds = array<i64: 2, 128, 384>}, {pipeline_mode = #tpu.pipeline_mode<synchronous>, transform_indices = @transform_2, window_bounds = array<i64: 2, 1, 384>}, {pipeline_mode = #tpu.pipeline_mode<synchronous>, transform_indices = @transform_3, window_bounds = array<i64: 2, 1, 128>}, {pipeline_mode = #tpu.pipeline_mode<synchronous>, transform_indices = @transform_4, window_bounds = array<i64: 2, 1, 128>}, {pipeline_mode = #tpu.pipeline_mode<synchronous>, transform_indices = @transform_5, window_bounds = array<i64: 2, 128, 256>}, {pipeline_mode = #tpu.pipeline_mode<synchronous>, transform_indices = @transform_6, window_bounds = array<i64: 2, 1, 256>}, {pipeline_mode = #tpu.pipeline_mode<synchronous>, transform_indices = @transform_7, window_bounds = array<i64: 2, 256, 128>}, {pipeline_mode = #tpu.pipeline_mode<synchronous>, transform_indices = @transform_8, window_bounds = array<i64: 2, 1, 128>}, {pipeline_mode = #tpu.pipeline_mode<synchronous>, transform_indices = @transform_9, window_bounds = array<i64: 2, 1, 128>}, {pipeline_mode = #tpu.pipeline_mode<synchronous>, transform_indices = @transform_10, window_bounds = array<i64: 2, 1, 128>}, {pipeline_mode = #tpu.pipeline_mode<synchronous>, transform_indices = @transform_11, window_bounds = array<i64: 128, 128>}, {pipeline_mode = #tpu.pipeline_mode<synchronous>, transform_indices = @transform_12, window_bounds = array<i64: 1, 128>}, {transform_indices = @transform_13, window_bounds = array<i64: 1, 8, 128>}, {transform_indices = @transform_14, window_bounds = array<i64: 1, 1, 128>}]} {
    %c0 = arith.constant 0 : index
    %c0_0 = arith.constant 0 : index
    %c0_1 = arith.constant 0 : index
    %0 = vector.load %arg1[%c0, %c0_0, %c0_1] : memref<1x8x128xf32, #tpu.memory_space<vmem>>, vector<1x8x128xf32>
    %1 = vector.shape_cast %0 : vector<1x8x128xf32> to vector<8x128xf32>
    %c0_2 = arith.constant 0 : index
    %c0_3 = arith.constant 0 : index
    %c0_4 = arith.constant 0 : index
    %2 = vector.load %arg2[%c0_2, %c0_3, %c0_4] : memref<2x128x384xbf16, #tpu.memory_space<vmem>>, vector<1x128x384xbf16>
    %3 = vector.shape_cast %2 : vector<1x128x384xbf16> to vector<128x384xbf16>
    %4 = arith.extf %3 : vector<128x384xbf16> to vector<128x384xf32>
    %cst = arith.constant dense<0.000000e+00> : vector<8x384xf32>
    %5 = tpu.matmul %1, %4, %cst {dimension_numbers = #tpu.dot_dimension_numbers<[1], [0], [0], [1], [0, 0, 1, 1], [], []>} : vector<8x128xf32>, vector<128x384xf32>, vector<8x384xf32> -> vector<8x384xf32>
    %c0_5 = arith.constant 0 : index
    %c0_6 = arith.constant 0 : index
    %c0_7 = arith.constant 0 : index
    %6 = vector.load %arg3[%c0_5, %c0_6, %c0_7] : memref<2x1x384xf32, #tpu.memory_space<vmem>>, vector<1x1x384xf32>
    %7 = vector.shape_cast %6 : vector<1x1x384xf32> to vector<1x384xf32>
    %8 = vector.broadcast %7 : vector<1x384xf32> to vector<8x384xf32>
    %9 = arith.addf %5, %8 : vector<8x384xf32>
    %10 = vector.extract_strided_slice %9 {offsets = [0, 0], sizes = [8, 128], strides = [1, 1]} : vector<8x384xf32> to vector<8x128xf32>
    %11 = vector.extract_strided_slice %9 {offsets = [0, 128], sizes = [8, 128], strides = [1, 1]} : vector<8x384xf32> to vector<8x128xf32>
    %12 = vector.extract_strided_slice %9 {offsets = [0, 256], sizes = [8, 128], strides = [1, 1]} : vector<8x384xf32> to vector<8x128xf32>
    %13 = vector.extract_strided_slice %10 {offsets = [0, 0], sizes = [8, 32], strides = [1, 1]} : vector<8x128xf32> to vector<8x32xf32>
    %14 = vector.extract_strided_slice %10 {offsets = [0, 32], sizes = [8, 32], strides = [1, 1]} : vector<8x128xf32> to vector<8x32xf32>
    %15 = vector.extract_strided_slice %10 {offsets = [0, 64], sizes = [8, 32], strides = [1, 1]} : vector<8x128xf32> to vector<8x32xf32>
    %16 = vector.extract_strided_slice %10 {offsets = [0, 96], sizes = [8, 32], strides = [1, 1]} : vector<8x128xf32> to vector<8x32xf32>
    %17 = vector.shape_cast %13 : vector<8x32xf32> to vector<1x8x32xf32>
    %18 = vector.shape_cast %14 : vector<8x32xf32> to vector<1x8x32xf32>
    %19 = vector.shape_cast %15 : vector<8x32xf32> to vector<1x8x32xf32>
    %20 = vector.shape_cast %16 : vector<8x32xf32> to vector<1x8x32xf32>
    %21 = tpu.concatenate %17, %18, %19, %20 in 0 : vector<1x8x32xf32>, vector<1x8x32xf32>, vector<1x8x32xf32>, vector<1x8x32xf32> -> vector<4x8x32xf32>
    %22 = vector.extract_strided_slice %11 {offsets = [0, 0], sizes = [8, 32], strides = [1, 1]} : vector<8x128xf32> to vector<8x32xf32>
    %23 = vector.extract_strided_slice %11 {offsets = [0, 32], sizes = [8, 32], strides = [1, 1]} : vector<8x128xf32> to vector<8x32xf32>
    %24 = vector.extract_strided_slice %11 {offsets = [0, 64], sizes = [8, 32], strides = [1, 1]} : vector<8x128xf32> to vector<8x32xf32>
    %25 = vector.extract_strided_slice %11 {offsets = [0, 96], sizes = [8, 32], strides = [1, 1]} : vector<8x128xf32> to vector<8x32xf32>
    %26 = vector.shape_cast %22 : vector<8x32xf32> to vector<1x8x32xf32>
    %27 = vector.shape_cast %23 : vector<8x32xf32> to vector<1x8x32xf32>
    %28 = vector.shape_cast %24 : vector<8x32xf32> to vector<1x8x32xf32>
    %29 = vector.shape_cast %25 : vector<8x32xf32> to vector<1x8x32xf32>
    %30 = tpu.concatenate %26, %27, %28, %29 in 0 : vector<1x8x32xf32>, vector<1x8x32xf32>, vector<1x8x32xf32>, vector<1x8x32xf32> -> vector<4x8x32xf32>
    %31 = vector.extract_strided_slice %12 {offsets = [0, 0], sizes = [8, 32], strides = [1, 1]} : vector<8x128xf32> to vector<8x32xf32>
    %32 = vector.extract_strided_slice %12 {offsets = [0, 32], sizes = [8, 32], strides = [1, 1]} : vector<8x128xf32> to vector<8x32xf32>
    %33 = vector.extract_strided_slice %12 {offsets = [0, 64], sizes = [8, 32], strides = [1, 1]} : vector<8x128xf32> to vector<8x32xf32>
    %34 = vector.extract_strided_slice %12 {offsets = [0, 96], sizes = [8, 32], strides = [1, 1]} : vector<8x128xf32> to vector<8x32xf32>
    %35 = vector.shape_cast %31 : vector<8x32xf32> to vector<1x8x32xf32>
    %36 = vector.shape_cast %32 : vector<8x32xf32> to vector<1x8x32xf32>
    %37 = vector.shape_cast %33 : vector<8x32xf32> to vector<1x8x32xf32>
    %38 = vector.shape_cast %34 : vector<8x32xf32> to vector<1x8x32xf32>
    %39 = tpu.concatenate %35, %36, %37, %38 in 0 : vector<1x8x32xf32>, vector<1x8x32xf32>, vector<1x8x32xf32>, vector<1x8x32xf32> -> vector<4x8x32xf32>
    "tpu.trace_start"() <{level = 10 : i32, message = "hqd,hkd->hqk"}> : () -> ()
    %cst_8 = arith.constant dense<0.000000e+00> : vector<4x8x8xf32>
    %40 = tpu.matmul %21, %30, %cst_8 {dimension_numbers = #tpu.dot_dimension_numbers<[2], [2], [1], [1], [0, 0, 0, 1, 1, 1], [0], [0]>} : vector<4x8x32xf32>, vector<4x8x32xf32>, vector<4x8x8xf32> -> vector<4x8x8xf32>
    "tpu.trace_stop"() : () -> ()
    %cst_9 = arith.constant dense<0xFF800000> : vector<4x8xf32>
    %41 = vector.multi_reduction <maximumf>, %40, %cst_9 [2] : vector<4x8x8xf32> to vector<4x8xf32>
    %42 = vector.shape_cast %41 : vector<4x8xf32> to vector<4x8x1xf32>
    %43 = vector.broadcast %42 : vector<4x8x1xf32> to vector<4x8x8xf32>
    %44 = arith.subf %40, %43 : vector<4x8x8xf32>
    %45 = math.exp %44 : vector<4x8x8xf32>
    %cst_10 = arith.constant dense<0.000000e+00> : vector<4x8xf32>
    %46 = vector.multi_reduction <add>, %45, %cst_10 [2] : vector<4x8x8xf32> to vector<4x8xf32>
    %47 = vector.shape_cast %46 : vector<4x8xf32> to vector<4x8x1xf32>
    %48 = tpu.reciprocal %47 {approx = true} : vector<4x8x1xf32> -> vector<4x8x1xf32>
    %49 = vector.broadcast %48 : vector<4x8x1xf32> to vector<4x8x8xf32>
    %50 = arith.mulf %45, %49 : vector<4x8x8xf32>
    "tpu.trace_start"() <{level = 10 : i32, message = "hqk,hkd->hqd"}> : () -> ()
    %cst_11 = arith.constant dense<0.000000e+00> : vector<4x8x32xf32>
    %51 = tpu.matmul %50, %39, %cst_11 {dimension_numbers = #tpu.dot_dimension_numbers<[2], [1], [1], [2], [0, 0, 0, 1, 1, 2], [0], [0]>} : vector<4x8x8xf32>, vector<4x8x32xf32>, vector<4x8x32xf32> -> vector<4x8x32xf32>
    "tpu.trace_stop"() : () -> ()
    %52 = vector.extract_strided_slice %51 {offsets = [0, 0, 0], sizes = [1, 8, 32], strides = [1, 1, 1]} : vector<4x8x32xf32> to vector<1x8x32xf32>
    %53 = vector.shape_cast %52 : vector<1x8x32xf32> to vector<8x32xf32>
    %54 = vector.extract_strided_slice %51 {offsets = [1, 0, 0], sizes = [1, 8, 32], strides = [1, 1, 1]} : vector<4x8x32xf32> to vector<1x8x32xf32>
    %55 = vector.shape_cast %54 : vector<1x8x32xf32> to vector<8x32xf32>
    %56 = vector.extract_strided_slice %51 {offsets = [2, 0, 0], sizes = [1, 8, 32], strides = [1, 1, 1]} : vector<4x8x32xf32> to vector<1x8x32xf32>
    %57 = vector.shape_cast %56 : vector<1x8x32xf32> to vector<8x32xf32>
    %58 = vector.extract_strided_slice %51 {offsets = [3, 0, 0], sizes = [1, 8, 32], strides = [1, 1, 1]} : vector<4x8x32xf32> to vector<1x8x32xf32>
    %59 = vector.shape_cast %58 : vector<1x8x32xf32> to vector<8x32xf32>
    %60 = tpu.concatenate %53, %55, %57, %59 in 1 : vector<8x32xf32>, vector<8x32xf32>, vector<8x32xf32>, vector<8x32xf32> -> vector<8x128xf32>
    %c0_12 = arith.constant 0 : index
    %c0_13 = arith.constant 0 : index
    %c0_14 = arith.constant 0 : index
    %61 = vector.load %arg4[%c0_12, %c0_13, %c0_14] : memref<2x1x128xf32, #tpu.memory_space<vmem>>, vector<1x1x128xf32>
    %62 = vector.shape_cast %61 : vector<1x1x128xf32> to vector<1x128xf32>
    %c0_15 = arith.constant 0 : index
    %c0_16 = arith.constant 0 : index
    %c0_17 = arith.constant 0 : index
    %63 = vector.load %arg5[%c0_15, %c0_16, %c0_17] : memref<2x1x128xf32, #tpu.memory_space<vmem>>, vector<1x1x128xf32>
    %64 = vector.shape_cast %63 : vector<1x1x128xf32> to vector<1x128xf32>
    %cst_18 = arith.constant dense<0.000000e+00> : vector<8xf32>
    %65 = vector.multi_reduction <add>, %60, %cst_18 [1] : vector<8x128xf32> to vector<8xf32>
    %66 = vector.shape_cast %65 : vector<8xf32> to vector<8x1xf32>
    %cst_19 = arith.constant 1.280000e+02 : f32
    %67 = vector.broadcast %cst_19 : f32 to vector<8x1xf32>
    %68 = arith.divf %66, %67 : vector<8x1xf32>
    %69 = arith.mulf %60, %60 : vector<8x128xf32>
    %cst_20 = arith.constant dense<0.000000e+00> : vector<8xf32>
    %70 = vector.multi_reduction <add>, %69, %cst_20 [1] : vector<8x128xf32> to vector<8xf32>
    %71 = vector.shape_cast %70 : vector<8xf32> to vector<8x1xf32>
    %cst_21 = arith.constant 1.280000e+02 : f32
    %72 = vector.broadcast %cst_21 : f32 to vector<8x1xf32>
    %73 = arith.divf %71, %72 : vector<8x1xf32>
    %74 = arith.mulf %68, %68 : vector<8x1xf32>
    %75 = arith.subf %73, %74 : vector<8x1xf32>
    %cst_22 = arith.constant 9.99999974E-6 : f32
    %76 = vector.broadcast %cst_22 : f32 to vector<8x1xf32>
    %77 = arith.addf %75, %76 : vector<8x1xf32>
    %78 = math.rsqrt %77 : vector<8x1xf32>
    %79 = vector.broadcast %68 : vector<8x1xf32> to vector<8x128xf32>
    %80 = arith.subf %60, %79 : vector<8x128xf32>
    %81 = vector.broadcast %78 : vector<8x1xf32> to vector<8x128xf32>
    %82 = arith.mulf %80, %81 : vector<8x128xf32>
    %83 = vector.broadcast %62 : vector<1x128xf32> to vector<8x128xf32>
    %84 = arith.mulf %82, %83 : vector<8x128xf32>
    %85 = vector.broadcast %64 : vector<1x128xf32> to vector<8x128xf32>
    %86 = arith.addf %84, %85 : vector<8x128xf32>
    %87 = arith.addf %1, %86 : vector<8x128xf32>
    %c0_23 = arith.constant 0 : index
    %c0_24 = arith.constant 0 : index
    %c0_25 = arith.constant 0 : index
    %88 = vector.load %arg6[%c0_23, %c0_24, %c0_25] : memref<2x128x256xbf16, #tpu.memory_space<vmem>>, vector<1x128x256xbf16>
    %89 = vector.shape_cast %88 : vector<1x128x256xbf16> to vector<128x256xbf16>
    %90 = arith.extf %89 : vector<128x256xbf16> to vector<128x256xf32>
    %cst_26 = arith.constant dense<0.000000e+00> : vector<8x256xf32>
    %91 = tpu.matmul %87, %90, %cst_26 {dimension_numbers = #tpu.dot_dimension_numbers<[1], [0], [0], [1], [0, 0, 1, 1], [], []>} : vector<8x128xf32>, vector<128x256xf32>, vector<8x256xf32> -> vector<8x256xf32>
    %c0_27 = arith.constant 0 : index
    %c0_28 = arith.constant 0 : index
    %c0_29 = arith.constant 0 : index
    %92 = vector.load %arg7[%c0_27, %c0_28, %c0_29] : memref<2x1x256xf32, #tpu.memory_space<vmem>>, vector<1x1x256xf32>
    %93 = vector.shape_cast %92 : vector<1x1x256xf32> to vector<1x256xf32>
    %94 = vector.broadcast %93 : vector<1x256xf32> to vector<8x256xf32>
    %95 = arith.addf %91, %94 : vector<8x256xf32>
    %cst_30 = arith.constant 5.000000e-01 : f32
    %96 = vector.broadcast %cst_30 : f32 to vector<8x256xf32>
    %97 = arith.mulf %96, %95 : vector<8x256xf32>
    %cst_31 = arith.constant 0.707106769 : f32
    %98 = vector.broadcast %cst_31 : f32 to vector<8x256xf32>
    %99 = arith.mulf %95, %98 : vector<8x256xf32>
    %100 = math.absf %99 : vector<8x256xf32>
    %cst_32 = arith.constant 0.327591091 : f32
    %101 = vector.broadcast %cst_32 : f32 to vector<8x256xf32>
    %102 = arith.mulf %101, %100 : vector<8x256xf32>
    %cst_33 = arith.constant 1.000000e+00 : f32
    %103 = vector.broadcast %cst_33 : f32 to vector<8x256xf32>
    %104 = arith.addf %103, %102 : vector<8x256xf32>
    %cst_34 = arith.constant 1.000000e+00 : f32
    %105 = vector.broadcast %cst_34 : f32 to vector<8x256xf32>
    %106 = arith.divf %105, %104 : vector<8x256xf32>
    %cst_35 = arith.constant 1.06140542 : f32
    %107 = vector.broadcast %cst_35 : f32 to vector<8x256xf32>
    %108 = arith.mulf %106, %107 : vector<8x256xf32>
    %cst_36 = arith.constant -1.45315206 : f32
    %109 = vector.broadcast %cst_36 : f32 to vector<8x256xf32>
    %110 = arith.addf %109, %108 : vector<8x256xf32>
    %111 = arith.mulf %106, %110 : vector<8x256xf32>
    %cst_37 = arith.constant 1.42141378 : f32
    %112 = vector.broadcast %cst_37 : f32 to vector<8x256xf32>
    %113 = arith.addf %112, %111 : vector<8x256xf32>
    %114 = arith.mulf %106, %113 : vector<8x256xf32>
    %cst_38 = arith.constant -0.284496725 : f32
    %115 = vector.broadcast %cst_38 : f32 to vector<8x256xf32>
    %116 = arith.addf %115, %114 : vector<8x256xf32>
    %117 = arith.mulf %106, %116 : vector<8x256xf32>
    %cst_39 = arith.constant 0.254829586 : f32
    %118 = vector.broadcast %cst_39 : f32 to vector<8x256xf32>
    %119 = arith.addf %118, %117 : vector<8x256xf32>
    %120 = arith.mulf %106, %119 : vector<8x256xf32>
    %cst_40 = arith.constant 0.000000e+00 : f32
    %121 = vector.broadcast %cst_40 : f32 to vector<8x256xf32>
    %122 = arith.subf %121, %100 : vector<8x256xf32>
    %123 = arith.mulf %122, %100 : vector<8x256xf32>
    %124 = math.exp %123 : vector<8x256xf32>
    %125 = arith.mulf %120, %124 : vector<8x256xf32>
    %cst_41 = arith.constant 1.000000e+00 : f32
    %126 = vector.broadcast %cst_41 : f32 to vector<8x256xf32>
    %127 = arith.subf %126, %125 : vector<8x256xf32>
    %cst_42 = arith.constant 0.000000e+00 : f32
    %128 = vector.broadcast %cst_42 : f32 to vector<8x256xf32>
    %129 = arith.cmpf oge, %99, %128 : vector<8x256xf32>
    %cst_43 = arith.constant 0.000000e+00 : f32
    %130 = vector.broadcast %cst_43 : f32 to vector<8x256xf32>
    %131 = arith.subf %130, %127 : vector<8x256xf32>
    %132 = arith.select %129, %127, %131 : vector<8x256xi1>, vector<8x256xf32>
    %cst_44 = arith.constant 1.000000e+00 : f32
    %133 = vector.broadcast %cst_44 : f32 to vector<8x256xf32>
    %134 = arith.addf %133, %132 : vector<8x256xf32>
    %135 = arith.mulf %97, %134 : vector<8x256xf32>
    %c0_45 = arith.constant 0 : index
    %c0_46 = arith.constant 0 : index
    %c0_47 = arith.constant 0 : index
    %136 = vector.load %arg8[%c0_45, %c0_46, %c0_47] : memref<2x256x128xbf16, #tpu.memory_space<vmem>>, vector<1x256x128xbf16>
    %137 = vector.shape_cast %136 : vector<1x256x128xbf16> to vector<256x128xbf16>
    %138 = arith.extf %137 : vector<256x128xbf16> to vector<256x128xf32>
    %cst_48 = arith.constant dense<0.000000e+00> : vector<8x128xf32>
    %139 = tpu.matmul %135, %138, %cst_48 {dimension_numbers = #tpu.dot_dimension_numbers<[1], [0], [0], [1], [0, 0, 1, 1], [], []>} : vector<8x256xf32>, vector<256x128xf32>, vector<8x128xf32> -> vector<8x128xf32>
    %c0_49 = arith.constant 0 : index
    %c0_50 = arith.constant 0 : index
    %c0_51 = arith.constant 0 : index
    %140 = vector.load %arg9[%c0_49, %c0_50, %c0_51] : memref<2x1x128xf32, #tpu.memory_space<vmem>>, vector<1x1x128xf32>
    %141 = vector.shape_cast %140 : vector<1x1x128xf32> to vector<1x128xf32>
    %142 = vector.broadcast %141 : vector<1x128xf32> to vector<8x128xf32>
    %143 = arith.addf %139, %142 : vector<8x128xf32>
    %c0_52 = arith.constant 0 : index
    %c0_53 = arith.constant 0 : index
    %c0_54 = arith.constant 0 : index
    %144 = vector.load %arg10[%c0_52, %c0_53, %c0_54] : memref<2x1x128xf32, #tpu.memory_space<vmem>>, vector<1x1x128xf32>
    %145 = vector.shape_cast %144 : vector<1x1x128xf32> to vector<1x128xf32>
    %c0_55 = arith.constant 0 : index
    %c0_56 = arith.constant 0 : index
    %c0_57 = arith.constant 0 : index
    %146 = vector.load %arg11[%c0_55, %c0_56, %c0_57] : memref<2x1x128xf32, #tpu.memory_space<vmem>>, vector<1x1x128xf32>
    %147 = vector.shape_cast %146 : vector<1x1x128xf32> to vector<1x128xf32>
    %cst_58 = arith.constant dense<0.000000e+00> : vector<8xf32>
    %148 = vector.multi_reduction <add>, %143, %cst_58 [1] : vector<8x128xf32> to vector<8xf32>
    %149 = vector.shape_cast %148 : vector<8xf32> to vector<8x1xf32>
    %cst_59 = arith.constant 1.280000e+02 : f32
    %150 = vector.broadcast %cst_59 : f32 to vector<8x1xf32>
    %151 = arith.divf %149, %150 : vector<8x1xf32>
    %152 = arith.mulf %143, %143 : vector<8x128xf32>
    %cst_60 = arith.constant dense<0.000000e+00> : vector<8xf32>
    %153 = vector.multi_reduction <add>, %152, %cst_60 [1] : vector<8x128xf32> to vector<8xf32>
    %154 = vector.shape_cast %153 : vector<8xf32> to vector<8x1xf32>
    %cst_61 = arith.constant 1.280000e+02 : f32
    %155 = vector.broadcast %cst_61 : f32 to vector<8x1xf32>
    %156 = arith.divf %154, %155 : vector<8x1xf32>
    %157 = arith.mulf %151, %151 : vector<8x1xf32>
    %158 = arith.subf %156, %157 : vector<8x1xf32>
    %cst_62 = arith.constant 9.99999974E-6 : f32
    %159 = vector.broadcast %cst_62 : f32 to vector<8x1xf32>
    %160 = arith.addf %158, %159 : vector<8x1xf32>
    %161 = math.rsqrt %160 : vector<8x1xf32>
    %162 = vector.broadcast %151 : vector<8x1xf32> to vector<8x128xf32>
    %163 = arith.subf %143, %162 : vector<8x128xf32>
    %164 = vector.broadcast %161 : vector<8x1xf32> to vector<8x128xf32>
    %165 = arith.mulf %163, %164 : vector<8x128xf32>
    %166 = vector.broadcast %145 : vector<1x128xf32> to vector<8x128xf32>
    %167 = arith.mulf %165, %166 : vector<8x128xf32>
    %168 = vector.broadcast %147 : vector<1x128xf32> to vector<8x128xf32>
    %169 = arith.addf %167, %168 : vector<8x128xf32>
    %170 = arith.addf %87, %169 : vector<8x128xf32>
    %c1 = arith.constant 1 : index
    %c0_63 = arith.constant 0 : index
    %c0_64 = arith.constant 0 : index
    %171 = vector.load %arg2[%c1, %c0_63, %c0_64] : memref<2x128x384xbf16, #tpu.memory_space<vmem>>, vector<1x128x384xbf16>
    %172 = vector.shape_cast %171 : vector<1x128x384xbf16> to vector<128x384xbf16>
    %173 = arith.extf %172 : vector<128x384xbf16> to vector<128x384xf32>
    %cst_65 = arith.constant dense<0.000000e+00> : vector<8x384xf32>
    %174 = tpu.matmul %170, %173, %cst_65 {dimension_numbers = #tpu.dot_dimension_numbers<[1], [0], [0], [1], [0, 0, 1, 1], [], []>} : vector<8x128xf32>, vector<128x384xf32>, vector<8x384xf32> -> vector<8x384xf32>
    %c1_66 = arith.constant 1 : index
    %c0_67 = arith.constant 0 : index
    %c0_68 = arith.constant 0 : index
    %175 = vector.load %arg3[%c1_66, %c0_67, %c0_68] : memref<2x1x384xf32, #tpu.memory_space<vmem>>, vector<1x1x384xf32>
    %176 = vector.shape_cast %175 : vector<1x1x384xf32> to vector<1x384xf32>
    %177 = vector.broadcast %176 : vector<1x384xf32> to vector<8x384xf32>
    %178 = arith.addf %174, %177 : vector<8x384xf32>
    %179 = vector.extract_strided_slice %178 {offsets = [0, 0], sizes = [8, 128], strides = [1, 1]} : vector<8x384xf32> to vector<8x128xf32>
    %180 = vector.extract_strided_slice %178 {offsets = [0, 128], sizes = [8, 128], strides = [1, 1]} : vector<8x384xf32> to vector<8x128xf32>
    %181 = vector.extract_strided_slice %178 {offsets = [0, 256], sizes = [8, 128], strides = [1, 1]} : vector<8x384xf32> to vector<8x128xf32>
    %182 = vector.extract_strided_slice %179 {offsets = [0, 0], sizes = [8, 32], strides = [1, 1]} : vector<8x128xf32> to vector<8x32xf32>
    %183 = vector.extract_strided_slice %179 {offsets = [0, 32], sizes = [8, 32], strides = [1, 1]} : vector<8x128xf32> to vector<8x32xf32>
    %184 = vector.extract_strided_slice %179 {offsets = [0, 64], sizes = [8, 32], strides = [1, 1]} : vector<8x128xf32> to vector<8x32xf32>
    %185 = vector.extract_strided_slice %179 {offsets = [0, 96], sizes = [8, 32], strides = [1, 1]} : vector<8x128xf32> to vector<8x32xf32>
    %186 = vector.shape_cast %182 : vector<8x32xf32> to vector<1x8x32xf32>
    %187 = vector.shape_cast %183 : vector<8x32xf32> to vector<1x8x32xf32>
    %188 = vector.shape_cast %184 : vector<8x32xf32> to vector<1x8x32xf32>
    %189 = vector.shape_cast %185 : vector<8x32xf32> to vector<1x8x32xf32>
    %190 = tpu.concatenate %186, %187, %188, %189 in 0 : vector<1x8x32xf32>, vector<1x8x32xf32>, vector<1x8x32xf32>, vector<1x8x32xf32> -> vector<4x8x32xf32>
    %191 = vector.extract_strided_slice %180 {offsets = [0, 0], sizes = [8, 32], strides = [1, 1]} : vector<8x128xf32> to vector<8x32xf32>
    %192 = vector.extract_strided_slice %180 {offsets = [0, 32], sizes = [8, 32], strides = [1, 1]} : vector<8x128xf32> to vector<8x32xf32>
    %193 = vector.extract_strided_slice %180 {offsets = [0, 64], sizes = [8, 32], strides = [1, 1]} : vector<8x128xf32> to vector<8x32xf32>
    %194 = vector.extract_strided_slice %180 {offsets = [0, 96], sizes = [8, 32], strides = [1, 1]} : vector<8x128xf32> to vector<8x32xf32>
    %195 = vector.shape_cast %191 : vector<8x32xf32> to vector<1x8x32xf32>
    %196 = vector.shape_cast %192 : vector<8x32xf32> to vector<1x8x32xf32>
    %197 = vector.shape_cast %193 : vector<8x32xf32> to vector<1x8x32xf32>
    %198 = vector.shape_cast %194 : vector<8x32xf32> to vector<1x8x32xf32>
    %199 = tpu.concatenate %195, %196, %197, %198 in 0 : vector<1x8x32xf32>, vector<1x8x32xf32>, vector<1x8x32xf32>, vector<1x8x32xf32> -> vector<4x8x32xf32>
    %200 = vector.extract_strided_slice %181 {offsets = [0, 0], sizes = [8, 32], strides = [1, 1]} : vector<8x128xf32> to vector<8x32xf32>
    %201 = vector.extract_strided_slice %181 {offsets = [0, 32], sizes = [8, 32], strides = [1, 1]} : vector<8x128xf32> to vector<8x32xf32>
    %202 = vector.extract_strided_slice %181 {offsets = [0, 64], sizes = [8, 32], strides = [1, 1]} : vector<8x128xf32> to vector<8x32xf32>
    %203 = vector.extract_strided_slice %181 {offsets = [0, 96], sizes = [8, 32], strides = [1, 1]} : vector<8x128xf32> to vector<8x32xf32>
    %204 = vector.shape_cast %200 : vector<8x32xf32> to vector<1x8x32xf32>
    %205 = vector.shape_cast %201 : vector<8x32xf32> to vector<1x8x32xf32>
    %206 = vector.shape_cast %202 : vector<8x32xf32> to vector<1x8x32xf32>
    %207 = vector.shape_cast %203 : vector<8x32xf32> to vector<1x8x32xf32>
    %208 = tpu.concatenate %204, %205, %206, %207 in 0 : vector<1x8x32xf32>, vector<1x8x32xf32>, vector<1x8x32xf32>, vector<1x8x32xf32> -> vector<4x8x32xf32>
    "tpu.trace_start"() <{level = 10 : i32, message = "hqd,hkd->hqk"}> : () -> ()
    %cst_69 = arith.constant dense<0.000000e+00> : vector<4x8x8xf32>
    %209 = tpu.matmul %190, %199, %cst_69 {dimension_numbers = #tpu.dot_dimension_numbers<[2], [2], [1], [1], [0, 0, 0, 1, 1, 1], [0], [0]>} : vector<4x8x32xf32>, vector<4x8x32xf32>, vector<4x8x8xf32> -> vector<4x8x8xf32>
    "tpu.trace_stop"() : () -> ()
    %cst_70 = arith.constant dense<0xFF800000> : vector<4x8xf32>
    %210 = vector.multi_reduction <maximumf>, %209, %cst_70 [2] : vector<4x8x8xf32> to vector<4x8xf32>
    %211 = vector.shape_cast %210 : vector<4x8xf32> to vector<4x8x1xf32>
    %212 = vector.broadcast %211 : vector<4x8x1xf32> to vector<4x8x8xf32>
    %213 = arith.subf %209, %212 : vector<4x8x8xf32>
    %214 = math.exp %213 : vector<4x8x8xf32>
    %cst_71 = arith.constant dense<0.000000e+00> : vector<4x8xf32>
    %215 = vector.multi_reduction <add>, %214, %cst_71 [2] : vector<4x8x8xf32> to vector<4x8xf32>
    %216 = vector.shape_cast %215 : vector<4x8xf32> to vector<4x8x1xf32>
    %217 = tpu.reciprocal %216 {approx = true} : vector<4x8x1xf32> -> vector<4x8x1xf32>
    %218 = vector.broadcast %217 : vector<4x8x1xf32> to vector<4x8x8xf32>
    %219 = arith.mulf %214, %218 : vector<4x8x8xf32>
    "tpu.trace_start"() <{level = 10 : i32, message = "hqk,hkd->hqd"}> : () -> ()
    %cst_72 = arith.constant dense<0.000000e+00> : vector<4x8x32xf32>
    %220 = tpu.matmul %219, %208, %cst_72 {dimension_numbers = #tpu.dot_dimension_numbers<[2], [1], [1], [2], [0, 0, 0, 1, 1, 2], [0], [0]>} : vector<4x8x8xf32>, vector<4x8x32xf32>, vector<4x8x32xf32> -> vector<4x8x32xf32>
    "tpu.trace_stop"() : () -> ()
    %221 = vector.extract_strided_slice %220 {offsets = [0, 0, 0], sizes = [1, 8, 32], strides = [1, 1, 1]} : vector<4x8x32xf32> to vector<1x8x32xf32>
    %222 = vector.shape_cast %221 : vector<1x8x32xf32> to vector<8x32xf32>
    %223 = vector.extract_strided_slice %220 {offsets = [1, 0, 0], sizes = [1, 8, 32], strides = [1, 1, 1]} : vector<4x8x32xf32> to vector<1x8x32xf32>
    %224 = vector.shape_cast %223 : vector<1x8x32xf32> to vector<8x32xf32>
    %225 = vector.extract_strided_slice %220 {offsets = [2, 0, 0], sizes = [1, 8, 32], strides = [1, 1, 1]} : vector<4x8x32xf32> to vector<1x8x32xf32>
    %226 = vector.shape_cast %225 : vector<1x8x32xf32> to vector<8x32xf32>
    %227 = vector.extract_strided_slice %220 {offsets = [3, 0, 0], sizes = [1, 8, 32], strides = [1, 1, 1]} : vector<4x8x32xf32> to vector<1x8x32xf32>
    %228 = vector.shape_cast %227 : vector<1x8x32xf32> to vector<8x32xf32>
    %229 = tpu.concatenate %222, %224, %226, %228 in 1 : vector<8x32xf32>, vector<8x32xf32>, vector<8x32xf32>, vector<8x32xf32> -> vector<8x128xf32>
    %c1_73 = arith.constant 1 : index
    %c0_74 = arith.constant 0 : index
    %c0_75 = arith.constant 0 : index
    %230 = vector.load %arg4[%c1_73, %c0_74, %c0_75] : memref<2x1x128xf32, #tpu.memory_space<vmem>>, vector<1x1x128xf32>
    %231 = vector.shape_cast %230 : vector<1x1x128xf32> to vector<1x128xf32>
    %c1_76 = arith.constant 1 : index
    %c0_77 = arith.constant 0 : index
    %c0_78 = arith.constant 0 : index
    %232 = vector.load %arg5[%c1_76, %c0_77, %c0_78] : memref<2x1x128xf32, #tpu.memory_space<vmem>>, vector<1x1x128xf32>
    %233 = vector.shape_cast %232 : vector<1x1x128xf32> to vector<1x128xf32>
    %cst_79 = arith.constant dense<0.000000e+00> : vector<8xf32>
    %234 = vector.multi_reduction <add>, %229, %cst_79 [1] : vector<8x128xf32> to vector<8xf32>
    %235 = vector.shape_cast %234 : vector<8xf32> to vector<8x1xf32>
    %cst_80 = arith.constant 1.280000e+02 : f32
    %236 = vector.broadcast %cst_80 : f32 to vector<8x1xf32>
    %237 = arith.divf %235, %236 : vector<8x1xf32>
    %238 = arith.mulf %229, %229 : vector<8x128xf32>
    %cst_81 = arith.constant dense<0.000000e+00> : vector<8xf32>
    %239 = vector.multi_reduction <add>, %238, %cst_81 [1] : vector<8x128xf32> to vector<8xf32>
    %240 = vector.shape_cast %239 : vector<8xf32> to vector<8x1xf32>
    %cst_82 = arith.constant 1.280000e+02 : f32
    %241 = vector.broadcast %cst_82 : f32 to vector<8x1xf32>
    %242 = arith.divf %240, %241 : vector<8x1xf32>
    %243 = arith.mulf %237, %237 : vector<8x1xf32>
    %244 = arith.subf %242, %243 : vector<8x1xf32>
    %cst_83 = arith.constant 9.99999974E-6 : f32
    %245 = vector.broadcast %cst_83 : f32 to vector<8x1xf32>
    %246 = arith.addf %244, %245 : vector<8x1xf32>
    %247 = math.rsqrt %246 : vector<8x1xf32>
    %248 = vector.broadcast %237 : vector<8x1xf32> to vector<8x128xf32>
    %249 = arith.subf %229, %248 : vector<8x128xf32>
    %250 = vector.broadcast %247 : vector<8x1xf32> to vector<8x128xf32>
    %251 = arith.mulf %249, %250 : vector<8x128xf32>
    %252 = vector.broadcast %231 : vector<1x128xf32> to vector<8x128xf32>
    %253 = arith.mulf %251, %252 : vector<8x128xf32>
    %254 = vector.broadcast %233 : vector<1x128xf32> to vector<8x128xf32>
    %255 = arith.addf %253, %254 : vector<8x128xf32>
    %256 = arith.addf %170, %255 : vector<8x128xf32>
    %c1_84 = arith.constant 1 : index
    %c0_85 = arith.constant 0 : index
    %c0_86 = arith.constant 0 : index
    %257 = vector.load %arg6[%c1_84, %c0_85, %c0_86] : memref<2x128x256xbf16, #tpu.memory_space<vmem>>, vector<1x128x256xbf16>
    %258 = vector.shape_cast %257 : vector<1x128x256xbf16> to vector<128x256xbf16>
    %259 = arith.extf %258 : vector<128x256xbf16> to vector<128x256xf32>
    %cst_87 = arith.constant dense<0.000000e+00> : vector<8x256xf32>
    %260 = tpu.matmul %256, %259, %cst_87 {dimension_numbers = #tpu.dot_dimension_numbers<[1], [0], [0], [1], [0, 0, 1, 1], [], []>} : vector<8x128xf32>, vector<128x256xf32>, vector<8x256xf32> -> vector<8x256xf32>
    %c1_88 = arith.constant 1 : index
    %c0_89 = arith.constant 0 : index
    %c0_90 = arith.constant 0 : index
    %261 = vector.load %arg7[%c1_88, %c0_89, %c0_90] : memref<2x1x256xf32, #tpu.memory_space<vmem>>, vector<1x1x256xf32>
    %262 = vector.shape_cast %261 : vector<1x1x256xf32> to vector<1x256xf32>
    %263 = vector.broadcast %262 : vector<1x256xf32> to vector<8x256xf32>
    %264 = arith.addf %260, %263 : vector<8x256xf32>
    %cst_91 = arith.constant 5.000000e-01 : f32
    %265 = vector.broadcast %cst_91 : f32 to vector<8x256xf32>
    %266 = arith.mulf %265, %264 : vector<8x256xf32>
    %cst_92 = arith.constant 0.707106769 : f32
    %267 = vector.broadcast %cst_92 : f32 to vector<8x256xf32>
    %268 = arith.mulf %264, %267 : vector<8x256xf32>
    %269 = math.absf %268 : vector<8x256xf32>
    %cst_93 = arith.constant 0.327591091 : f32
    %270 = vector.broadcast %cst_93 : f32 to vector<8x256xf32>
    %271 = arith.mulf %270, %269 : vector<8x256xf32>
    %cst_94 = arith.constant 1.000000e+00 : f32
    %272 = vector.broadcast %cst_94 : f32 to vector<8x256xf32>
    %273 = arith.addf %272, %271 : vector<8x256xf32>
    %cst_95 = arith.constant 1.000000e+00 : f32
    %274 = vector.broadcast %cst_95 : f32 to vector<8x256xf32>
    %275 = arith.divf %274, %273 : vector<8x256xf32>
    %cst_96 = arith.constant 1.06140542 : f32
    %276 = vector.broadcast %cst_96 : f32 to vector<8x256xf32>
    %277 = arith.mulf %275, %276 : vector<8x256xf32>
    %cst_97 = arith.constant -1.45315206 : f32
    %278 = vector.broadcast %cst_97 : f32 to vector<8x256xf32>
    %279 = arith.addf %278, %277 : vector<8x256xf32>
    %280 = arith.mulf %275, %279 : vector<8x256xf32>
    %cst_98 = arith.constant 1.42141378 : f32
    %281 = vector.broadcast %cst_98 : f32 to vector<8x256xf32>
    %282 = arith.addf %281, %280 : vector<8x256xf32>
    %283 = arith.mulf %275, %282 : vector<8x256xf32>
    %cst_99 = arith.constant -0.284496725 : f32
    %284 = vector.broadcast %cst_99 : f32 to vector<8x256xf32>
    %285 = arith.addf %284, %283 : vector<8x256xf32>
    %286 = arith.mulf %275, %285 : vector<8x256xf32>
    %cst_100 = arith.constant 0.254829586 : f32
    %287 = vector.broadcast %cst_100 : f32 to vector<8x256xf32>
    %288 = arith.addf %287, %286 : vector<8x256xf32>
    %289 = arith.mulf %275, %288 : vector<8x256xf32>
    %cst_101 = arith.constant 0.000000e+00 : f32
    %290 = vector.broadcast %cst_101 : f32 to vector<8x256xf32>
    %291 = arith.subf %290, %269 : vector<8x256xf32>
    %292 = arith.mulf %291, %269 : vector<8x256xf32>
    %293 = math.exp %292 : vector<8x256xf32>
    %294 = arith.mulf %289, %293 : vector<8x256xf32>
    %cst_102 = arith.constant 1.000000e+00 : f32
    %295 = vector.broadcast %cst_102 : f32 to vector<8x256xf32>
    %296 = arith.subf %295, %294 : vector<8x256xf32>
    %cst_103 = arith.constant 0.000000e+00 : f32
    %297 = vector.broadcast %cst_103 : f32 to vector<8x256xf32>
    %298 = arith.cmpf oge, %268, %297 : vector<8x256xf32>
    %cst_104 = arith.constant 0.000000e+00 : f32
    %299 = vector.broadcast %cst_104 : f32 to vector<8x256xf32>
    %300 = arith.subf %299, %296 : vector<8x256xf32>
    %301 = arith.select %298, %296, %300 : vector<8x256xi1>, vector<8x256xf32>
    %cst_105 = arith.constant 1.000000e+00 : f32
    %302 = vector.broadcast %cst_105 : f32 to vector<8x256xf32>
    %303 = arith.addf %302, %301 : vector<8x256xf32>
    %304 = arith.mulf %266, %303 : vector<8x256xf32>
    %c1_106 = arith.constant 1 : index
    %c0_107 = arith.constant 0 : index
    %c0_108 = arith.constant 0 : index
    %305 = vector.load %arg8[%c1_106, %c0_107, %c0_108] : memref<2x256x128xbf16, #tpu.memory_space<vmem>>, vector<1x256x128xbf16>
    %306 = vector.shape_cast %305 : vector<1x256x128xbf16> to vector<256x128xbf16>
    %307 = arith.extf %306 : vector<256x128xbf16> to vector<256x128xf32>
    %cst_109 = arith.constant dense<0.000000e+00> : vector<8x128xf32>
    %308 = tpu.matmul %304, %307, %cst_109 {dimension_numbers = #tpu.dot_dimension_numbers<[1], [0], [0], [1], [0, 0, 1, 1], [], []>} : vector<8x256xf32>, vector<256x128xf32>, vector<8x128xf32> -> vector<8x128xf32>
    %c1_110 = arith.constant 1 : index
    %c0_111 = arith.constant 0 : index
    %c0_112 = arith.constant 0 : index
    %309 = vector.load %arg9[%c1_110, %c0_111, %c0_112] : memref<2x1x128xf32, #tpu.memory_space<vmem>>, vector<1x1x128xf32>
    %310 = vector.shape_cast %309 : vector<1x1x128xf32> to vector<1x128xf32>
    %311 = vector.broadcast %310 : vector<1x128xf32> to vector<8x128xf32>
    %312 = arith.addf %308, %311 : vector<8x128xf32>
    %c1_113 = arith.constant 1 : index
    %c0_114 = arith.constant 0 : index
    %c0_115 = arith.constant 0 : index
    %313 = vector.load %arg10[%c1_113, %c0_114, %c0_115] : memref<2x1x128xf32, #tpu.memory_space<vmem>>, vector<1x1x128xf32>
    %314 = vector.shape_cast %313 : vector<1x1x128xf32> to vector<1x128xf32>
    %c1_116 = arith.constant 1 : index
    %c0_117 = arith.constant 0 : index
    %c0_118 = arith.constant 0 : index
    %315 = vector.load %arg11[%c1_116, %c0_117, %c0_118] : memref<2x1x128xf32, #tpu.memory_space<vmem>>, vector<1x1x128xf32>
    %316 = vector.shape_cast %315 : vector<1x1x128xf32> to vector<1x128xf32>
    %cst_119 = arith.constant dense<0.000000e+00> : vector<8xf32>
    %317 = vector.multi_reduction <add>, %312, %cst_119 [1] : vector<8x128xf32> to vector<8xf32>
    %318 = vector.shape_cast %317 : vector<8xf32> to vector<8x1xf32>
    %cst_120 = arith.constant 1.280000e+02 : f32
    %319 = vector.broadcast %cst_120 : f32 to vector<8x1xf32>
    %320 = arith.divf %318, %319 : vector<8x1xf32>
    %321 = arith.mulf %312, %312 : vector<8x128xf32>
    %cst_121 = arith.constant dense<0.000000e+00> : vector<8xf32>
    %322 = vector.multi_reduction <add>, %321, %cst_121 [1] : vector<8x128xf32> to vector<8xf32>
    %323 = vector.shape_cast %322 : vector<8xf32> to vector<8x1xf32>
    %cst_122 = arith.constant 1.280000e+02 : f32
    %324 = vector.broadcast %cst_122 : f32 to vector<8x1xf32>
    %325 = arith.divf %323, %324 : vector<8x1xf32>
    %326 = arith.mulf %320, %320 : vector<8x1xf32>
    %327 = arith.subf %325, %326 : vector<8x1xf32>
    %cst_123 = arith.constant 9.99999974E-6 : f32
    %328 = vector.broadcast %cst_123 : f32 to vector<8x1xf32>
    %329 = arith.addf %327, %328 : vector<8x1xf32>
    %330 = math.rsqrt %329 : vector<8x1xf32>
    %331 = vector.broadcast %320 : vector<8x1xf32> to vector<8x128xf32>
    %332 = arith.subf %312, %331 : vector<8x128xf32>
    %333 = vector.broadcast %330 : vector<8x1xf32> to vector<8x128xf32>
    %334 = arith.mulf %332, %333 : vector<8x128xf32>
    %335 = vector.broadcast %314 : vector<1x128xf32> to vector<8x128xf32>
    %336 = arith.mulf %334, %335 : vector<8x128xf32>
    %337 = vector.broadcast %316 : vector<1x128xf32> to vector<8x128xf32>
    %338 = arith.addf %336, %337 : vector<8x128xf32>
    %339 = arith.addf %256, %338 : vector<8x128xf32>
    %340 = vector.shape_cast %339 : vector<8x128xf32> to vector<1x8x128xf32>
    %c0_124 = arith.constant 0 : index
    %c0_125 = arith.constant 0 : index
    %c0_126 = arith.constant 0 : index
    %341 = vector.load %arg14[%c0_124, %c0_125, %c0_126] : memref<1x8x128xf32, #tpu.memory_space<vmem>>, vector<1x8x128xf32>
    tpu.vector_store %arg14[%c0_124, %c0_125, %c0_126], %340 {strides = array<i32>} : memref<1x8x128xf32, #tpu.memory_space<vmem>>, vector<1x8x128xf32>,
    %342 = vector.extract_strided_slice %339 {offsets = [0, 0], sizes = [1, 128], strides = [1, 1]} : vector<8x128xf32> to vector<1x128xf32>
    %c0_127 = arith.constant 0 : index
    %c0_128 = arith.constant 0 : index
    %343 = vector.load %arg12[%c0_127, %c0_128] : memref<128x128xbf16, #tpu.memory_space<vmem>>, vector<128x128xbf16>
    %344 = arith.extf %343 : vector<128x128xbf16> to vector<128x128xf32>
    %cst_129 = arith.constant dense<0.000000e+00> : vector<1x128xf32>
    %345 = tpu.matmul %342, %344, %cst_129 {dimension_numbers = #tpu.dot_dimension_numbers<[1], [0], [0], [1], [0, 0, 1, 1], [], []>} : vector<1x128xf32>, vector<128x128xf32>, vector<1x128xf32> -> vector<1x128xf32>
    %c0_130 = arith.constant 0 : index
    %c0_131 = arith.constant 0 : index
    %346 = vector.load %arg13[%c0_130, %c0_131] : memref<1x128xf32, #tpu.memory_space<vmem>>, vector<1x128xf32>
    %347 = arith.addf %345, %346 : vector<1x128xf32>
    %348 = math.tanh %347 : vector<1x128xf32>
    %349 = vector.shape_cast %348 : vector<1x128xf32> to vector<1x1x128xf32>
    %c0_132 = arith.constant 0 : index
    %c0_133 = arith.constant 0 : index
    %c0_134 = arith.constant 0 : index
    %350 = vector.load %arg15[%c0_132, %c0_133, %c0_134] : memref<1x1x128xf32, #tpu.memory_space<vmem>>, vector<1x1x128xf32>
    tpu.vector_store %arg15[%c0_132, %c0_133, %c0_134], %349 {strides = array<i32>} : memref<1x1x128xf32, #tpu.memory_space<vmem>>, vector<1x1x128xf32>,
    return
  }
  func.func @transform_0(%arg0: i32) -> (i32, i32, i32) {
    %c0_i32 = arith.constant 0 : i32
    %c0_i32_0 = arith.constant 0 : i32
    %c0_i32_1 = arith.constant 0 : i32
    return %arg0, %c0_i32, %c0_i32_0 : i32, i32, i32
  }
  func.func @transform_1(%arg0: i32) -> (i32, i32, i32) {
    %c0_i32 = arith.constant 0 : i32
    %c0_i32_0 = arith.constant 0 : i32
    %c0_i32_1 = arith.constant 0 : i32
    %c0_i32_2 = arith.constant 0 : i32
    return %c0_i32, %c0_i32_0, %c0_i32_1 : i32, i32, i32
  }
  func.func @transform_2(%arg0: i32) -> (i32, i32, i32) {
    %c0_i32 = arith.constant 0 : i32
    %c0_i32_0 = arith.constant 0 : i32
    %c0_i32_1 = arith.constant 0 : i32
    %c0_i32_2 = arith.constant 0 : i32
    return %c0_i32, %c0_i32_0, %c0_i32_1 : i32, i32, i32
  }
  func.func @transform_3(%arg0: i32) -> (i32, i32, i32) {
    %c0_i32 = arith.constant 0 : i32
    %c0_i32_0 = arith.constant 0 : i32
    %c0_i32_1 = arith.constant 0 : i32
    %c0_i32_2 = arith.constant 0 : i32
    return %c0_i32, %c0_i32_0, %c0_i32_1 : i32, i32, i32
  }
  func.func @transform_4(%arg0: i32) -> (i32, i32, i32) {
    %c0_i32 = arith.constant 0 : i32
    %c0_i32_0 = arith.constant 0 : i32
    %c0_i32_1 = arith.constant 0 : i32
    %c0_i32_2 = arith.constant 0 : i32
    return %c0_i32, %c0_i32_0, %c0_i32_1 : i32, i32, i32
  }
  func.func @transform_5(%arg0: i32) -> (i32, i32, i32) {
    %c0_i32 = arith.constant 0 : i32
    %c0_i32_0 = arith.constant 0 : i32
    %c0_i32_1 = arith.constant 0 : i32
    %c0_i32_2 = arith.constant 0 : i32
    return %c0_i32, %c0_i32_0, %c0_i32_1 : i32, i32, i32
  }
  func.func @transform_6(%arg0: i32) -> (i32, i32, i32) {
    %c0_i32 = arith.constant 0 : i32
    %c0_i32_0 = arith.constant 0 : i32
    %c0_i32_1 = arith.constant 0 : i32
    %c0_i32_2 = arith.constant 0 : i32
    return %c0_i32, %c0_i32_0, %c0_i32_1 : i32, i32, i32
  }
  func.func @transform_7(%arg0: i32) -> (i32, i32, i32) {
    %c0_i32 = arith.constant 0 : i32
    %c0_i32_0 = arith.constant 0 : i32
    %c0_i32_1 = arith.constant 0 : i32
    %c0_i32_2 = arith.constant 0 : i32
    return %c0_i32, %c0_i32_0, %c0_i32_1 : i32, i32, i32
  }
  func.func @transform_8(%arg0: i32) -> (i32, i32, i32) {
    %c0_i32 = arith.constant 0 : i32
    %c0_i32_0 = arith.constant 0 : i32
    %c0_i32_1 = arith.constant 0 : i32
    %c0_i32_2 = arith.constant 0 : i32
    return %c0_i32, %c0_i32_0, %c0_i32_1 : i32, i32, i32
  }
  func.func @transform_9(%arg0: i32) -> (i32, i32, i32) {
    %c0_i32 = arith.constant 0 : i32
    %c0_i32_0 = arith.constant 0 : i32
    %c0_i32_1 = arith.constant 0 : i32
    %c0_i32_2 = arith.constant 0 : i32
    return %c0_i32, %c0_i32_0, %c0_i32_1 : i32, i32, i32
  }
  func.func @transform_10(%arg0: i32) -> (i32, i32, i32) {
    %c0_i32 = arith.constant 0 : i32
    %c0_i32_0 = arith.constant 0 : i32
    %c0_i32_1 = arith.constant 0 : i32
    %c0_i32_2 = arith.constant 0 : i32
    return %c0_i32, %c0_i32_0, %c0_i32_1 : i32, i32, i32
  }
  func.func @transform_11(%arg0: i32) -> (i32, i32) {
    %c0_i32 = arith.constant 0 : i32
    %c0_i32_0 = arith.constant 0 : i32
    %c0_i32_1 = arith.constant 0 : i32
    return %c0_i32, %c0_i32_0 : i32, i32
  }
  func.func @transform_12(%arg0: i32) -> (i32, i32) {
    %c0_i32 = arith.constant 0 : i32
    %c0_i32_0 = arith.constant 0 : i32
    %c0_i32_1 = arith.constant 0 : i32
    return %c0_i32, %c0_i32_0 : i32, i32
  }
  func.func @transform_13(%arg0: i32) -> (i32, i32, i32) {
    %c0_i32 = arith.constant 0 : i32
    %c0_i32_0 = arith.constant 0 : i32
    %c0_i32_1 = arith.constant 0 : i32
    return %arg0, %c0_i32, %c0_i32_0 : i32, i32, i32
  }
  func.func @transform_14(%arg0: i32) -> (i32, i32, i32) {
    %c0_i32 = arith.constant 0 : i32
    %c0_i32_0 = arith.constant 0 : i32
    %c0_i32_1 = arith.constant 0 : i32
    return %arg0, %c0_i32, %c0_i32_0 : i32, i32, i32
  }
}

</mosaic_0001>

<llo_original>
// kernel: encoder_forward.1
$region0: #{encoder_forward.1}
  #allocation0 [shape = 'u32[]', space=smem, size = 0x4, offset = 0x4, fixed_abs, tag = 'smem constant byte address 0x4 - core index']
  #allocation1 [shape = 'u32[144,128]{1,0:T(1,128)}', space=vmem, size = 0x12000, scoped, tag = 'internal scratch']
  %s0 = inlined_call_operand.vmem [shape: f32[2,8,128], index: 0, kind: input, shape index: {}]
  %s1 = inlined_call_operand.hbm [shape: bf16[2,128,384], index: 1, kind: input, shape index: {}]
  %s2 = inlined_call_operand.hbm [shape: f32[2,1,384], index: 2, kind: input, shape index: {}]
  %s3 = inlined_call_operand.hbm [shape: f32[2,1,128], index: 3, kind: input, shape index: {}]
  %s4 = inlined_call_operand.hbm [shape: f32[2,1,128], index: 4, kind: input, shape index: {}]
  %s5 = inlined_call_operand.vmem [shape: bf16[2,128,256], index: 5, kind: input, shape index: {}]
  %s6 = inlined_call_operand.hbm [shape: f32[2,1,256], index: 6, kind: input, shape index: {}]
  %s7 = inlined_call_operand.hbm [shape: bf16[2,256,128], index: 7, kind: input, shape index: {}]
  %s8 = inlined_call_operand.hbm [shape: f32[2,1,128], index: 8, kind: input, shape index: {}]
  %s9 = inlined_call_operand.hbm [shape: f32[2,1,128], index: 9, kind: input, shape index: {}]
  %s10 = inlined_call_operand.hbm [shape: f32[2,1,128], index: 10, kind: input, shape index: {}]
  %s11 = inlined_call_operand.hbm [shape: bf16[128,128], index: 11, kind: input, shape index: {}]
  %s12 = inlined_call_operand.vmem [shape: f32[1,128], index: 12, kind: input, shape index: {}]
  %s13 = inlined_call_operand.hbm [shape: f32[2,8,128], index: 13, kind: output, shape index: {0}]
  %s14 = inlined_call_operand.hbm [shape: f32[2,1,128], index: 14, kind: output, shape index: {1}]
  %15 = xla_tuple %s13, %s14
  %s16 = sld [smem:[#allocation0]]
  $region133: #{encoder_forward.1} parent=0
    _
  %s18 = ssub.s32 1, %s16
  %s19 = scalar_select 0, %s18, %s16
  $region1: #{encoder_forward.1} parent=0
    #allocation2 [shape = 'u8[196608]{0}', space=vmem, size = 0x30000, scoped, tag = 'input window, operand 1, single buffered']
    #allocation3 [shape = 's32[2]{0}', space=sflag, size = 0x8, scoped, tag = 'scoped memory for encoder_forward.1']
    #allocation4 [shape = 's32[2]{0}', space=sflag, size = 0x8, scoped, tag = 'scoped memory for encoder_forward.1']
    #allocation5 [shape = 'u8[3072]{0}', space=vmem, size = 0xc00, scoped, tag = 'input window, operand 2, single buffered']
    #allocation6 [shape = 's32[1]{0}', space=sflag, size = 0x4, scoped, tag = 'scoped memory for encoder_forward.1']
    #allocation7 [shape = 'u8[1024]{0}', space=vmem, size = 0x400, scoped, tag = 'input window, operand 3, single buffered']
    #allocation8 [shape = 'u8[1024]{0}', space=vmem, size = 0x400, scoped, tag = 'input window, operand 4, single buffered']
    #allocation9 [shape = 's32[1]{0}', space=sflag, size = 0x4, scoped, tag = 'scoped memory for encoder_forward.1']
    #allocation10 [shape = 'u8[2048]{0}', space=vmem, size = 0x800, scoped, tag = 'input window, operand 6, single buffered']
    #allocation11 [shape = 'u8[131072]{0}', space=vmem, size = 0x20000, scoped, tag = 'input window, operand 7, single buffered']
    #allocation12 [shape = 's32[1]{0}', space=sflag, size = 0x4, scoped, tag = 'scoped memory for encoder_forward.1']
    #allocation13 [shape = 'u8[1024]{0}', space=vmem, size = 0x400, scoped, tag = 'input window, operand 8, single buffered']
    #allocation14 [shape = 'u8[1024]{0}', space=vmem, size = 0x400, scoped, tag = 'input window, operand 9, single buffered']
    #allocation15 [shape = 's32[1]{0}', space=sflag, size = 0x4, scoped, tag = 'scoped memory for encoder_forward.1']
    #allocation16 [shape = 'u8[1024]{0}', space=vmem, size = 0x400, scoped, tag = 'input window, operand 10, single buffered']
    #allocation17 [shape = 'u8[32768]{0}', space=vmem, size = 0x8000, scoped, tag = 'input window, operand 11, single buffered']
    #allocation18 [shape = 's32[1]{0}', space=sflag, size = 0x4, scoped, tag = 'scoped memory for encoder_forward.1']
    #allocation19 [shape = 'u8[8192]{0}', space=vmem, size = 0x2000, scoped, tag = 'output window, operand 0']
    #allocation20 [shape = 'u8[1024]{0}', space=vmem, size = 0x400, scoped, tag = 'output window, operand 1']
    #allocation21 [shape = 's32[2]{0}', space=sflag, size = 0x8, scoped, tag = 'scoped memory for encoder_forward.1']
    %20 = vsyncpa [#allocation3], 0
    %21 = vsyncpa [#allocation6], 0
    %22 = vsyncpa [#allocation9], 0
    %23 = vsyncpa [#allocation12], 0
    %24 = vsyncpa [#allocation15], 0
    %25 = vsyncpa [#allocation18], 0
    %26 = vsyncpa [#allocation4], 0
    %s27 = scalar_lea.sflag [#allocation4], 1
    %28 = vsyncpa %s27, 0
    %29 = vsyncpa [#allocation21], 0
    %s30 = scalar_lea.sflag [#allocation21], 1
    %31 = vsyncpa %s30, 0
    loop: start=0, step=1, limit=4
    $region2: #{encoder_forward.1} parent=1 // loop_pre_header
      _
    $region3: #{encoder_forward.1} parent=1 // loop_header
      %s33 = sphi 0, %s37
      %p34 = scmp.ge.s32.totalorder %s33, 4
      %s43 = sphi 0, %s45
      %s46 = sphi 0, %s43
      %s47 = sphi 0, %s46
      %s63 = sphi 0, %s47
      %s67 = sphi 0, %s67
      %s69 = sphi 0, %s67
      %s70 = sphi 0, %s69
      %s84 = sphi 0, %s70
      %s88 = sphi 0, %s88
      %s90 = sphi 0, %s88
      %s91 = sphi 0, %s90
      %s105 = sphi 0, %s91
      %s109 = sphi 0, %s109
      %s111 = sphi 0, %s109
      %s112 = sphi 0, %s111
      %s126 = sphi 0, %s112
      %s130 = sphi 0, %s130
      %s132 = sphi 0, %s130
      %s133 = sphi 0, %s132
      %s147 = sphi 0, %s133
      %s151 = sphi 0, %s151
      %s153 = sphi 0, %s151
      %s154 = sphi 0, %s153
      %s168 = sphi 0, %s154
      %s172 = sphi 0, %s172
      %s174 = sphi 0, %s172
      %s175 = sphi 0, %s174
      %s189 = sphi 0, %s175
      %s193 = sphi 0, %s193
      %s195 = sphi 0, %s193
      %s196 = sphi 0, %s195
      %s210 = sphi 0, %s196
      %s214 = sphi 0, %s214
      %s216 = sphi 0, %s214
      %s217 = sphi 0, %s216
      %s231 = sphi 0, %s217
      %s235 = sphi 0, %s235
      %s237 = sphi 0, %s235
      %s238 = sphi 0, %s237
      %s252 = sphi 0, %s238
      %s256 = sphi 0, %s256
      %s258 = sphi 0, %s256
      %s259 = sphi 0, %s258
      %s273 = sphi 0, %s259
      %s277 = sphi 0, %s277
      %s279 = sphi 0, %s277
      %s280 = sphi 0, %s279
      %s294 = sphi 0, %s280
      %s298 = sphi 0, %s298
      %s300 = sphi 0, %s298
      %s301 = sphi 0, %s300
      %s315 = sphi 0, %s301
      %s321 = sphi 0, %s323
      %s324 = sphi 0, %s321
      %s325 = sphi 0, %s324
      %s341 = sphi 0, %s325
      %s347 = sphi 0, %s349
      %s350 = sphi 0, %s347
      %s351 = sphi 0, %s350
      %s367 = sphi 0, %s351
    $region4: #{encoder_forward.1} parent=1 // loop_header_branch
      %36 = sbr.rel (%p34) target = $region8
    $region5: #{encoder_forward.1} parent=1 // loop_body
      %s38 = ssub.s32 %s33, 1
      %s39 = ssub.s32 %s33, 2
      %s40 = sadd.s32 %s33, 1
      %s41 = ssub.s32 %s33, %s40
      %p42 = scmp.eq.s32.totalorder %s41, 0
      %s44 = sadd.s32 %s43, 1
      %s45 = scalar_select %p42, %s43, %s44
      %p48 = pneg %p42
      %p49 = scmp.eq.s32.totalorder %s33, 1
      %p50 = por %p48, %p49
      %p51 = scmp.ne.s32.totalorder %s43, %s46
      %p52 = scmp.eq.s32.totalorder %s33, 0
      %p53 = por %p51, %p52
      %p54 = scmp.ne.s32.totalorder %s43, %s46
      %p55 = scmp.eq.s32.totalorder %s38, 1
      %p56 = por %p54, %p55
      %p57 = scmp.ne.s32.totalorder %s46, %s47
      %p58 = scmp.eq.s32.totalorder %s38, 0
      %p59 = por %p57, %p58
      %p60 = scmp.ne.s32.totalorder %s46, %s47
      %p61 = scmp.eq.s32.totalorder %s39, 1
      %p62 = por %p60, %p61
      %p64 = scmp.ne.s32.totalorder %s47, %s63
      %p65 = scmp.eq.s32.totalorder %s39, 0
      %p66 = por %p64, %p65
      %s68 = sadd.s32 %s67, 1
      %p71 = scmp.eq.s32.totalorder %s33, 1
      %p72 = scmp.ne.s32.totalorder %s67, %s69
      %p73 = scmp.eq.s32.totalorder %s33, 0
      %p74 = por %p72, %p73
      %p75 = scmp.ne.s32.totalorder %s67, %s69
      %p76 = scmp.eq.s32.totalorder %s38, 1
      %p77 = por %p75, %p76
      %p78 = scmp.ne.s32.totalorder %s69, %s70
      %p79 = scmp.eq.s32.totalorder %s38, 0
      %p80 = por %p78, %p79
      %p81 = scmp.ne.s32.totalorder %s69, %s70
      %p82 = scmp.eq.s32.totalorder %s39, 1
      %p83 = por %p81, %p82
      %p85 = scmp.ne.s32.totalorder %s70, %s84
      %p86 = scmp.eq.s32.totalorder %s39, 0
      %p87 = por %p85, %p86
      %s89 = sadd.s32 %s88, 1
      %p92 = scmp.eq.s32.totalorder %s33, 1
      %p93 = scmp.ne.s32.totalorder %s88, %s90
      %p94 = scmp.eq.s32.totalorder %s33, 0
      %p95 = por %p93, %p94
      %p96 = scmp.ne.s32.totalorder %s88, %s90
      %p97 = scmp.eq.s32.totalorder %s38, 1
      %p98 = por %p96, %p97
      %p99 = scmp.ne.s32.totalorder %s90, %s91
      %p100 = scmp.eq.s32.totalorder %s38, 0
      %p101 = por %p99, %p100
      %p102 = scmp.ne.s32.totalorder %s90, %s91
      %p103 = scmp.eq.s32.totalorder %s39, 1
      %p104 = por %p102, %p103
      %p106 = scmp.ne.s32.totalorder %s91, %s105
      %p107 = scmp.eq.s32.totalorder %s39, 0
      %p108 = por %p106, %p107
      %s110 = sadd.s32 %s109, 1
      %p113 = scmp.eq.s32.totalorder %s33, 1
      %p114 = scmp.ne.s32.totalorder %s109, %s111
      %p115 = scmp.eq.s32.totalorder %s33, 0
      %p116 = por %p114, %p115
      %p117 = scmp.ne.s32.totalorder %s109, %s111
      %p118 = scmp.eq.s32.totalorder %s38, 1
      %p119 = por %p117, %p118
      %p120 = scmp.ne.s32.totalorder %s111, %s112
      %p121 = scmp.eq.s32.totalorder %s38, 0
      %p122 = por %p120, %p121
      %p123 = scmp.ne.s32.totalorder %s111, %s112
      %p124 = scmp.eq.s32.totalorder %s39, 1
      %p125 = por %p123, %p124
      %p127 = scmp.ne.s32.totalorder %s112, %s126
      %p128 = scmp.eq.s32.totalorder %s39, 0
      %p129 = por %p127, %p128
      %s131 = sadd.s32 %s130, 1
      %p134 = scmp.eq.s32.totalorder %s33, 1
      %p135 = scmp.ne.s32.totalorder %s130, %s132
      %p136 = scmp.eq.s32.totalorder %s33, 0
      %p137 = por %p135, %p136
      %p138 = scmp.ne.s32.totalorder %s130, %s132
      %p139 = scmp.eq.s32.totalorder %s38, 1
      %p140 = por %p138, %p139
      %p141 = scmp.ne.s32.totalorder %s132, %s133
      %p142 = scmp.eq.s32.totalorder %s38, 0
      %p143 = por %p141, %p142
      %p144 = scmp.ne.s32.totalorder %s132, %s133
      %p145 = scmp.eq.s32.totalorder %s39, 1
      %p146 = por %p144, %p145
      %p148 = scmp.ne.s32.totalorder %s133, %s147
      %p149 = scmp.eq.s32.totalorder %s39, 0
      %p150 = por %p148, %p149
      %s152 = sadd.s32 %s151, 1
      %p155 = scmp.eq.s32.totalorder %s33, 1
      %p156 = scmp.ne.s32.totalorder %s151, %s153
      %p157 = scmp.eq.s32.totalorder %s33, 0
      %p158 = por %p156, %p157
      %p159 = scmp.ne.s32.totalorder %s151, %s153
      %p160 = scmp.eq.s32.totalorder %s38, 1
      %p161 = por %p159, %p160
      %p162 = scmp.ne.s32.totalorder %s153, %s154
      %p163 = scmp.eq.s32.totalorder %s38, 0
      %p164 = por %p162, %p163
      %p165 = scmp.ne.s32.totalorder %s153, %s154
      %p166 = scmp.eq.s32.totalorder %s39, 1
      %p167 = por %p165, %p166
      %p169 = scmp.ne.s32.totalorder %s154, %s168
      %p170 = scmp.eq.s32.totalorder %s39, 0
      %p171 = por %p169, %p170
      %s173 = sadd.s32 %s172, 1
      %p176 = scmp.eq.s32.totalorder %s33, 1
      %p177 = scmp.ne.s32.totalorder %s172, %s174
      %p178 = scmp.eq.s32.totalorder %s33, 0
      %p179 = por %p177, %p178
      %p180 = scmp.ne.s32.totalorder %s172, %s174
      %p181 = scmp.eq.s32.totalorder %s38, 1
      %p182 = por %p180, %p181
      %p183 = scmp.ne.s32.totalorder %s174, %s175
      %p184 = scmp.eq.s32.totalorder %s38, 0
      %p185 = por %p183, %p184
      %p186 = scmp.ne.s32.totalorder %s174, %s175
      %p187 = scmp.eq.s32.totalorder %s39, 1
      %p188 = por %p186, %p187
      %p190 = scmp.ne.s32.totalorder %s175, %s189
      %p191 = scmp.eq.s32.totalorder %s39, 0
      %p192 = por %p190, %p191
      %s194 = sadd.s32 %s193, 1
      %p197 = scmp.eq.s32.totalorder %s33, 1
      %p198 = scmp.ne.s32.totalorder %s193, %s195
      %p199 = scmp.eq.s32.totalorder %s33, 0
      %p200 = por %p198, %p199
      %p201 = scmp.ne.s32.totalorder %s193, %s195
      %p202 = scmp.eq.s32.totalorder %s38, 1
      %p203 = por %p201, %p202
      %p204 = scmp.ne.s32.totalorder %s195, %s196
      %p205 = scmp.eq.s32.totalorder %s38, 0
      %p206 = por %p204, %p205
      %p207 = scmp.ne.s32.totalorder %s195, %s196
      %p208 = scmp.eq.s32.totalorder %s39, 1
      %p209 = por %p207, %p208
      %p211 = scmp.ne.s32.totalorder %s196, %s210
      %p212 = scmp.eq.s32.totalorder %s39, 0
      %p213 = por %p211, %p212
      %s215 = sadd.s32 %s214, 1
      %p218 = scmp.eq.s32.totalorder %s33, 1
      %p219 = scmp.ne.s32.totalorder %s214, %s216
      %p220 = scmp.eq.s32.totalorder %s33, 0
      %p221 = por %p219, %p220
      %p222 = scmp.ne.s32.totalorder %s214, %s216
      %p223 = scmp.eq.s32.totalorder %s38, 1
      %p224 = por %p222, %p223
      %p225 = scmp.ne.s32.totalorder %s216, %s217
      %p226 = scmp.eq.s32.totalorder %s38, 0
      %p227 = por %p225, %p226
      %p228 = scmp.ne.s32.totalorder %s216, %s217
      %p229 = scmp.eq.s32.totalorder %s39, 1
      %p230 = por %p228, %p229
      %p232 = scmp.ne.s32.totalorder %s217, %s231
      %p233 = scmp.eq.s32.totalorder %s39, 0
      %p234 = por %p232, %p233
      %s236 = sadd.s32 %s235, 1
      %p239 = scmp.eq.s32.totalorder %s33, 1
      %p240 = scmp.ne.s32.totalorder %s235, %s237
      %p241 = scmp.eq.s32.totalorder %s33, 0
      %p242 = por %p240, %p241
      %p243 = scmp.ne.s32.totalorder %s235, %s237
      %p244 = scmp.eq.s32.totalorder %s38, 1
      %p245 = por %p243, %p244
      %p246 = scmp.ne.s32.totalorder %s237, %s238
      %p247 = scmp.eq.s32.totalorder %s38, 0
      %p248 = por %p246, %p247
      %p249 = scmp.ne.s32.totalorder %s237, %s238
      %p250 = scmp.eq.s32.totalorder %s39, 1
      %p251 = por %p249, %p250
      %p253 = scmp.ne.s32.totalorder %s238, %s252
      %p254 = scmp.eq.s32.totalorder %s39, 0
      %p255 = por %p253, %p254
      %s257 = sadd.s32 %s256, 1
      %p260 = scmp.eq.s32.totalorder %s33, 1
      %p261 = scmp.ne.s32.totalorder %s256, %s258
      %p262 = scmp.eq.s32.totalorder %s33, 0
      %p263 = por %p261, %p262
      %p264 = scmp.ne.s32.totalorder %s256, %s258
      %p265 = scmp.eq.s32.totalorder %s38, 1
      %p266 = por %p264, %p265
      %p267 = scmp.ne.s32.totalorder %s258, %s259
      %p268 = scmp.eq.s32.totalorder %s38, 0
      %p269 = por %p267, %p268
      %p270 = scmp.ne.s32.totalorder %s258, %s259
      %p271 = scmp.eq.s32.totalorder %s39, 1
      %p272 = por %p270, %p271
      %p274 = scmp.ne.s32.totalorder %s259, %s273
      %p275 = scmp.eq.s32.totalorder %s39, 0
      %p276 = por %p274, %p275
      %s278 = sadd.s32 %s277, 1
      %p281 = scmp.eq.s32.totalorder %s33, 1
      %p282 = scmp.ne.s32.totalorder %s277, %s279
      %p283 = scmp.eq.s32.totalorder %s33, 0
      %p284 = por %p282, %p283
      %p285 = scmp.ne.s32.totalorder %s277, %s279
      %p286 = scmp.eq.s32.totalorder %s38, 1
      %p287 = por %p285, %p286
      %p288 = scmp.ne.s32.totalorder %s279, %s280
      %p289 = scmp.eq.s32.totalorder %s38, 0
      %p290 = por %p288, %p289
      %p291 = scmp.ne.s32.totalorder %s279, %s280
      %p292 = scmp.eq.s32.totalorder %s39, 1
      %p293 = por %p291, %p292
      %p295 = scmp.ne.s32.totalorder %s280, %s294
      %p296 = scmp.eq.s32.totalorder %s39, 0
      %p297 = por %p295, %p296
      %s299 = sadd.s32 %s298, 1
      %p302 = scmp.eq.s32.totalorder %s33, 1
      %p303 = scmp.ne.s32.totalorder %s298, %s300
      %p304 = scmp.eq.s32.totalorder %s33, 0
      %p305 = por %p303, %p304
      %p306 = scmp.ne.s32.totalorder %s298, %s300
      %p307 = scmp.eq.s32.totalorder %s38, 1
      %p308 = por %p306, %p307
      %p309 = scmp.ne.s32.totalorder %s300, %s301
      %p310 = scmp.eq.s32.totalorder %s38, 0
      %p311 = por %p309, %p310
      %p312 = scmp.ne.s32.totalorder %s300, %s301
      %p313 = scmp.eq.s32.totalorder %s39, 1
      %p314 = por %p312, %p313
      %p316 = scmp.ne.s32.totalorder %s301, %s315
      %p317 = scmp.eq.s32.totalorder %s39, 0
      %p318 = por %p316, %p317
      %s319 = ssub.s32 %s33, %s40
      %p320 = scmp.eq.s32.totalorder %s319, 0
      %s322 = sadd.s32 %s321, 1
      %s323 = scalar_select %p320, %s321, %s322
      %p326 = pneg %p320
      %p327 = scmp.eq.s32.totalorder %s33, 1
      %p328 = por %p326, %p327
      %p329 = scmp.ne.s32.totalorder %s321, %s324
      %p330 = scmp.eq.s32.totalorder %s33, 0
      %p331 = por %p329, %p330
      %p332 = scmp.ne.s32.totalorder %s321, %s324
      %p333 = scmp.eq.s32.totalorder %s38, 1
      %p334 = por %p332, %p333
      %p335 = scmp.ne.s32.totalorder %s324, %s325
      %p336 = scmp.eq.s32.totalorder %s38, 0
      %p337 = por %p335, %p336
      %p338 = scmp.ne.s32.totalorder %s324, %s325
      %p339 = scmp.eq.s32.totalorder %s39, 1
      %p340 = por %p338, %p339
      %p342 = scmp.ne.s32.totalorder %s325, %s341
      %p343 = scmp.eq.s32.totalorder %s39, 0
      %p344 = por %p342, %p343
      %s345 = ssub.s32 %s33, %s40
      %p346 = scmp.eq.s32.totalorder %s345, 0
      %s348 = sadd.s32 %s347, 1
      %s349 = scalar_select %p346, %s347, %s348
      %p352 = pneg %p346
      %p353 = scmp.eq.s32.totalorder %s33, 1
      %p354 = por %p352, %p353
      %p355 = scmp.ne.s32.totalorder %s347, %s350
      %p356 = scmp.eq.s32.totalorder %s33, 0
      %p357 = por %p355, %p356
      %p358 = scmp.ne.s32.totalorder %s347, %s350
      %p359 = scmp.eq.s32.totalorder %s38, 1
      %p360 = por %p358, %p359
      %p361 = scmp.ne.s32.totalorder %s350, %s351
      %p362 = scmp.eq.s32.totalorder %s38, 0
      %p363 = por %p361, %p362
      %p364 = scmp.ne.s32.totalorder %s350, %s351
      %p365 = scmp.eq.s32.totalorder %s39, 1
      %p366 = por %p364, %p365
      %p368 = scmp.ne.s32.totalorder %s351, %s367
      %p369 = scmp.eq.s32.totalorder %s39, 0
      %p370 = por %p368, %p369
      %p371 = scmp.le.s32.totalorder 1, %s33
      %p372 = scmp.lt.s32.totalorder %s33, 3
      %p373 = pnand %p371, %p372
      %p374 = pneg %p373
      // Predicated region
      $region9: #{encoder_forward.1} parent=5 // pred_check
        _
      $region10: #{encoder_forward.1} parent=5 // pred_check_branch
        %376 = sbr.rel (%p373) target = $region12
      $region11: #{encoder_forward.1} parent=5 // pred_region
        %s377 = ssub.s32 %s33, 1
        // Predicated region
        $region13: #{encoder_forward.1} parent=11 // pred_check
          %p378 = pneg %p80
        $region14: #{encoder_forward.1} parent=11 // pred_check_branch
          %380 = sbr.rel (%p378) target = $region16
        $region15: #{encoder_forward.1} parent=11 // pred_region
          %s382 = ssub.s32 6144, 6144
          %383 = vsyncadd [#allocation3], %s382
          %s384 = sshll.u32 [#allocation2], 4
          %s385 = int_to_ptr.vmem [resolvable:$true] %s384
          %390 = dma.hbm_to_vmem [thread:$0]  %s1, 6144, %s385, [#allocation3], 192, 192, 12
        $region16: #{encoder_forward.1} parent=11 // pred_fallthru
          _
        // Predicated region
        $region17: #{encoder_forward.1} parent=11 // pred_check
          %p391 = pneg %p101
        $region18: #{encoder_forward.1} parent=11 // pred_check_branch
          %393 = sbr.rel (%p391) target = $region20
        $region19: #{encoder_forward.1} parent=11 // pred_region
          %s395 = ssub.s32 96, 96
          %396 = vsyncadd [#allocation6], %s395
          %s397 = sshll.u32 [#allocation5], 4
          %s398 = int_to_ptr.vmem [resolvable:$true] %s397
          %403 = dma.hbm_to_vmem [thread:$0]  %s2, 96, %s398, [#allocation6], 48, 48, 3
        $region20: #{encoder_forward.1} parent=11 // pred_fallthru
          _
        // Predicated region
        $region21: #{encoder_forward.1} parent=11 // pred_check
          %p404 = pneg %p122
        $region22: #{encoder_forward.1} parent=11 // pred_check_branch
          %406 = sbr.rel (%p404) target = $region24
        $region23: #{encoder_forward.1} parent=11 // pred_region
          %s408 = ssub.s32 32, 32
          %409 = vsyncadd [#allocation6], %s408
          %s410 = sshll.u32 [#allocation7], 4
          %s411 = int_to_ptr.vmem [resolvable:$true] %s410
          %416 = dma.hbm_to_vmem [thread:$0]  %s3, 32, %s411, [#allocation6], 16, 16, 1
        $region24: #{encoder_forward.1} parent=11 // pred_fallthru
          _
        // Predicated region
        $region25: #{encoder_forward.1} parent=11 // pred_check
          %p417 = pneg %p143
        $region26: #{encoder_forward.1} parent=11 // pred_check_branch
          %419 = sbr.rel (%p417) target = $region28
        $region27: #{encoder_forward.1} parent=11 // pred_region
          %s421 = ssub.s32 32, 32
          %422 = vsyncadd [#allocation9], %s421
          %s423 = sshll.u32 [#allocation8], 4
          %s424 = int_to_ptr.vmem [resolvable:$true] %s423
          %429 = dma.hbm_to_vmem [thread:$0]  %s4, 32, %s424, [#allocation9], 16, 16, 1
        $region28: #{encoder_forward.1} parent=11 // pred_fallthru
          _
        // Predicated region
        $region29: #{encoder_forward.1} parent=11 // pred_check
          %p430 = pneg %p164
        $region30: #{encoder_forward.1} parent=11 // pred_check_branch
          %432 = sbr.rel (%p430) target = $region32
        $region31: #{encoder_forward.1} parent=11 // pred_region
          _
        $region32: #{encoder_forward.1} parent=11 // pred_fallthru
          _
        // Predicated region
        $region33: #{encoder_forward.1} parent=11 // pred_check
          %p433 = pneg %p185
        $region34: #{encoder_forward.1} parent=11 // pred_check_branch
          %435 = sbr.rel (%p433) target = $region36
        $region35: #{encoder_forward.1} parent=11 // pred_region
          %s437 = ssub.s32 64, 64
          %438 = vsyncadd [#allocation9], %s437
          %s439 = sshll.u32 [#allocation10], 4
          %s440 = int_to_ptr.vmem [resolvable:$true] %s439
          %445 = dma.hbm_to_vmem [thread:$0]  %s6, 64, %s440, [#allocation9], 32, 32, 2
        $region36: #{encoder_forward.1} parent=11 // pred_fallthru
          _
        // Predicated region
        $region37: #{encoder_forward.1} parent=11 // pred_check
          %p446 = pneg %p206
        $region38: #{encoder_forward.1} parent=11 // pred_check_branch
          %448 = sbr.rel (%p446) target = $region40
        $region39: #{encoder_forward.1} parent=11 // pred_region
          %s450 = ssub.s32 4096, 4096
          %451 = vsyncadd [#allocation12], %s450
          %s452 = sshll.u32 [#allocation11], 4
          %s453 = int_to_ptr.vmem [resolvable:$true] %s452
          %458 = dma.hbm_to_vmem [thread:$0]  %s7, 4096, %s453, [#allocation12], 64, 64, 4
        $region40: #{encoder_forward.1} parent=11 // pred_fallthru
          _
        // Predicated region
        $region41: #{encoder_forward.1} parent=11 // pred_check
          %p459 = pneg %p227
        $region42: #{encoder_forward.1} parent=11 // pred_check_branch
          %461 = sbr.rel (%p459) target = $region44
        $region43: #{encoder_forward.1} parent=11 // pred_region
          %s463 = ssub.s32 32, 32
          %464 = vsyncadd [#allocation12], %s463
          %s465 = sshll.u32 [#allocation13], 4
          %s466 = int_to_ptr.vmem [resolvable:$true] %s465
          %471 = dma.hbm_to_vmem [thread:$0]  %s8, 32, %s466, [#allocation12], 16, 16, 1
        $region44: #{encoder_forward.1} parent=11 // pred_fallthru
          _
        // Predicated region
        $region45: #{encoder_forward.1} parent=11 // pred_check
          %p472 = pneg %p248
        $region46: #{encoder_forward.1} parent=11 // pred_check_branch
          %474 = sbr.rel (%p472) target = $region48
        $region47: #{encoder_forward.1} parent=11 // pred_region
          %s476 = ssub.s32 32, 32
          %477 = vsyncadd [#allocation15], %s476
          %s478 = sshll.u32 [#allocation14], 4
          %s479 = int_to_ptr.vmem [resolvable:$true] %s478
          %484 = dma.hbm_to_vmem [thread:$0]  %s9, 32, %s479, [#allocation15], 16, 16, 1
        $region48: #{encoder_forward.1} parent=11 // pred_fallthru
          _
        // Predicated region
        $region49: #{encoder_forward.1} parent=11 // pred_check
          %p485 = pneg %p269
        $region50: #{encoder_forward.1} parent=11 // pred_check_branch
          %487 = sbr.rel (%p485) target = $region52
        $region51: #{encoder_forward.1} parent=11 // pred_region
          %s489 = ssub.s32 32, 32
          %490 = vsyncadd [#allocation15], %s489
          %s491 = sshll.u32 [#allocation16], 4
          %s492 = int_to_ptr.vmem [resolvable:$true] %s491
          %497 = dma.hbm_to_vmem [thread:$0]  %s10, 32, %s492, [#allocation15], 16, 16, 1
        $region52: #{encoder_forward.1} parent=11 // pred_fallthru
          _
        // Predicated region
        $region53: #{encoder_forward.1} parent=11 // pred_check
          %p498 = pneg %p290
        $region54: #{encoder_forward.1} parent=11 // pred_check_branch
          %500 = sbr.rel (%p498) target = $region56
        $region55: #{encoder_forward.1} parent=11 // pred_region
          %s502 = ssub.s32 1024, 1024
          %503 = vsyncadd [#allocation18], %s502
          %s504 = sshll.u32 [#allocation17], 4
          %s505 = int_to_ptr.vmem [resolvable:$true] %s504
          %510 = dma.hbm_to_vmem [thread:$0]  %s11, 1024, %s505, [#allocation18], 64, 64, 4
        $region56: #{encoder_forward.1} parent=11 // pred_fallthru
          _
        // Predicated region
        $region57: #{encoder_forward.1} parent=11 // pred_check
          %p511 = pneg %p311
        $region58: #{encoder_forward.1} parent=11 // pred_check_branch
          %513 = sbr.rel (%p511) target = $region60
        $region59: #{encoder_forward.1} parent=11 // pred_region
          _
        $region60: #{encoder_forward.1} parent=11 // pred_fallthru
          _
      $region12: #{encoder_forward.1} parent=5 // pred_fallthru
        _
      %p514 = scmp.lt.s32.totalorder %s33, 2
      // Predicated region
      $region61: #{encoder_forward.1} parent=5 // pred_check
        %p515 = pneg %p514
      $region62: #{encoder_forward.1} parent=5 // pred_check_branch
        %517 = sbr.rel (%p515) target = $region64
      $region63: #{encoder_forward.1} parent=5 // pred_region
        // Predicated region
        $region65: #{encoder_forward.1} parent=63 // pred_check
          %p518 = pneg %p53
        $region66: #{encoder_forward.1} parent=63 // pred_check_branch
          %520 = sbr.rel (%p518) target = $region68
        $region67: #{encoder_forward.1} parent=63 // pred_region
          %p521 = scmp.lt.s32.totalorder %s33, 1
          %s522 = scalar_select %p521, %s33, 1
          %s523 = smul.addr %s522, 8
          %s524 = scalar_lea.vmem %s0, %s523
        $region68: #{encoder_forward.1} parent=63 // pred_fallthru
          _
      $region64: #{encoder_forward.1} parent=5 // pred_fallthru
        _
      %p525 = scmp.le.s32.totalorder 1, %s33
      %p526 = scmp.lt.s32.totalorder %s33, 3
      %p527 = pnand %p525, %p526
      %p528 = pneg %p527
      // Predicated region
      $region69: #{encoder_forward.1} parent=5 // pred_check
        _
      $region70: #{encoder_forward.1} parent=5 // pred_check_branch
        %530 = sbr.rel (%p527) target = $region72
      $region71: #{encoder_forward.1} parent=5 // pred_region
        %s531 = ssub.s32 %s33, 1
        // Predicated region
        $region73: #{encoder_forward.1} parent=71 // pred_check
          %p532 = pneg %p80
        $region74: #{encoder_forward.1} parent=71 // pred_check_branch
          %534 = sbr.rel (%p532) target = $region76
        $region75: #{encoder_forward.1} parent=71 // pred_region
          %535 = dma.done [#allocation3], 6144
        $region76: #{encoder_forward.1} parent=71 // pred_fallthru
          _
        // Predicated region
        $region77: #{encoder_forward.1} parent=71 // pred_check
          %p536 = pneg %p101
        $region78: #{encoder_forward.1} parent=71 // pred_check_branch
          %538 = sbr.rel (%p536) target = $region80
        $region79: #{encoder_forward.1} parent=71 // pred_region
          %539 = dma.done [#allocation6], 96
        $region80: #{encoder_forward.1} parent=71 // pred_fallthru
          _
        // Predicated region
        $region81: #{encoder_forward.1} parent=71 // pred_check
          %p540 = pneg %p122
        $region82: #{encoder_forward.1} parent=71 // pred_check_branch
          %542 = sbr.rel (%p540) target = $region84
        $region83: #{encoder_forward.1} parent=71 // pred_region
          %543 = dma.done [#allocation6], 32
        $region84: #{encoder_forward.1} parent=71 // pred_fallthru
          _
        // Predicated region
        $region85: #{encoder_forward.1} parent=71 // pred_check
          %p544 = pneg %p143
        $region86: #{encoder_forward.1} parent=71 // pred_check_branch
          %546 = sbr.rel (%p544) target = $region88
        $region87: #{encoder_forward.1} parent=71 // pred_region
          %547 = dma.done [#allocation9], 32
        $region88: #{encoder_forward.1} parent=71 // pred_fallthru
          _
        // Predicated region
        $region89: #{encoder_forward.1} parent=71 // pred_check
          %p548 = pneg %p185
        $region90: #{encoder_forward.1} parent=71 // pred_check_branch
          %550 = sbr.rel (%p548) target = $region92
        $region91: #{encoder_forward.1} parent=71 // pred_region
          %551 = dma.done [#allocation9], 64
        $region92: #{encoder_forward.1} parent=71 // pred_fallthru
          _
        // Predicated region
        $region93: #{encoder_forward.1} parent=71 // pred_check
          %p552 = pneg %p206
        $region94: #{encoder_forward.1} parent=71 // pred_check_branch
          %554 = sbr.rel (%p552) target = $region96
        $region95: #{encoder_forward.1} parent=71 // pred_region
          %555 = dma.done [#allocation12], 4096
        $region96: #{encoder_forward.1} parent=71 // pred_fallthru
          _
        // Predicated region
        $region97: #{encoder_forward.1} parent=71 // pred_check
          %p556 = pneg %p227
        $region98: #{encoder_forward.1} parent=71 // pred_check_branch
          %558 = sbr.rel (%p556) target = $region100
        $region99: #{encoder_forward.1} parent=71 // pred_region
          %559 = dma.done [#allocation12], 32
        $region100: #{encoder_forward.1} parent=71 // pred_fallthru
          _
        // Predicated region
        $region101: #{encoder_forward.1} parent=71 // pred_check
          %p560 = pneg %p248
        $region102: #{encoder_forward.1} parent=71 // pred_check_branch
          %562 = sbr.rel (%p560) target = $region104
        $region103: #{encoder_forward.1} parent=71 // pred_region
          %563 = dma.done [#allocation15], 32
        $region104: #{encoder_forward.1} parent=71 // pred_fallthru
          _
        // Predicated region
        $region105: #{encoder_forward.1} parent=71 // pred_check
          %p564 = pneg %p269
        $region106: #{encoder_forward.1} parent=71 // pred_check_branch
          %566 = sbr.rel (%p564) target = $region108
        $region107: #{encoder_forward.1} parent=71 // pred_region
          %567 = dma.done [#allocation15], 32
        $region108: #{encoder_forward.1} parent=71 // pred_fallthru
          _
        // Predicated region
        $region109: #{encoder_forward.1} parent=71 // pred_check
          %p568 = pneg %p290
        $region110: #{encoder_forward.1} parent=71 // pred_check_branch
          %570 = sbr.rel (%p568) target = $region112
        $region111: #{encoder_forward.1} parent=71 // pred_region
          %571 = dma.done [#allocation18], 1024
        $region112: #{encoder_forward.1} parent=71 // pred_fallthru
          _
        %p572 = scmp.lt.s32.totalorder %s38, 1
        %s573 = scalar_select %p572, %s38, 1
        %s574 = smul.addr %s573, 8
        %s575 = scalar_lea.vmem %s0, %s574
        %p576 = pneg %p59
        %p577 = pneg %p56
        %p578 = pneg %p80
        %p579 = pneg %p77
        %p580 = pneg %p101
        %p581 = pneg %p98
        %p582 = pneg %p122
        %p583 = pneg %p119
        %p584 = pneg %p143
        %p585 = pneg %p140
        %p586 = pneg %p164
        %p587 = pneg %p161
        %p588 = pneg %p185
        %p589 = pneg %p182
        %p590 = pneg %p206
        %p591 = pneg %p203
        %p592 = pneg %p227
        %p593 = pneg %p224
        %p594 = pneg %p248
        %p595 = pneg %p245
        %p596 = pneg %p269
        %p597 = pneg %p266
        %p598 = pneg %p290
        %p599 = pneg %p287
        %p600 = pneg %p311
        %p601 = pneg %p308
        %p602 = pneg %p337
        %p603 = pneg %p334
        %s604 = sand.u32 %s324, 1
        %s605 = scalar_lea.sflag [#allocation4], %s604
        %s606 = sand.u32 %s324, 1
        %s607 = smul.addr %s606, 8
        %s608 = scalar_lea.vmem [#allocation19], %s607
        %p609 = pneg %p363
        %p610 = pneg %p360
        %s611 = sand.u32 %s350, 1
        %s612 = scalar_lea.sflag [#allocation21], %s611
        %s613 = sand.u32 %s350, 1
        %s614 = scalar_lea.vmem [#allocation20], %s613
        %p615 = scmp.lt.s32.totalorder %s38, 1
        %s616 = scalar_select %p615, %s38, 1
        %s617 = smul.addr %s616, 8
        %s618 = scalar_lea.vmem %s0, %s617
        %v619 = vld [vmem:[%s618] sm:$0xff]
        %v620 = vld [vmem:[#allocation2] sm:$0xff]
        %v621 = vld [vmem:[#allocation2 + $0x8] sm:$0xf]
        %v622 = vld [vmem:[#allocation2 + $0xc] sm:$0xff]
        %v623 = vld [vmem:[#allocation2 + $0x14] sm:$0xf]
        %v624 = vld [vmem:[#allocation2 + $0x18] sm:$0xff]
        %v625 = vld [vmem:[#allocation2 + $0x20] sm:$0xf]
        %v626 = vld [vmem:[#allocation2 + $0x24] sm:$0xff]
        %v627 = vld [vmem:[#allocation2 + $0x2c] sm:$0xf]
        %v628 = vld [vmem:[#allocation2 + $0x30] sm:$0xff]
        %v629 = vld [vmem:[#allocation2 + $0x38] sm:$0xf]
        %v630 = vld [vmem:[#allocation2 + $0x3c] sm:$0xff]
        %v631 = vld [vmem:[#allocation2 + $0x44] sm:$0xf]
        %v632 = vld [vmem:[#allocation2 + $0x48] sm:$0xff]
        %v633 = vld [vmem:[#allocation2 + $0x50] sm:$0xf]
        %v634 = vld [vmem:[#allocation2 + $0x54] sm:$0xff]
        %v635 = vld [vmem:[#allocation2 + $0x5c] sm:$0xf]
        %v636 = vld [vmem:[#allocation2 + $0x60] sm:$0xff]
        %v637 = vld [vmem:[#allocation2 + $0x68] sm:$0xf]
        %v638 = vld [vmem:[#allocation2 + $0x6c] sm:$0xff]
        %v639 = vld [vmem:[#allocation2 + $0x74] sm:$0xf]
        %v640 = vld [vmem:[#allocation2 + $0x78] sm:$0xff]
        %v641 = vld [vmem:[#allocation2 + $0x80] sm:$0xf]
        %v642 = vld [vmem:[#allocation2 + $0x84] sm:$0xff]
        %v643 = vld [vmem:[#allocation2 + $0x8c] sm:$0xf]
        %v644 = vld [vmem:[#allocation2 + $0x90] sm:$0xff]
        %v645 = vld [vmem:[#allocation2 + $0x98] sm:$0xf]
        %v646 = vld [vmem:[#allocation2 + $0x9c] sm:$0xff]
        %v647 = vld [vmem:[#allocation2 + $0xa4] sm:$0xf]
        %v648 = vld [vmem:[#allocation2 + $0xa8] sm:$0xff]
        %v649 = vld [vmem:[#allocation2 + $0xb0] sm:$0xf]
        %v650 = vld [vmem:[#allocation2 + $0xb4] sm:$0xff]
        %v651 = vld [vmem:[#allocation2 + $0xbc] sm:$0xf]
        %v652 = vunpack.c.l.bf16 %v620
        %v653 = vunpack.c.h.bf16 %v620
        %v654 = vunpack.c.l.bf16 %v621
        %v655 = vunpack.c.l.bf16 %v622
        %v656 = vunpack.c.h.bf16 %v622
        %v657 = vunpack.c.l.bf16 %v623
        %v658 = vunpack.c.l.bf16 %v624
        %v659 = vunpack.c.h.bf16 %v624
        %v660 = vunpack.c.l.bf16 %v625
        %v661 = vunpack.c.l.bf16 %v626
        %v662 = vunpack.c.h.bf16 %v626
        %v663 = vunpack.c.l.bf16 %v627
        %v664 = vunpack.c.l.bf16 %v628
        %v665 = vunpack.c.h.bf16 %v628
        %v666 = vunpack.c.l.bf16 %v629
        %v667 = vunpack.c.l.bf16 %v630
        %v668 = vunpack.c.h.bf16 %v630
        %v669 = vunpack.c.l.bf16 %v631
        %v670 = vunpack.c.l.bf16 %v632
        %v671 = vunpack.c.h.bf16 %v632
        %v672 = vunpack.c.l.bf16 %v633
        %v673 = vunpack.c.l.bf16 %v634
        %v674 = vunpack.c.h.bf16 %v634
        %v675 = vunpack.c.l.bf16 %v635
        %v676 = vunpack.c.l.bf16 %v636
        %v677 = vunpack.c.h.bf16 %v636
        %v678 = vunpack.c.l.bf16 %v637
        %v679 = vunpack.c.l.bf16 %v638
        %v680 = vunpack.c.h.bf16 %v638
        %v681 = vunpack.c.l.bf16 %v639
        %v682 = vunpack.c.l.bf16 %v640
        %v683 = vunpack.c.h.bf16 %v640
        %v684 = vunpack.c.l.bf16 %v641
        %v685 = vunpack.c.l.bf16 %v642
        %v686 = vunpack.c.h.bf16 %v642
        %v687 = vunpack.c.l.bf16 %v643
        %v688 = vunpack.c.l.bf16 %v644
        %v689 = vunpack.c.h.bf16 %v644
        %v690 = vunpack.c.l.bf16 %v645
        %v691 = vunpack.c.l.bf16 %v646
        %v692 = vunpack.c.h.bf16 %v646
        %v693 = vunpack.c.l.bf16 %v647
        %v694 = vunpack.c.l.bf16 %v648
        %v695 = vunpack.c.h.bf16 %v648
        %v696 = vunpack.c.l.bf16 %v649
        %v697 = vunpack.c.l.bf16 %v650
        %v698 = vunpack.c.h.bf16 %v650
        %v699 = vunpack.c.l.bf16 %v651
        %v700 = vld [vmem:[#allocation5] sm:$0x7]
        %v702 = vlaneseq
        %v703 = vshrl.u32 %v702, 7
        %v704 = vsub.s32 0, %v703
        %v705 = vrot.slane %v700, %v704
        %v706 = vlaneseq
        %v707 = vshrl.u32 %v706, 7
        %v708 = vsub.s32 1, %v707
        %v709 = vrot.slane %v700, %v708
        %v710 = vlaneseq
        %v711 = vshrl.u32 %v710, 7
        %v712 = vsub.s32 2, %v711
        %v713 = vrot.slane %v700, %v712
        %717 = vmatprep.subr.mxu0 %v653
        %718 = vmatpush1.msra.mxu0 %v652
        %719 = vmatprep.subr.mxu0 %v656
        %720 = vmatpush1.msra.mxu0 %v655
        %721 = vmatprep.subr.mxu0 %v659
        %722 = vmatpush1.msra.mxu0 %v658
        %723 = vmatprep.subr.mxu0 %v662
        %724 = vmatpush1.msra.mxu0 %v661
        %725 = vmatprep.subr.mxu0 %v665
        %726 = vmatpush1.msra.mxu0 %v664
        %727 = vmatprep.subr.mxu0 %v668
        %728 = vmatpush1.msra.mxu0 %v667
        %729 = vmatprep.subr.mxu0 %v671
        %730 = vmatpush1.msra.mxu0 %v670
        %731 = vmatprep.subr.mxu0 %v674
        %732 = vmatpush1.msra.mxu0 %v673
        %733 = vmatprep.subr.mxu0 %v677
        %734 = vmatpush1.msra.mxu0 %v676
        %735 = vmatprep.subr.mxu0 %v680
        %736 = vmatpush1.msra.mxu0 %v679
        %737 = vmatprep.subr.mxu0 %v683
        %738 = vmatpush1.msra.mxu0 %v682
        %739 = vmatprep.subr.mxu0 %v686
        %740 = vmatpush1.msra.mxu0 %v685
        %741 = vmatprep.subr.mxu0 %v689
        %742 = vmatpush1.msra.mxu0 %v688
        %743 = vmatprep.subr.mxu0 %v692
        %744 = vmatpush1.msra.mxu0 %v691
        %745 = vmatprep.subr.mxu0 %v695
        %746 = vmatpush1.msra.mxu0 %v694
        %747 = vmatprep.subr.mxu0 %v698
        %748 = vmatpush1.msra.mxu0 %v697
        %749 = vmatprep.subr.mxu0 0.0
        %750 = vmatpush1.msra.mxu0 0.0
        %751 = vmatprep.subr.mxu0 0.0
        %752 = vmatpush1.msra.mxu0 0.0
        %753 = vmatprep.subr.mxu0 0.0
        %754 = vmatpush1.msra.mxu0 0.0
        %755 = vmatprep.subr.mxu0 0.0
        %756 = vmatpush1.msra.mxu0 0.0
        %757 = vmatprep.subr.mxu0 0.0
        %758 = vmatpush1.msra.mxu0 0.0
        %759 = vmatprep.subr.mxu0 0.0
        %760 = vmatpush1.msra.mxu0 0.0
        %761 = vmatprep.subr.mxu0 0.0
        %762 = vmatpush1.msra.mxu0 0.0
        %763 = vmatprep.subr.mxu0 0.0
        %764 = vmatpush1.msra.mxu0 0.0
        %765 = vmatprep.subr.mxu0 0.0
        %766 = vmatpush1.msra.mxu0 0.0
        %767 = vmatprep.subr.mxu0 0.0
        %768 = vmatpush1.msra.mxu0 0.0
        %769 = vmatprep.subr.mxu0 0.0
        %770 = vmatpush1.msra.mxu0 0.0
        %771 = vmatprep.subr.mxu0 0.0
        %772 = vmatpush1.msra.mxu0 0.0
        %773 = vmatprep.subr.mxu0 0.0
        %774 = vmatpush1.msra.mxu0 0.0
        %775 = vmatprep.subr.mxu0 0.0
        %776 = vmatpush1.msra.mxu0 0.0
        %777 = vmatprep.subr.mxu0 0.0
        %778 = vmatpush1.msra.mxu0 0.0
        %779 = vmatprep.subr.mxu0 0.0
        %780 = vmatpush1.msra.mxu0 0.0
        %781 = vmatprep.mubr.f32.mxu0 0.0
        %782 = vmatmul.mubr.f32.gmra.mrb[0].mxu0 %v619
        %v783 = vpop.f32.mrb[0].mxu0
        %v784 = vadd.f32 %v705, %v783
        %v785 = vpop.f32.mrb[0].mxu0
        %v786 = vadd.f32 %v709, %v785
        %787 = vdwg.mxu0
        %788 = vmatprep.subr.mxu0 0.0
        %789 = vmatpush1.msra.mxu0 %v654
        %790 = vmatprep.subr.mxu0 0.0
        %791 = vmatpush1.msra.mxu0 %v657
        %792 = vmatprep.subr.mxu0 0.0
        %793 = vmatpush1.msra.mxu0 %v660
        %794 = vmatprep.subr.mxu0 0.0
        %795 = vmatpush1.msra.mxu0 %v663
        %796 = vmatprep.subr.mxu0 0.0
        %797 = vmatpush1.msra.mxu0 %v666
        %798 = vmatprep.subr.mxu0 0.0
        %799 = vmatpush1.msra.mxu0 %v669
        %800 = vmatprep.subr.mxu0 0.0
        %801 = vmatpush1.msra.mxu0 %v672
        %802 = vmatprep.subr.mxu0 0.0
        %803 = vmatpush1.msra.mxu0 %v675
        %804 = vmatprep.subr.mxu0 0.0
        %805 = vmatpush1.msra.mxu0 %v678
        %806 = vmatprep.subr.mxu0 0.0
        %807 = vmatpush1.msra.mxu0 %v681
        %808 = vmatprep.subr.mxu0 0.0
        %809 = vmatpush1.msra.mxu0 %v684
        %810 = vmatprep.subr.mxu0 0.0
        %811 = vmatpush1.msra.mxu0 %v687
        %812 = vmatprep.subr.mxu0 0.0
        %813 = vmatpush1.msra.mxu0 %v690
        %814 = vmatprep.subr.mxu0 0.0
        %815 = vmatpush1.msra.mxu0 %v693
        %816 = vmatprep.subr.mxu0 0.0
        %817 = vmatpush1.msra.mxu0 %v696
        %818 = vmatprep.subr.mxu0 0.0
        %819 = vmatpush1.msra.mxu0 %v699
        %820 = vmatprep.subr.mxu0 0.0
        %821 = vmatpush1.msra.mxu0 0.0
        %822 = vmatprep.subr.mxu0 0.0
        %823 = vmatpush1.msra.mxu0 0.0
        %824 = vmatprep.subr.mxu0 0.0
        %825 = vmatpush1.msra.mxu0 0.0
        %826 = vmatprep.subr.mxu0 0.0
        %827 = vmatpush1.msra.mxu0 0.0
        %828 = vmatprep.subr.mxu0 0.0
        %829 = vmatpush1.msra.mxu0 0.0
        %830 = vmatprep.subr.mxu0 0.0
        %831 = vmatpush1.msra.mxu0 0.0
        %832 = vmatprep.subr.mxu0 0.0
        %833 = vmatpush1.msra.mxu0 0.0
        %834 = vmatprep.subr.mxu0 0.0
        %835 = vmatpush1.msra.mxu0 0.0
        %836 = vmatprep.subr.mxu0 0.0
        %837 = vmatpush1.msra.mxu0 0.0
        %838 = vmatprep.subr.mxu0 0.0
        %839 = vmatpush1.msra.mxu0 0.0
        %840 = vmatprep.subr.mxu0 0.0
        %841 = vmatpush1.msra.mxu0 0.0
        %842 = vmatprep.subr.mxu0 0.0
        %843 = vmatpush1.msra.mxu0 0.0
        %844 = vmatprep.subr.mxu0 0.0
        %845 = vmatpush1.msra.mxu0 0.0
        %846 = vmatprep.subr.mxu0 0.0
        %847 = vmatpush1.msra.mxu0 0.0
        %848 = vmatprep.subr.mxu0 0.0
        %849 = vmatpush1.msra.mxu0 0.0
        %850 = vmatprep.subr.mxu0 0.0
        %851 = vmatpush1.msra.mxu0 0.0
        %852 = vmatprep.mubr.f32.mxu0 0.0
        %853 = vmatmul.mubr.f32.gmra.mrb[0].mxu0 %v619
        %v854 = vpop.f32.mrb[0].mxu0
        %v855 = vadd.f32 %v713, %v854
        %v856 = vpop.f32.mrb[0].mxu0
        %857 = vdwg.mxu0
        %859 = vrot.lane.b32.xlu0 %v784, 96
        %v860 = vpop.permute.xlu0 %859
        %861 = vrot.lane.b32.xlu0 %v784, 64
        %v862 = vpop.permute.xlu0 %861
        %863 = vrot.lane.b32.xlu0 %v784, 32
        %v864 = vpop.permute.xlu0 %863
        %866 = vrot.lane.b32.xlu0 %v786, 96
        %v867 = vpop.permute.xlu0 %866
        %868 = vrot.lane.b32.xlu0 %v786, 64
        %v869 = vpop.permute.xlu0 %868
        %870 = vrot.lane.b32.xlu0 %v786, 32
        %v871 = vpop.permute.xlu0 %870
        %873 = vrot.lane.b32.xlu0 %v855, 96
        %v874 = vpop.permute.xlu0 %873
        %876 = vrot.lane.b32.xlu0 %v855, 64
        %v877 = vpop.permute.xlu0 %876
        %879 = vrot.lane.b32.xlu0 %v855, 32
        %v880 = vpop.permute.xlu0 %879
        %vm882 = vcmask 261120
        %v883 = vsel %vm882, %v784, 0
        %v885 = vsel %vm882, %v786, 0
        %887 = vmatprep.subr.mxu0 0.0
        %888 = vmatpush1.xpose.msra.mxu0 %v885
        %889 = vmatprep.subr.mxu0 0.0
        %890 = vmatpush1.xpose.msra.mxu0 0.0
        %891 = vmatprep.subr.mxu0 0.0
        %892 = vmatpush1.xpose.msra.mxu0 0.0
        %893 = vmatprep.subr.mxu0 0.0
        %894 = vmatpush1.xpose.msra.mxu0 0.0
        %895 = vmatprep.subr.mxu0 0.0
        %896 = vmatpush1.xpose.msra.mxu0 0.0
        %897 = vmatprep.subr.mxu0 0.0
        %898 = vmatpush1.xpose.msra.mxu0 0.0
        %899 = vmatprep.subr.mxu0 0.0
        %900 = vmatpush1.xpose.msra.mxu0 0.0
        %901 = vmatprep.subr.mxu0 0.0
        %902 = vmatpush1.xpose.msra.mxu0 0.0
        %903 = vmatprep.subr.mxu0 0.0
        %904 = vmatpush1.xpose.msra.mxu0 0.0
        %905 = vmatprep.subr.mxu0 0.0
        %906 = vmatpush1.xpose.msra.mxu0 0.0
        %907 = vmatprep.subr.mxu0 0.0
        %908 = vmatpush1.xpose.msra.mxu0 0.0
        %909 = vmatprep.subr.mxu0 0.0
        %910 = vmatpush1.xpose.msra.mxu0 0.0
        %911 = vmatprep.subr.mxu0 0.0
        %912 = vmatpush1.xpose.msra.mxu0 0.0
        %913 = vmatprep.subr.mxu0 0.0
        %914 = vmatpush1.xpose.msra.mxu0 0.0
        %915 = vmatprep.subr.mxu0 0.0
        %916 = vmatpush1.xpose.msra.mxu0 0.0
        %917 = vmatprep.subr.mxu0 0.0
        %918 = vmatpush1.xpose.msra.mxu0 0.0
        %919 = vmatprep.subr.mxu0 0.0
        %920 = vmatpush1.xpose.msra.mxu0 0.0
        %921 = vmatprep.subr.mxu0 0.0
        %922 = vmatpush1.xpose.msra.mxu0 0.0
        %923 = vmatprep.subr.mxu0 0.0
        %924 = vmatpush1.xpose.msra.mxu0 0.0
        %925 = vmatprep.subr.mxu0 0.0
        %926 = vmatpush1.xpose.msra.mxu0 0.0
        %927 = vmatprep.subr.mxu0 0.0
        %928 = vmatpush1.xpose.msra.mxu0 0.0
        %929 = vmatprep.subr.mxu0 0.0
        %930 = vmatpush1.xpose.msra.mxu0 0.0
        %931 = vmatprep.subr.mxu0 0.0
        %932 = vmatpush1.xpose.msra.mxu0 0.0
        %933 = vmatprep.subr.mxu0 0.0
        %934 = vmatpush1.xpose.msra.mxu0 0.0
        %935 = vmatprep.subr.mxu0 0.0
        %936 = vmatpush1.xpose.msra.mxu0 0.0
        %937 = vmatprep.subr.mxu0 0.0
        %938 = vmatpush1.xpose.msra.mxu0 0.0
        %939 = vmatprep.subr.mxu0 0.0
        %940 = vmatpush1.xpose.msra.mxu0 0.0
        %941 = vmatprep.subr.mxu0 0.0
        %942 = vmatpush1.xpose.msra.mxu0 0.0
        %943 = vmatprep.subr.mxu0 0.0
        %944 = vmatpush1.xpose.msra.mxu0 0.0
        %945 = vmatprep.subr.mxu0 0.0
        %946 = vmatpush1.xpose.msra.mxu0 0.0
        %947 = vmatprep.subr.mxu0 0.0
        %948 = vmatpush1.xpose.msra.mxu0 0.0
        %949 = vmatprep.subr.mxu0 0.0
        %950 = vmatpush1.xpose.msra.mxu0 0.0
        %951 = vmatprep.mubr.f32.mxu0 0.0
        %952 = vmatmul.mubr.f32.gmra.mrb[0].mxu0 %v883
        %v953 = vpop.f32.mrb[0].mxu0
        %v954 = vadd.f32 0.0, %v953
        %v955 = vpop.f32.mrb[0].mxu0
        %956 = vdwg.mxu0
        %v957 = vsel %vm882, %v860, 0
        %v959 = vsel %vm882, %v867, 0
        %961 = vmatprep.subr.mxu0 0.0
        %962 = vmatpush1.xpose.msra.mxu0 %v959
        %963 = vmatprep.subr.mxu0 0.0
        %964 = vmatpush1.xpose.msra.mxu0 0.0
        %965 = vmatprep.subr.mxu0 0.0
        %966 = vmatpush1.xpose.msra.mxu0 0.0
        %967 = vmatprep.subr.mxu0 0.0
        %968 = vmatpush1.xpose.msra.mxu0 0.0
        %969 = vmatprep.subr.mxu0 0.0
        %970 = vmatpush1.xpose.msra.mxu0 0.0
        %971 = vmatprep.subr.mxu0 0.0
        %972 = vmatpush1.xpose.msra.mxu0 0.0
        %973 = vmatprep.subr.mxu0 0.0
        %974 = vmatpush1.xpose.msra.mxu0 0.0
        %975 = vmatprep.subr.mxu0 0.0
        %976 = vmatpush1.xpose.msra.mxu0 0.0
        %977 = vmatprep.subr.mxu0 0.0
        %978 = vmatpush1.xpose.msra.mxu0 0.0
        %979 = vmatprep.subr.mxu0 0.0
        %980 = vmatpush1.xpose.msra.mxu0 0.0
        %981 = vmatprep.subr.mxu0 0.0
        %982 = vmatpush1.xpose.msra.mxu0 0.0
        %983 = vmatprep.subr.mxu0 0.0
        %984 = vmatpush1.xpose.msra.mxu0 0.0
        %985 = vmatprep.subr.mxu0 0.0
        %986 = vmatpush1.xpose.msra.mxu0 0.0
        %987 = vmatprep.subr.mxu0 0.0
        %988 = vmatpush1.xpose.msra.mxu0 0.0
        %989 = vmatprep.subr.mxu0 0.0
        %990 = vmatpush1.xpose.msra.mxu0 0.0
        %991 = vmatprep.subr.mxu0 0.0
        %992 = vmatpush1.xpose.msra.mxu0 0.0
        %993 = vmatprep.subr.mxu0 0.0
        %994 = vmatpush1.xpose.msra.mxu0 0.0
        %995 = vmatprep.subr.mxu0 0.0
        %996 = vmatpush1.xpose.msra.mxu0 0.0
        %997 = vmatprep.subr.mxu0 0.0
        %998 = vmatpush1.xpose.msra.mxu0 0.0
        %999 = vmatprep.subr.mxu0 0.0
        %1000 = vmatpush1.xpose.msra.mxu0 0.0
        %1001 = vmatprep.subr.mxu0 0.0
        %1002 = vmatpush1.xpose.msra.mxu0 0.0
        %1003 = vmatprep.subr.mxu0 0.0
        %1004 = vmatpush1.xpose.msra.mxu0 0.0
        %1005 = vmatprep.subr.mxu0 0.0
        %1006 = vmatpush1.xpose.msra.mxu0 0.0
        %1007 = vmatprep.subr.mxu0 0.0
        %1008 = vmatpush1.xpose.msra.mxu0 0.0
        %1009 = vmatprep.subr.mxu0 0.0
        %1010 = vmatpush1.xpose.msra.mxu0 0.0
        %1011 = vmatprep.subr.mxu0 0.0
        %1012 = vmatpush1.xpose.msra.mxu0 0.0
        %1013 = vmatprep.subr.mxu0 0.0
        %1014 = vmatpush1.xpose.msra.mxu0 0.0
        %1015 = vmatprep.subr.mxu0 0.0
        %1016 = vmatpush1.xpose.msra.mxu0 0.0
        %1017 = vmatprep.subr.mxu0 0.0
        %1018 = vmatpush1.xpose.msra.mxu0 0.0
        %1019 = vmatprep.subr.mxu0 0.0
        %1020 = vmatpush1.xpose.msra.mxu0 0.0
        %1021 = vmatprep.subr.mxu0 0.0
        %1022 = vmatpush1.xpose.msra.mxu0 0.0
        %1023 = vmatprep.subr.mxu0 0.0
        %1024 = vmatpush1.xpose.msra.mxu0 0.0
        %1025 = vmatprep.mubr.f32.mxu0 0.0
        %1026 = vmatmul.mubr.f32.gmra.mrb[0].mxu0 %v957
        %v1027 = vpop.f32.mrb[0].mxu0
        %v1028 = vadd.f32 0.0, %v1027
        %v1029 = vpop.f32.mrb[0].mxu0
        %1030 = vdwg.mxu0
        %v1031 = vsel %vm882, %v862, 0
        %v1033 = vsel %vm882, %v869, 0
        %1035 = vmatprep.subr.mxu0 0.0
        %1036 = vmatpush1.xpose.msra.mxu0 %v1033
        %1037 = vmatprep.subr.mxu0 0.0
        %1038 = vmatpush1.xpose.msra.mxu0 0.0
        %1039 = vmatprep.subr.mxu0 0.0
        %1040 = vmatpush1.xpose.msra.mxu0 0.0
        %1041 = vmatprep.subr.mxu0 0.0
        %1042 = vmatpush1.xpose.msra.mxu0 0.0
        %1043 = vmatprep.subr.mxu0 0.0
        %1044 = vmatpush1.xpose.msra.mxu0 0.0
        %1045 = vmatprep.subr.mxu0 0.0
        %1046 = vmatpush1.xpose.msra.mxu0 0.0
        %1047 = vmatprep.subr.mxu0 0.0
        %1048 = vmatpush1.xpose.msra.mxu0 0.0
        %1049 = vmatprep.subr.mxu0 0.0
        %1050 = vmatpush1.xpose.msra.mxu0 0.0
        %1051 = vmatprep.subr.mxu0 0.0
        %1052 = vmatpush1.xpose.msra.mxu0 0.0
        %1053 = vmatprep.subr.mxu0 0.0
        %1054 = vmatpush1.xpose.msra.mxu0 0.0
        %1055 = vmatprep.subr.mxu0 0.0
        %1056 = vmatpush1.xpose.msra.mxu0 0.0
        %1057 = vmatprep.subr.mxu0 0.0
        %1058 = vmatpush1.xpose.msra.mxu0 0.0
        %1059 = vmatprep.subr.mxu0 0.0
        %1060 = vmatpush1.xpose.msra.mxu0 0.0
        %1061 = vmatprep.subr.mxu0 0.0
        %1062 = vmatpush1.xpose.msra.mxu0 0.0
        %1063 = vmatprep.subr.mxu0 0.0
        %1064 = vmatpush1.xpose.msra.mxu0 0.0
        %1065 = vmatprep.subr.mxu0 0.0
        %1066 = vmatpush1.xpose.msra.mxu0 0.0
        %1067 = vmatprep.subr.mxu0 0.0
        %1068 = vmatpush1.xpose.msra.mxu0 0.0
        %1069 = vmatprep.subr.mxu0 0.0
        %1070 = vmatpush1.xpose.msra.mxu0 0.0
        %1071 = vmatprep.subr.mxu0 0.0
        %1072 = vmatpush1.xpose.msra.mxu0 0.0
        %1073 = vmatprep.subr.mxu0 0.0
        %1074 = vmatpush1.xpose.msra.mxu0 0.0
        %1075 = vmatprep.subr.mxu0 0.0
        %1076 = vmatpush1.xpose.msra.mxu0 0.0
        %1077 = vmatprep.subr.mxu0 0.0
        %1078 = vmatpush1.xpose.msra.mxu0 0.0
        %1079 = vmatprep.subr.mxu0 0.0
        %1080 = vmatpush1.xpose.msra.mxu0 0.0
        %1081 = vmatprep.subr.mxu0 0.0
        %1082 = vmatpush1.xpose.msra.mxu0 0.0
        %1083 = vmatprep.subr.mxu0 0.0
        %1084 = vmatpush1.xpose.msra.mxu0 0.0
        %1085 = vmatprep.subr.mxu0 0.0
        %1086 = vmatpush1.xpose.msra.mxu0 0.0
        %1087 = vmatprep.subr.mxu0 0.0
        %1088 = vmatpush1.xpose.msra.mxu0 0.0
        %1089 = vmatprep.subr.mxu0 0.0
        %1090 = vmatpush1.xpose.msra.mxu0 0.0
        %1091 = vmatprep.subr.mxu0 0.0
        %1092 = vmatpush1.xpose.msra.mxu0 0.0
        %1093 = vmatprep.subr.mxu0 0.0
        %1094 = vmatpush1.xpose.msra.mxu0 0.0
        %1095 = vmatprep.subr.mxu0 0.0
        %1096 = vmatpush1.xpose.msra.mxu0 0.0
        %1097 = vmatprep.subr.mxu0 0.0
        %1098 = vmatpush1.xpose.msra.mxu0 0.0
        %1099 = vmatprep.mubr.f32.mxu0 0.0
        %1100 = vmatmul.mubr.f32.gmra.mrb[0].mxu0 %v1031
        %v1101 = vpop.f32.mrb[0].mxu0
        %v1102 = vadd.f32 0.0, %v1101
        %v1103 = vpop.f32.mrb[0].mxu0
        %1104 = vdwg.mxu0
        %v1105 = vsel %vm882, %v864, 0
        %v1107 = vsel %vm882, %v871, 0
        %1109 = vmatprep.subr.mxu0 0.0
        %1110 = vmatpush1.xpose.msra.mxu0 %v1107
        %1111 = vmatprep.subr.mxu0 0.0
        %1112 = vmatpush1.xpose.msra.mxu0 0.0
        %1113 = vmatprep.subr.mxu0 0.0
        %1114 = vmatpush1.xpose.msra.mxu0 0.0
        %1115 = vmatprep.subr.mxu0 0.0
        %1116 = vmatpush1.xpose.msra.mxu0 0.0
        %1117 = vmatprep.subr.mxu0 0.0
        %1118 = vmatpush1.xpose.msra.mxu0 0.0
        %1119 = vmatprep.subr.mxu0 0.0
        %1120 = vmatpush1.xpose.msra.mxu0 0.0
        %1121 = vmatprep.subr.mxu0 0.0
        %1122 = vmatpush1.xpose.msra.mxu0 0.0
        %1123 = vmatprep.subr.mxu0 0.0
        %1124 = vmatpush1.xpose.msra.mxu0 0.0
        %1125 = vmatprep.subr.mxu0 0.0
        %1126 = vmatpush1.xpose.msra.mxu0 0.0
        %1127 = vmatprep.subr.mxu0 0.0
        %1128 = vmatpush1.xpose.msra.mxu0 0.0
        %1129 = vmatprep.subr.mxu0 0.0
        %1130 = vmatpush1.xpose.msra.mxu0 0.0
        %1131 = vmatprep.subr.mxu0 0.0
        %1132 = vmatpush1.xpose.msra.mxu0 0.0
        %1133 = vmatprep.subr.mxu0 0.0
        %1134 = vmatpush1.xpose.msra.mxu0 0.0
        %1135 = vmatprep.subr.mxu0 0.0
        %1136 = vmatpush1.xpose.msra.mxu0 0.0
        %1137 = vmatprep.subr.mxu0 0.0
        %1138 = vmatpush1.xpose.msra.mxu0 0.0
        %1139 = vmatprep.subr.mxu0 0.0
        %1140 = vmatpush1.xpose.msra.mxu0 0.0
        %1141 = vmatprep.subr.mxu0 0.0
        %1142 = vmatpush1.xpose.msra.mxu0 0.0
        %1143 = vmatprep.subr.mxu0 0.0
        %1144 = vmatpush1.xpose.msra.mxu0 0.0
        %1145 = vmatprep.subr.mxu0 0.0
        %1146 = vmatpush1.xpose.msra.mxu0 0.0
        %1147 = vmatprep.subr.mxu0 0.0
        %1148 = vmatpush1.xpose.msra.mxu0 0.0
        %1149 = vmatprep.subr.mxu0 0.0
        %1150 = vmatpush1.xpose.msra.mxu0 0.0
        %1151 = vmatprep.subr.mxu0 0.0
        %1152 = vmatpush1.xpose.msra.mxu0 0.0
        %1153 = vmatprep.subr.mxu0 0.0
        %1154 = vmatpush1.xpose.msra.mxu0 0.0
        %1155 = vmatprep.subr.mxu0 0.0
        %1156 = vmatpush1.xpose.msra.mxu0 0.0
        %1157 = vmatprep.subr.mxu0 0.0
        %1158 = vmatpush1.xpose.msra.mxu0 0.0
        %1159 = vmatprep.subr.mxu0 0.0
        %1160 = vmatpush1.xpose.msra.mxu0 0.0
        %1161 = vmatprep.subr.mxu0 0.0
        %1162 = vmatpush1.xpose.msra.mxu0 0.0
        %1163 = vmatprep.subr.mxu0 0.0
        %1164 = vmatpush1.xpose.msra.mxu0 0.0
        %1165 = vmatprep.subr.mxu0 0.0
        %1166 = vmatpush1.xpose.msra.mxu0 0.0
        %1167 = vmatprep.subr.mxu0 0.0
        %1168 = vmatpush1.xpose.msra.mxu0 0.0
        %1169 = vmatprep.subr.mxu0 0.0
        %1170 = vmatpush1.xpose.msra.mxu0 0.0
        %1171 = vmatprep.subr.mxu0 0.0
        %1172 = vmatpush1.xpose.msra.mxu0 0.0
        %1173 = vmatprep.mubr.f32.mxu0 0.0
        %1174 = vmatmul.mubr.f32.gmra.mrb[0].mxu0 %v1105
        %v1175 = vpop.f32.mrb[0].mxu0
        %v1176 = vadd.f32 0.0, %v1175
        %v1177 = vpop.f32.mrb[0].mxu0
        %1178 = vdwg.mxu0
        %vm1179 = vcmask 64512
        %v1180 = vsel %vm1179, %v954, -inf
        %1181 = vmax.xlane.f32.xlu0 %v1180
        %v1182 = vpop.xlane.xlu0 %1181
        %v1183 = vsel %vm1179, %v1028, -inf
        %1184 = vmax.xlane.f32.xlu0 %v1183
        %v1185 = vpop.xlane.xlu0 %1184
        %v1186 = vsel %vm1179, %v1102, -inf
        %1187 = vmax.xlane.f32.xlu0 %v1186
        %v1188 = vpop.xlane.xlu0 %1187
        %v1189 = vsel %vm1179, %v1176, -inf
        %1190 = vmax.xlane.f32.xlu0 %v1189
        %v1191 = vpop.xlane.xlu0 %1190
        %v1192 = vsub.f32 %v954, %v1182
        %v1193 = vsub.f32 %v1028, %v1185
        %v1194 = vsub.f32 %v1102, %v1188
        %v1195 = vsub.f32 %v1176, %v1191
        %v1196 = vmul.f32 %v1192, 1.442695
        %v1197 = vpow.pop %v1196
        %v1198 = vmul.f32 %v1193, 1.442695
        %v1199 = vpow.pop %v1198
        %v1200 = vmul.f32 %v1194, 1.442695
        %v1201 = vpow.pop %v1200
        %v1202 = vmul.f32 %v1195, 1.442695
        %v1203 = vpow.pop %v1202
        %v1204 = vsel %vm1179, %v1197, 0.0
        %1205 = vadd.xlane.f32.xlu0 %v1204
        %v1206 = vpop.xlane.xlu0 %1205
        %v1207 = vsel %vm1179, %v1199, 0.0
        %1208 = vadd.xlane.f32.xlu0 %v1207
        %v1209 = vpop.xlane.xlu0 %1208
        %v1210 = vsel %vm1179, %v1201, 0.0
        %1211 = vadd.xlane.f32.xlu0 %v1210
        %v1212 = vpop.xlane.xlu0 %1211
        %v1213 = vsel %vm1179, %v1203, 0.0
        %1214 = vadd.xlane.f32.xlu0 %v1213
        %v1215 = vpop.xlane.xlu0 %1214
        %v1216 = vrcp.pop %v1206
        %v1217 = vrcp.pop %v1209
        %v1218 = vrcp.pop %v1212
        %v1219 = vrcp.pop %v1215
        %v1220 = vmul.f32 %v1197, %v1216
        %v1221 = vmul.f32 %v1199, %v1217
        %v1222 = vmul.f32 %v1201, %v1218
        %v1223 = vmul.f32 %v1203, %v1219
        %v1225 = vsel %vm1179, %v1220, 0
        %1227 = vmatprep.subr.mxu0 0.0
        %1228 = vmatpush1.msra.mxu0 %v855
        %1229 = vmatprep.subr.mxu0 0.0
        %1230 = vmatpush1.msra.mxu0 0.0
        %1231 = vmatprep.subr.mxu0 0.0
        %1232 = vmatpush1.msra.mxu0 0.0
        %1233 = vmatprep.subr.mxu0 0.0
        %1234 = vmatpush1.msra.mxu0 0.0
        %1235 = vmatprep.subr.mxu0 0.0
        %1236 = vmatpush1.msra.mxu0 0.0
        %1237 = vmatprep.subr.mxu0 0.0
        %1238 = vmatpush1.msra.mxu0 0.0
        %1239 = vmatprep.subr.mxu0 0.0
        %1240 = vmatpush1.msra.mxu0 0.0
        %1241 = vmatprep.subr.mxu0 0.0
        %1242 = vmatpush1.msra.mxu0 0.0
        %1243 = vmatprep.subr.mxu0 0.0
        %1244 = vmatpush1.msra.mxu0 0.0
        %1245 = vmatprep.subr.mxu0 0.0
        %1246 = vmatpush1.msra.mxu0 0.0
        %1247 = vmatprep.subr.mxu0 0.0
        %1248 = vmatpush1.msra.mxu0 0.0
        %1249 = vmatprep.subr.mxu0 0.0
        %1250 = vmatpush1.msra.mxu0 0.0
        %1251 = vmatprep.subr.mxu0 0.0
        %1252 = vmatpush1.msra.mxu0 0.0
        %1253 = vmatprep.subr.mxu0 0.0
        %1254 = vmatpush1.msra.mxu0 0.0
        %1255 = vmatprep.subr.mxu0 0.0
        %1256 = vmatpush1.msra.mxu0 0.0
        %1257 = vmatprep.subr.mxu0 0.0
        %1258 = vmatpush1.msra.mxu0 0.0
        %1259 = vmatprep.subr.mxu0 0.0
        %1260 = vmatpush1.msra.mxu0 0.0
        %1261 = vmatprep.subr.mxu0 0.0
        %1262 = vmatpush1.msra.mxu0 0.0
        %1263 = vmatprep.subr.mxu0 0.0
        %1264 = vmatpush1.msra.mxu0 0.0
        %1265 = vmatprep.subr.mxu0 0.0
        %1266 = vmatpush1.msra.mxu0 0.0
        %1267 = vmatprep.subr.mxu0 0.0
        %1268 = vmatpush1.msra.mxu0 0.0
        %1269 = vmatprep.subr.mxu0 0.0
        %1270 = vmatpush1.msra.mxu0 0.0
        %1271 = vmatprep.subr.mxu0 0.0
        %1272 = vmatpush1.msra.mxu0 0.0
        %1273 = vmatprep.subr.mxu0 0.0
        %1274 = vmatpush1.msra.mxu0 0.0
        %1275 = vmatprep.subr.mxu0 0.0
        %1276 = vmatpush1.msra.mxu0 0.0
        %1277 = vmatprep.subr.mxu0 0.0
        %1278 = vmatpush1.msra.mxu0 0.0
        %1279 = vmatprep.subr.mxu0 0.0
        %1280 = vmatpush1.msra.mxu0 0.0
        %1281 = vmatprep.subr.mxu0 0.0
        %1282 = vmatpush1.msra.mxu0 0.0
        %1283 = vmatprep.subr.mxu0 0.0
        %1284 = vmatpush1.msra.mxu0 0.0
        %1285 = vmatprep.subr.mxu0 0.0
        %1286 = vmatpush1.msra.mxu0 0.0
        %1287 = vmatprep.subr.mxu0 0.0
        %1288 = vmatpush1.msra.mxu0 0.0
        %1289 = vmatprep.subr.mxu0 0.0
        %1290 = vmatpush1.msra.mxu0 0.0
        %1291 = vmatprep.mubr.f32.mxu0 0.0
        %1292 = vmatmul.mubr.f32.gmra.mrb[0].mxu0 %v1225
        %v1293 = vpop.f32.mrb[0].mxu0
        %v1294 = vadd.f32 0.0, %v1293
        %v1295 = vpop.f32.mrb[0].mxu0
        %1296 = vdwg.mxu0
        %v1298 = vsel %vm1179, %v1221, 0
        %1300 = vmatprep.subr.mxu0 0.0
        %1301 = vmatpush1.msra.mxu0 %v874
        %1302 = vmatprep.subr.mxu0 0.0
        %1303 = vmatpush1.msra.mxu0 0.0
        %1304 = vmatprep.subr.mxu0 0.0
        %1305 = vmatpush1.msra.mxu0 0.0
        %1306 = vmatprep.subr.mxu0 0.0
        %1307 = vmatpush1.msra.mxu0 0.0
        %1308 = vmatprep.subr.mxu0 0.0
        %1309 = vmatpush1.msra.mxu0 0.0
        %1310 = vmatprep.subr.mxu0 0.0
        %1311 = vmatpush1.msra.mxu0 0.0
        %1312 = vmatprep.subr.mxu0 0.0
        %1313 = vmatpush1.msra.mxu0 0.0
        %1314 = vmatprep.subr.mxu0 0.0
        %1315 = vmatpush1.msra.mxu0 0.0
        %1316 = vmatprep.subr.mxu0 0.0
        %1317 = vmatpush1.msra.mxu0 0.0
        %1318 = vmatprep.subr.mxu0 0.0
        %1319 = vmatpush1.msra.mxu0 0.0
        %1320 = vmatprep.subr.mxu0 0.0
        %1321 = vmatpush1.msra.mxu0 0.0
        %1322 = vmatprep.subr.mxu0 0.0
        %1323 = vmatpush1.msra.mxu0 0.0
        %1324 = vmatprep.subr.mxu0 0.0
        %1325 = vmatpush1.msra.mxu0 0.0
        %1326 = vmatprep.subr.mxu0 0.0
        %1327 = vmatpush1.msra.mxu0 0.0
        %1328 = vmatprep.subr.mxu0 0.0
        %1329 = vmatpush1.msra.mxu0 0.0
        %1330 = vmatprep.subr.mxu0 0.0
        %1331 = vmatpush1.msra.mxu0 0.0
        %1332 = vmatprep.subr.mxu0 0.0
        %1333 = vmatpush1.msra.mxu0 0.0
        %1334 = vmatprep.subr.mxu0 0.0
        %1335 = vmatpush1.msra.mxu0 0.0
        %1336 = vmatprep.subr.mxu0 0.0
        %1337 = vmatpush1.msra.mxu0 0.0
        %1338 = vmatprep.subr.mxu0 0.0
        %1339 = vmatpush1.msra.mxu0 0.0
        %1340 = vmatprep.subr.mxu0 0.0
        %1341 = vmatpush1.msra.mxu0 0.0
        %1342 = vmatprep.subr.mxu0 0.0
        %1343 = vmatpush1.msra.mxu0 0.0
        %1344 = vmatprep.subr.mxu0 0.0
        %1345 = vmatpush1.msra.mxu0 0.0
        %1346 = vmatprep.subr.mxu0 0.0
        %1347 = vmatpush1.msra.mxu0 0.0
        %1348 = vmatprep.subr.mxu0 0.0
        %1349 = vmatpush1.msra.mxu0 0.0
        %1350 = vmatprep.subr.mxu0 0.0
        %1351 = vmatpush1.msra.mxu0 0.0
        %1352 = vmatprep.subr.mxu0 0.0
        %1353 = vmatpush1.msra.mxu0 0.0
        %1354 = vmatprep.subr.mxu0 0.0
        %1355 = vmatpush1.msra.mxu0 0.0
        %1356 = vmatprep.subr.mxu0 0.0
        %1357 = vmatpush1.msra.mxu0 0.0
        %1358 = vmatprep.subr.mxu0 0.0
        %1359 = vmatpush1.msra.mxu0 0.0
        %1360 = vmatprep.subr.mxu0 0.0
        %1361 = vmatpush1.msra.mxu0 0.0
        %1362 = vmatprep.subr.mxu0 0.0
        %1363 = vmatpush1.msra.mxu0 0.0
        %1364 = vmatprep.mubr.f32.mxu0 0.0
        %1365 = vmatmul.mubr.f32.gmra.mrb[0].mxu0 %v1298
        %v1366 = vpop.f32.mrb[0].mxu0
        %v1367 = vadd.f32 0.0, %v1366
        %v1368 = vpop.f32.mrb[0].mxu0
        %1369 = vdwg.mxu0
        %v1371 = vsel %vm1179, %v1222, 0
        %1373 = vmatprep.subr.mxu0 0.0
        %1374 = vmatpush1.msra.mxu0 %v877
        %1375 = vmatprep.subr.mxu0 0.0
        %1376 = vmatpush1.msra.mxu0 0.0
        %1377 = vmatprep.subr.mxu0 0.0
        %1378 = vmatpush1.msra.mxu0 0.0
        %1379 = vmatprep.subr.mxu0 0.0
        %1380 = vmatpush1.msra.mxu0 0.0
        %1381 = vmatprep.subr.mxu0 0.0
        %1382 = vmatpush1.msra.mxu0 0.0
        %1383 = vmatprep.subr.mxu0 0.0
        %1384 = vmatpush1.msra.mxu0 0.0
        %1385 = vmatprep.subr.mxu0 0.0
        %1386 = vmatpush1.msra.mxu0 0.0
        %1387 = vmatprep.subr.mxu0 0.0
        %1388 = vmatpush1.msra.mxu0 0.0
        %1389 = vmatprep.subr.mxu0 0.0
        %1390 = vmatpush1.msra.mxu0 0.0
        %1391 = vmatprep.subr.mxu0 0.0
        %1392 = vmatpush1.msra.mxu0 0.0
        %1393 = vmatprep.subr.mxu0 0.0
        %1394 = vmatpush1.msra.mxu0 0.0
        %1395 = vmatprep.subr.mxu0 0.0
        %1396 = vmatpush1.msra.mxu0 0.0
        %1397 = vmatprep.subr.mxu0 0.0
        %1398 = vmatpush1.msra.mxu0 0.0
        %1399 = vmatprep.subr.mxu0 0.0
        %1400 = vmatpush1.msra.mxu0 0.0
        %1401 = vmatprep.subr.mxu0 0.0
        %1402 = vmatpush1.msra.mxu0 0.0
        %1403 = vmatprep.subr.mxu0 0.0
        %1404 = vmatpush1.msra.mxu0 0.0
        %1405 = vmatprep.subr.mxu0 0.0
        %1406 = vmatpush1.msra.mxu0 0.0
        %1407 = vmatprep.subr.mxu0 0.0
        %1408 = vmatpush1.msra.mxu0 0.0
        %1409 = vmatprep.subr.mxu0 0.0
        %1410 = vmatpush1.msra.mxu0 0.0
        %1411 = vmatprep.subr.mxu0 0.0
        %1412 = vmatpush1.msra.mxu0 0.0
        %1413 = vmatprep.subr.mxu0 0.0
        %1414 = vmatpush1.msra.mxu0 0.0
        %1415 = vmatprep.subr.mxu0 0.0
        %1416 = vmatpush1.msra.mxu0 0.0
        %1417 = vmatprep.subr.mxu0 0.0
        %1418 = vmatpush1.msra.mxu0 0.0
        %1419 = vmatprep.subr.mxu0 0.0
        %1420 = vmatpush1.msra.mxu0 0.0
        %1421 = vmatprep.subr.mxu0 0.0
        %1422 = vmatpush1.msra.mxu0 0.0
        %1423 = vmatprep.subr.mxu0 0.0
        %1424 = vmatpush1.msra.mxu0 0.0
        %1425 = vmatprep.subr.mxu0 0.0
        %1426 = vmatpush1.msra.mxu0 0.0
        %1427 = vmatprep.subr.mxu0 0.0
        %1428 = vmatpush1.msra.mxu0 0.0
        %1429 = vmatprep.subr.mxu0 0.0
        %1430 = vmatpush1.msra.mxu0 0.0
        %1431 = vmatprep.subr.mxu0 0.0
        %1432 = vmatpush1.msra.mxu0 0.0
        %1433 = vmatprep.subr.mxu0 0.0
        %1434 = vmatpush1.msra.mxu0 0.0
        %1435 = vmatprep.subr.mxu0 0.0
        %1436 = vmatpush1.msra.mxu0 0.0
        %1437 = vmatprep.mubr.f32.mxu0 0.0
        %1438 = vmatmul.mubr.f32.gmra.mrb[0].mxu0 %v1371
        %v1439 = vpop.f32.mrb[0].mxu0
        %v1440 = vadd.f32 0.0, %v1439
        %v1441 = vpop.f32.mrb[0].mxu0
        %1442 = vdwg.mxu0
        %v1444 = vsel %vm1179, %v1223, 0
        %1446 = vmatprep.subr.mxu0 0.0
        %1447 = vmatpush1.msra.mxu0 %v880
        %1448 = vmatprep.subr.mxu0 0.0
        %1449 = vmatpush1.msra.mxu0 0.0
        %1450 = vmatprep.subr.mxu0 0.0
        %1451 = vmatpush1.msra.mxu0 0.0
        %1452 = vmatprep.subr.mxu0 0.0
        %1453 = vmatpush1.msra.mxu0 0.0
        %1454 = vmatprep.subr.mxu0 0.0
        %1455 = vmatpush1.msra.mxu0 0.0
        %1456 = vmatprep.subr.mxu0 0.0
        %1457 = vmatpush1.msra.mxu0 0.0
        %1458 = vmatprep.subr.mxu0 0.0
        %1459 = vmatpush1.msra.mxu0 0.0
        %1460 = vmatprep.subr.mxu0 0.0
        %1461 = vmatpush1.msra.mxu0 0.0
        %1462 = vmatprep.subr.mxu0 0.0
        %1463 = vmatpush1.msra.mxu0 0.0
        %1464 = vmatprep.subr.mxu0 0.0
        %1465 = vmatpush1.msra.mxu0 0.0
        %1466 = vmatprep.subr.mxu0 0.0
        %1467 = vmatpush1.msra.mxu0 0.0
        %1468 = vmatprep.subr.mxu0 0.0
        %1469 = vmatpush1.msra.mxu0 0.0
        %1470 = vmatprep.subr.mxu0 0.0
        %1471 = vmatpush1.msra.mxu0 0.0
        %1472 = vmatprep.subr.mxu0 0.0
        %1473 = vmatpush1.msra.mxu0 0.0
        %1474 = vmatprep.subr.mxu0 0.0
        %1475 = vmatpush1.msra.mxu0 0.0
        %1476 = vmatprep.subr.mxu0 0.0
        %1477 = vmatpush1.msra.mxu0 0.0
        %1478 = vmatprep.subr.mxu0 0.0
        %1479 = vmatpush1.msra.mxu0 0.0
        %1480 = vmatprep.subr.mxu0 0.0
        %1481 = vmatpush1.msra.mxu0 0.0
        %1482 = vmatprep.subr.mxu0 0.0
        %1483 = vmatpush1.msra.mxu0 0.0
        %1484 = vmatprep.subr.mxu0 0.0
        %1485 = vmatpush1.msra.mxu0 0.0
        %1486 = vmatprep.subr.mxu0 0.0
        %1487 = vmatpush1.msra.mxu0 0.0
        %1488 = vmatprep.subr.mxu0 0.0
        %1489 = vmatpush1.msra.mxu0 0.0
        %1490 = vmatprep.subr.mxu0 0.0
        %1491 = vmatpush1.msra.mxu0 0.0
        %1492 = vmatprep.subr.mxu0 0.0
        %1493 = vmatpush1.msra.mxu0 0.0
        %1494 = vmatprep.subr.mxu0 0.0
        %1495 = vmatpush1.msra.mxu0 0.0
        %1496 = vmatprep.subr.mxu0 0.0
        %1497 = vmatpush1.msra.mxu0 0.0
        %1498 = vmatprep.subr.mxu0 0.0
        %1499 = vmatpush1.msra.mxu0 0.0
        %1500 = vmatprep.subr.mxu0 0.0
        %1501 = vmatpush1.msra.mxu0 0.0
        %1502 = vmatprep.subr.mxu0 0.0
        %1503 = vmatpush1.msra.mxu0 0.0
        %1504 = vmatprep.subr.mxu0 0.0
        %1505 = vmatpush1.msra.mxu0 0.0
        %1506 = vmatprep.subr.mxu0 0.0
        %1507 = vmatpush1.msra.mxu0 0.0
        %1508 = vmatprep.subr.mxu0 0.0
        %1509 = vmatpush1.msra.mxu0 0.0
        %1510 = vmatprep.mubr.f32.mxu0 0.0
        %1511 = vmatmul.mubr.f32.gmra.mrb[0].mxu0 %v1444
        %v1512 = vpop.f32.mrb[0].mxu0
        %v1513 = vadd.f32 0.0, %v1512
        %v1514 = vpop.f32.mrb[0].mxu0
        %1515 = vdwg.mxu0
        %1517 = vrot.lane.b32.xlu0 %v1367, 32
        %v1518 = vpop.permute.xlu0 %1517
        %1521 = vrot.lane.b32.xlu0 %v1440, 64
        %v1522 = vpop.permute.xlu0 %1521
        %1525 = vrot.lane.b32.xlu0 %v1513, 96
        %v1526 = vpop.permute.xlu0 %1525
        %v1528 = vsel %vm882, %v1294, %v1518
        %vm1529 = vcmask 523264
        %v1530 = vsel %vm1529, %v1528, %v1522
        %vm1531 = vcmask 785408
        %v1532 = vsel %vm1531, %v1530, %v1526
        %v1533 = vld [vmem:[#allocation7] sm:$0x1]
        %v1534 = vld [vmem:[#allocation8] sm:$0x1]
        %1535 = vadd.xlane.f32.xlu0 %v1532
        %v1536 = vpop.xlane.xlu0 %1535
        %v1537 = vrcp.pop 128.0
        %v1538 = vmul.f32 %v1536, %v1537
        %v1539 = vmul.f32 %v1532, %v1532
        %1540 = vadd.xlane.f32.xlu0 %v1539
        %v1541 = vpop.xlane.xlu0 %1540
        %v1542 = vmul.f32 %v1541, %v1537
        %v1543 = vmul.f32 %v1538, %v1538
        %v1544 = vsub.f32 %v1542, %v1543
        %v1545 = vadd.f32 %v1544, 1e-05
        %v1546 = vrsqrt.pop %v1545
        %v1547 = vsub.f32 %v1532, %v1538
        %v1548 = vmul.f32 %v1547, %v1546
        %v1550 = vlaneseq
        %v1551 = vshrl.u32 %v1550, 7
        %v1552 = vsub.s32 0, %v1551
        %v1553 = vrot.slane %v1533, %v1552
        %v1555 = vmul.f32 %v1548, %v1553
        %v1557 = vlaneseq
        %v1558 = vshrl.u32 %v1557, 7
        %v1559 = vsub.s32 0, %v1558
        %v1560 = vrot.slane %v1534, %v1559
        %v1562 = vadd.f32 %v1555, %v1560
        %v1563 = vadd.f32 %v619, %v1562
        %v1564 = vld [vmem:[%s5] sm:$0xff]
        %v1565 = vld [vmem:[%s5 + $0x8] sm:$0xff]
        %v1566 = vld [vmem:[%s5 + $0x10] sm:$0xff]
        %v1567 = vld [vmem:[%s5 + $0x18] sm:$0xff]
        %v1568 = vld [vmem:[%s5 + $0x20] sm:$0xff]
        %v1569 = vld [vmem:[%s5 + $0x28] sm:$0xff]
        %v1570 = vld [vmem:[%s5 + $0x30] sm:$0xff]
        %v1571 = vld [vmem:[%s5 + $0x38] sm:$0xff]
        %v1572 = vld [vmem:[%s5 + $0x40] sm:$0xff]
        %v1573 = vld [vmem:[%s5 + $0x48] sm:$0xff]
        %v1574 = vld [vmem:[%s5 + $0x50] sm:$0xff]
        %v1575 = vld [vmem:[%s5 + $0x58] sm:$0xff]
        %v1576 = vld [vmem:[%s5 + $0x60] sm:$0xff]
        %v1577 = vld [vmem:[%s5 + $0x68] sm:$0xff]
        %v1578 = vld [vmem:[%s5 + $0x70] sm:$0xff]
        %v1579 = vld [vmem:[%s5 + $0x78] sm:$0xff]
        %v1580 = vunpack.c.l.bf16 %v1564
        %v1581 = vunpack.c.h.bf16 %v1564
        %v1582 = vunpack.c.l.bf16 %v1565
        %v1583 = vunpack.c.h.bf16 %v1565
        %v1584 = vunpack.c.l.bf16 %v1566
        %v1585 = vunpack.c.h.bf16 %v1566
        %v1586 = vunpack.c.l.bf16 %v1567
        %v1587 = vunpack.c.h.bf16 %v1567
        %v1588 = vunpack.c.l.bf16 %v1568
        %v1589 = vunpack.c.h.bf16 %v1568
        %v1590 = vunpack.c.l.bf16 %v1569
        %v1591 = vunpack.c.h.bf16 %v1569
        %v1592 = vunpack.c.l.bf16 %v1570
        %v1593 = vunpack.c.h.bf16 %v1570
        %v1594 = vunpack.c.l.bf16 %v1571
        %v1595 = vunpack.c.h.bf16 %v1571
        %v1596 = vunpack.c.l.bf16 %v1572
        %v1597 = vunpack.c.h.bf16 %v1572
        %v1598 = vunpack.c.l.bf16 %v1573
        %v1599 = vunpack.c.h.bf16 %v1573
        %v1600 = vunpack.c.l.bf16 %v1574
        %v1601 = vunpack.c.h.bf16 %v1574
        %v1602 = vunpack.c.l.bf16 %v1575
        %v1603 = vunpack.c.h.bf16 %v1575
        %v1604 = vunpack.c.l.bf16 %v1576
        %v1605 = vunpack.c.h.bf16 %v1576
        %v1606 = vunpack.c.l.bf16 %v1577
        %v1607 = vunpack.c.h.bf16 %v1577
        %v1608 = vunpack.c.l.bf16 %v1578
        %v1609 = vunpack.c.h.bf16 %v1578
        %v1610 = vunpack.c.l.bf16 %v1579
        %v1611 = vunpack.c.h.bf16 %v1579
        %v1612 = vld [vmem:[#allocation10] sm:$0x3]
        %v1614 = vlaneseq
        %v1615 = vshrl.u32 %v1614, 7
        %v1616 = vsub.s32 0, %v1615
        %v1617 = vrot.slane %v1612, %v1616
        %v1618 = vlaneseq
        %v1619 = vshrl.u32 %v1618, 7
        %v1620 = vsub.s32 1, %v1619
        %v1621 = vrot.slane %v1612, %v1620
        %1624 = vmatprep.subr.mxu0 %v1581
        %1625 = vmatpush1.msra.mxu0 %v1580
        %1626 = vmatprep.subr.mxu0 %v1583
        %1627 = vmatpush1.msra.mxu0 %v1582
        %1628 = vmatprep.subr.mxu0 %v1585
        %1629 = vmatpush1.msra.mxu0 %v1584
        %1630 = vmatprep.subr.mxu0 %v1587
        %1631 = vmatpush1.msra.mxu0 %v1586
        %1632 = vmatprep.subr.mxu0 %v1589
        %1633 = vmatpush1.msra.mxu0 %v1588
        %1634 = vmatprep.subr.mxu0 %v1591
        %1635 = vmatpush1.msra.mxu0 %v1590
        %1636 = vmatprep.subr.mxu0 %v1593
        %1637 = vmatpush1.msra.mxu0 %v1592
        %1638 = vmatprep.subr.mxu0 %v1595
        %1639 = vmatpush1.msra.mxu0 %v1594
        %1640 = vmatprep.subr.mxu0 %v1597
        %1641 = vmatpush1.msra.mxu0 %v1596
        %1642 = vmatprep.subr.mxu0 %v1599
        %1643 = vmatpush1.msra.mxu0 %v1598
        %1644 = vmatprep.subr.mxu0 %v1601
        %1645 = vmatpush1.msra.mxu0 %v1600
        %1646 = vmatprep.subr.mxu0 %v1603
        %1647 = vmatpush1.msra.mxu0 %v1602
        %1648 = vmatprep.subr.mxu0 %v1605
        %1649 = vmatpush1.msra.mxu0 %v1604
        %1650 = vmatprep.subr.mxu0 %v1607
        %1651 = vmatpush1.msra.mxu0 %v1606
        %1652 = vmatprep.subr.mxu0 %v1609
        %1653 = vmatpush1.msra.mxu0 %v1608
        %1654 = vmatprep.subr.mxu0 %v1611
        %1655 = vmatpush1.msra.mxu0 %v1610
        %1656 = vmatprep.subr.mxu0 0.0
        %1657 = vmatpush1.msra.mxu0 0.0
        %1658 = vmatprep.subr.mxu0 0.0
        %1659 = vmatpush1.msra.mxu0 0.0
        %1660 = vmatprep.subr.mxu0 0.0
        %1661 = vmatpush1.msra.mxu0 0.0
        %1662 = vmatprep.subr.mxu0 0.0
        %1663 = vmatpush1.msra.mxu0 0.0
        %1664 = vmatprep.subr.mxu0 0.0
        %1665 = vmatpush1.msra.mxu0 0.0
        %1666 = vmatprep.subr.mxu0 0.0
        %1667 = vmatpush1.msra.mxu0 0.0
        %1668 = vmatprep.subr.mxu0 0.0
        %1669 = vmatpush1.msra.mxu0 0.0
        %1670 = vmatprep.subr.mxu0 0.0
        %1671 = vmatpush1.msra.mxu0 0.0
        %1672 = vmatprep.subr.mxu0 0.0
        %1673 = vmatpush1.msra.mxu0 0.0
        %1674 = vmatprep.subr.mxu0 0.0
        %1675 = vmatpush1.msra.mxu0 0.0
        %1676 = vmatprep.subr.mxu0 0.0
        %1677 = vmatpush1.msra.mxu0 0.0
        %1678 = vmatprep.subr.mxu0 0.0
        %1679 = vmatpush1.msra.mxu0 0.0
        %1680 = vmatprep.subr.mxu0 0.0
        %1681 = vmatpush1.msra.mxu0 0.0
        %1682 = vmatprep.subr.mxu0 0.0
        %1683 = vmatpush1.msra.mxu0 0.0
        %1684 = vmatprep.subr.mxu0 0.0
        %1685 = vmatpush1.msra.mxu0 0.0
        %1686 = vmatprep.subr.mxu0 0.0
        %1687 = vmatpush1.msra.mxu0 0.0
        %1688 = vmatprep.mubr.f32.mxu0 0.0
        %1689 = vmatmul.mubr.f32.gmra.mrb[0].mxu0 %v1563
        %v1690 = vpop.f32.mrb[0].mxu0
        %v1691 = vadd.f32 %v1617, %v1690
        %v1692 = vpop.f32.mrb[0].mxu0
        %v1693 = vadd.f32 %v1621, %v1692
        %1694 = vdwg.mxu0
        %v1695 = vmul.f32 %v1691, 0.5
        %v1696 = vmul.f32 %v1693, 0.5
        %v1697 = vmul.f32 %v1691, 0.70710677
        %v1698 = vmul.f32 %v1693, 0.70710677
        %v1699 = vand.u32 2147483647, %v1697
        %v1700 = vand.u32 2147483647, %v1698
        %v1701 = vmul.f32 %v1699, 0.3275911
        %v1702 = vmul.f32 %v1700, 0.3275911
        %v1703 = vadd.f32 %v1701, 1.0
        %v1704 = vadd.f32 %v1702, 1.0
        %v1705 = vrcp.pop %v1703
        %v1706 = vmul.f32 1.0, %v1705
        %v1707 = vrcp.pop %v1704
        %v1708 = vmul.f32 1.0, %v1707
        %v1709 = vmul.f32 %v1706, 1.0614054
        %v1710 = vmul.f32 %v1708, 1.0614054
        %v1711 = vadd.f32 %v1709, -1.4531521
        %v1712 = vadd.f32 %v1710, -1.4531521
        %v1713 = vmul.f32 %v1706, %v1711
        %v1714 = vmul.f32 %v1708, %v1712
        %v1715 = vadd.f32 %v1713, 1.4214138
        %v1716 = vadd.f32 %v1714, 1.4214138
        %v1717 = vmul.f32 %v1706, %v1715
        %v1718 = vmul.f32 %v1708, %v1716
        %v1719 = vadd.f32 %v1717, -0.28449672
        %v1720 = vadd.f32 %v1718, -0.28449672
        %v1721 = vmul.f32 %v1706, %v1719
        %v1722 = vmul.f32 %v1708, %v1720
        %v1723 = vadd.f32 %v1721, 0.2548296
        %v1724 = vadd.f32 %v1722, 0.2548296
        %v1725 = vmul.f32 %v1706, %v1723
        %v1726 = vmul.f32 %v1708, %v1724
        %v1727 = vsub.f32 0.0, %v1699
        %v1728 = vsub.f32 0.0, %v1700
        %v1729 = vmul.f32 %v1727, %v1699
        %v1730 = vmul.f32 %v1728, %v1700
        %v1731 = vmul.f32 %v1729, 1.442695
        %v1732 = vpow.pop %v1731
        %v1733 = vmul.f32 %v1730, 1.442695
        %v1734 = vpow.pop %v1733
        %v1735 = vmul.f32 %v1725, %v1732
        %v1736 = vmul.f32 %v1726, %v1734
        %v1737 = vsub.f32 1.0, %v1735
        %v1738 = vsub.f32 1.0, %v1736
        %vm1739 = vcmp.ge.f32.partialorder %v1697, 0.0
        %vm1740 = vcmp.ge.f32.partialorder %v1698, 0.0
        %v1741 = vsub.f32 0.0, %v1737
        %v1742 = vsub.f32 0.0, %v1738
        %v1743 = vsel %vm1739, %v1737, %v1741
        %v1744 = vsel %vm1740, %v1738, %v1742
        %v1745 = vadd.f32 %v1743, 1.0
        %v1746 = vadd.f32 %v1744, 1.0
        %v1747 = vmul.f32 %v1695, %v1745
        %v1748 = vmul.f32 %v1696, %v1746
        %v1749 = vld [vmem:[#allocation11] sm:$0xf]
        %v1750 = vld [vmem:[#allocation11 + $0x4] sm:$0xf]
        %v1751 = vld [vmem:[#allocation11 + $0x8] sm:$0xf]
        %v1752 = vld [vmem:[#allocation11 + $0xc] sm:$0xf]
        %v1753 = vld [vmem:[#allocation11 + $0x10] sm:$0xf]
        %v1754 = vld [vmem:[#allocation11 + $0x14] sm:$0xf]
        %v1755 = vld [vmem:[#allocation11 + $0x18] sm:$0xf]
        %v1756 = vld [vmem:[#allocation11 + $0x1c] sm:$0xf]
        %v1757 = vld [vmem:[#allocation11 + $0x20] sm:$0xf]
        %v1758 = vld [vmem:[#allocation11 + $0x24] sm:$0xf]
        %v1759 = vld [vmem:[#allocation11 + $0x28] sm:$0xf]
        %v1760 = vld [vmem:[#allocation11 + $0x2c] sm:$0xf]
        %v1761 = vld [vmem:[#allocation11 + $0x30] sm:$0xf]
        %v1762 = vld [vmem:[#allocation11 + $0x34] sm:$0xf]
        %v1763 = vld [vmem:[#allocation11 + $0x38] sm:$0xf]
        %v1764 = vld [vmem:[#allocation11 + $0x3c] sm:$0xf]
        %v1765 = vld [vmem:[#allocation11 + $0x40] sm:$0xf]
        %v1766 = vld [vmem:[#allocation11 + $0x44] sm:$0xf]
        %v1767 = vld [vmem:[#allocation11 + $0x48] sm:$0xf]
        %v1768 = vld [vmem:[#allocation11 + $0x4c] sm:$0xf]
        %v1769 = vld [vmem:[#allocation11 + $0x50] sm:$0xf]
        %v1770 = vld [vmem:[#allocation11 + $0x54] sm:$0xf]
        %v1771 = vld [vmem:[#allocation11 + $0x58] sm:$0xf]
        %v1772 = vld [vmem:[#allocation11 + $0x5c] sm:$0xf]
        %v1773 = vld [vmem:[#allocation11 + $0x60] sm:$0xf]
        %v1774 = vld [vmem:[#allocation11 + $0x64] sm:$0xf]
        %v1775 = vld [vmem:[#allocation11 + $0x68] sm:$0xf]
        %v1776 = vld [vmem:[#allocation11 + $0x6c] sm:$0xf]
        %v1777 = vld [vmem:[#allocation11 + $0x70] sm:$0xf]
        %v1778 = vld [vmem:[#allocation11 + $0x74] sm:$0xf]
        %v1779 = vld [vmem:[#allocation11 + $0x78] sm:$0xf]
        %v1780 = vld [vmem:[#allocation11 + $0x7c] sm:$0xf]
        %v1781 = vunpack.c.l.bf16 %v1749
        %v1782 = vunpack.c.l.bf16 %v1750
        %v1783 = vunpack.c.l.bf16 %v1751
        %v1784 = vunpack.c.l.bf16 %v1752
        %v1785 = vunpack.c.l.bf16 %v1753
        %v1786 = vunpack.c.l.bf16 %v1754
        %v1787 = vunpack.c.l.bf16 %v1755
        %v1788 = vunpack.c.l.bf16 %v1756
        %v1789 = vunpack.c.l.bf16 %v1757
        %v1790 = vunpack.c.l.bf16 %v1758
        %v1791 = vunpack.c.l.bf16 %v1759
        %v1792 = vunpack.c.l.bf16 %v1760
        %v1793 = vunpack.c.l.bf16 %v1761
        %v1794 = vunpack.c.l.bf16 %v1762
        %v1795 = vunpack.c.l.bf16 %v1763
        %v1796 = vunpack.c.l.bf16 %v1764
        %v1797 = vunpack.c.l.bf16 %v1765
        %v1798 = vunpack.c.l.bf16 %v1766
        %v1799 = vunpack.c.l.bf16 %v1767
        %v1800 = vunpack.c.l.bf16 %v1768
        %v1801 = vunpack.c.l.bf16 %v1769
        %v1802 = vunpack.c.l.bf16 %v1770
        %v1803 = vunpack.c.l.bf16 %v1771
        %v1804 = vunpack.c.l.bf16 %v1772
        %v1805 = vunpack.c.l.bf16 %v1773
        %v1806 = vunpack.c.l.bf16 %v1774
        %v1807 = vunpack.c.l.bf16 %v1775
        %v1808 = vunpack.c.l.bf16 %v1776
        %v1809 = vunpack.c.l.bf16 %v1777
        %v1810 = vunpack.c.l.bf16 %v1778
        %v1811 = vunpack.c.l.bf16 %v1779
        %v1812 = vunpack.c.l.bf16 %v1780
        %v1813 = vld [vmem:[#allocation13] sm:$0x1]
        %v1815 = vlaneseq
        %v1816 = vshrl.u32 %v1815, 7
        %v1817 = vsub.s32 0, %v1816
        %v1818 = vrot.slane %v1813, %v1817
        %1820 = vmatprep.subr.mxu0 0.0
        %1821 = vmatpush1.msra.mxu0 %v1781
        %1822 = vmatprep.subr.mxu0 0.0
        %1823 = vmatpush1.msra.mxu0 %v1782
        %1824 = vmatprep.subr.mxu0 0.0
        %1825 = vmatpush1.msra.mxu0 %v1783
        %1826 = vmatprep.subr.mxu0 0.0
        %1827 = vmatpush1.msra.mxu0 %v1784
        %1828 = vmatprep.subr.mxu0 0.0
        %1829 = vmatpush1.msra.mxu0 %v1785
        %1830 = vmatprep.subr.mxu0 0.0
        %1831 = vmatpush1.msra.mxu0 %v1786
        %1832 = vmatprep.subr.mxu0 0.0
        %1833 = vmatpush1.msra.mxu0 %v1787
        %1834 = vmatprep.subr.mxu0 0.0
        %1835 = vmatpush1.msra.mxu0 %v1788
        %1836 = vmatprep.subr.mxu0 0.0
        %1837 = vmatpush1.msra.mxu0 %v1789
        %1838 = vmatprep.subr.mxu0 0.0
        %1839 = vmatpush1.msra.mxu0 %v1790
        %1840 = vmatprep.subr.mxu0 0.0
        %1841 = vmatpush1.msra.mxu0 %v1791
        %1842 = vmatprep.subr.mxu0 0.0
        %1843 = vmatpush1.msra.mxu0 %v1792
        %1844 = vmatprep.subr.mxu0 0.0
        %1845 = vmatpush1.msra.mxu0 %v1793
        %1846 = vmatprep.subr.mxu0 0.0
        %1847 = vmatpush1.msra.mxu0 %v1794
        %1848 = vmatprep.subr.mxu0 0.0
        %1849 = vmatpush1.msra.mxu0 %v1795
        %1850 = vmatprep.subr.mxu0 0.0
        %1851 = vmatpush1.msra.mxu0 %v1796
        %1852 = vmatprep.subr.mxu0 0.0
        %1853 = vmatpush1.msra.mxu0 %v1797
        %1854 = vmatprep.subr.mxu0 0.0
        %1855 = vmatpush1.msra.mxu0 %v1798
        %1856 = vmatprep.subr.mxu0 0.0
        %1857 = vmatpush1.msra.mxu0 %v1799
        %1858 = vmatprep.subr.mxu0 0.0
        %1859 = vmatpush1.msra.mxu0 %v1800
        %1860 = vmatprep.subr.mxu0 0.0
        %1861 = vmatpush1.msra.mxu0 %v1801
        %1862 = vmatprep.subr.mxu0 0.0
        %1863 = vmatpush1.msra.mxu0 %v1802
        %1864 = vmatprep.subr.mxu0 0.0
        %1865 = vmatpush1.msra.mxu0 %v1803
        %1866 = vmatprep.subr.mxu0 0.0
        %1867 = vmatpush1.msra.mxu0 %v1804
        %1868 = vmatprep.subr.mxu0 0.0
        %1869 = vmatpush1.msra.mxu0 %v1805
        %1870 = vmatprep.subr.mxu0 0.0
        %1871 = vmatpush1.msra.mxu0 %v1806
        %1872 = vmatprep.subr.mxu0 0.0
        %1873 = vmatpush1.msra.mxu0 %v1807
        %1874 = vmatprep.subr.mxu0 0.0
        %1875 = vmatpush1.msra.mxu0 %v1808
        %1876 = vmatprep.subr.mxu0 0.0
        %1877 = vmatpush1.msra.mxu0 %v1809
        %1878 = vmatprep.subr.mxu0 0.0
        %1879 = vmatpush1.msra.mxu0 %v1810
        %1880 = vmatprep.subr.mxu0 0.0
        %1881 = vmatpush1.msra.mxu0 %v1811
        %1882 = vmatprep.subr.mxu0 0.0
        %1883 = vmatpush1.msra.mxu0 %v1812
        %1884 = vmatprep.mubr.f32.mxu0 %v1748
        %1885 = vmatmul.mubr.f32.gmra.mrb[0].mxu0 %v1747
        %v1886 = vpop.f32.mrb[0].mxu0
        %v1887 = vadd.f32 %v1818, %v1886
        %v1888 = vpop.f32.mrb[0].mxu0
        %1889 = vdwg.mxu0
        %v1890 = vld [vmem:[#allocation14] sm:$0x1]
        %v1891 = vld [vmem:[#allocation16] sm:$0x1]
        %1892 = vadd.xlane.f32.xlu0 %v1887
        %v1893 = vpop.xlane.xlu0 %1892
        %v1894 = vmul.f32 %v1893, %v1537
        %v1895 = vmul.f32 %v1887, %v1887
        %1896 = vadd.xlane.f32.xlu0 %v1895
        %v1897 = vpop.xlane.xlu0 %1896
        %v1898 = vmul.f32 %v1897, %v1537
        %v1899 = vmul.f32 %v1894, %v1894
        %v1900 = vsub.f32 %v1898, %v1899
        %v1901 = vadd.f32 %v1900, 1e-05
        %v1902 = vrsqrt.pop %v1901
        %v1903 = vsub.f32 %v1887, %v1894
        %v1904 = vmul.f32 %v1903, %v1902
        %v1906 = vlaneseq
        %v1907 = vshrl.u32 %v1906, 7
        %v1908 = vsub.s32 0, %v1907
        %v1909 = vrot.slane %v1890, %v1908
        %v1911 = vmul.f32 %v1904, %v1909
        %v1913 = vlaneseq
        %v1914 = vshrl.u32 %v1913, 7
        %v1915 = vsub.s32 0, %v1914
        %v1916 = vrot.slane %v1891, %v1915
        %v1918 = vadd.f32 %v1911, %v1916
        %v1919 = vadd.f32 %v1563, %v1918
        %s1920 = scalar_lea.vmem [#allocation2], 192
        %v1921 = vld [vmem:[%s1920] sm:$0xff]
        %v1922 = vld [vmem:[%s1920 + $0x8] sm:$0xf]
        %v1923 = vld [vmem:[%s1920 + $0xc] sm:$0xff]
        %v1924 = vld [vmem:[%s1920 + $0x14] sm:$0xf]
        %v1925 = vld [vmem:[%s1920 + $0x18] sm:$0xff]
        %v1926 = vld [vmem:[%s1920 + $0x20] sm:$0xf]
        %v1927 = vld [vmem:[%s1920 + $0x24] sm:$0xff]
        %v1928 = vld [vmem:[%s1920 + $0x2c] sm:$0xf]
        %v1929 = vld [vmem:[%s1920 + $0x30] sm:$0xff]
        %v1930 = vld [vmem:[%s1920 + $0x38] sm:$0xf]
        %v1931 = vld [vmem:[%s1920 + $0x3c] sm:$0xff]
        %v1932 = vld [vmem:[%s1920 + $0x44] sm:$0xf]
        %v1933 = vld [vmem:[%s1920 + $0x48] sm:$0xff]
        %v1934 = vld [vmem:[%s1920 + $0x50] sm:$0xf]
        %v1935 = vld [vmem:[%s1920 + $0x54] sm:$0xff]
        %v1936 = vld [vmem:[%s1920 + $0x5c] sm:$0xf]
        %v1937 = vld [vmem:[%s1920 + $0x60] sm:$0xff]
        %v1938 = vld [vmem:[%s1920 + $0x68] sm:$0xf]
        %v1939 = vld [vmem:[%s1920 + $0x6c] sm:$0xff]
        %v1940 = vld [vmem:[%s1920 + $0x74] sm:$0xf]
        %v1941 = vld [vmem:[%s1920 + $0x78] sm:$0xff]
        %v1942 = vld [vmem:[%s1920 + $0x80] sm:$0xf]
        %v1943 = vld [vmem:[%s1920 + $0x84] sm:$0xff]
        %v1944 = vld [vmem:[%s1920 + $0x8c] sm:$0xf]
        %v1945 = vld [vmem:[%s1920 + $0x90] sm:$0xff]
        %v1946 = vld [vmem:[%s1920 + $0x98] sm:$0xf]
        %v1947 = vld [vmem:[%s1920 + $0x9c] sm:$0xff]
        %v1948 = vld [vmem:[%s1920 + $0xa4] sm:$0xf]
        %v1949 = vld [vmem:[%s1920 + $0xa8] sm:$0xff]
        %v1950 = vld [vmem:[%s1920 + $0xb0] sm:$0xf]
        %v1951 = vld [vmem:[%s1920 + $0xb4] sm:$0xff]
        %v1952 = vld [vmem:[%s1920 + $0xbc] sm:$0xf]
        %v1953 = vunpack.c.l.bf16 %v1921
        %v1954 = vunpack.c.h.bf16 %v1921
        %v1955 = vunpack.c.l.bf16 %v1922
        %v1956 = vunpack.c.l.bf16 %v1923
        %v1957 = vunpack.c.h.bf16 %v1923
        %v1958 = vunpack.c.l.bf16 %v1924
        %v1959 = vunpack.c.l.bf16 %v1925
        %v1960 = vunpack.c.h.bf16 %v1925
        %v1961 = vunpack.c.l.bf16 %v1926
        %v1962 = vunpack.c.l.bf16 %v1927
        %v1963 = vunpack.c.h.bf16 %v1927
        %v1964 = vunpack.c.l.bf16 %v1928
        %v1965 = vunpack.c.l.bf16 %v1929
        %v1966 = vunpack.c.h.bf16 %v1929
        %v1967 = vunpack.c.l.bf16 %v1930
        %v1968 = vunpack.c.l.bf16 %v1931
        %v1969 = vunpack.c.h.bf16 %v1931
        %v1970 = vunpack.c.l.bf16 %v1932
        %v1971 = vunpack.c.l.bf16 %v1933
        %v1972 = vunpack.c.h.bf16 %v1933
        %v1973 = vunpack.c.l.bf16 %v1934
        %v1974 = vunpack.c.l.bf16 %v1935
        %v1975 = vunpack.c.h.bf16 %v1935
        %v1976 = vunpack.c.l.bf16 %v1936
        %v1977 = vunpack.c.l.bf16 %v1937
        %v1978 = vunpack.c.h.bf16 %v1937
        %v1979 = vunpack.c.l.bf16 %v1938
        %v1980 = vunpack.c.l.bf16 %v1939
        %v1981 = vunpack.c.h.bf16 %v1939
        %v1982 = vunpack.c.l.bf16 %v1940
        %v1983 = vunpack.c.l.bf16 %v1941
        %v1984 = vunpack.c.h.bf16 %v1941
        %v1985 = vunpack.c.l.bf16 %v1942
        %v1986 = vunpack.c.l.bf16 %v1943
        %v1987 = vunpack.c.h.bf16 %v1943
        %v1988 = vunpack.c.l.bf16 %v1944
        %v1989 = vunpack.c.l.bf16 %v1945
        %v1990 = vunpack.c.h.bf16 %v1945
        %v1991 = vunpack.c.l.bf16 %v1946
        %v1992 = vunpack.c.l.bf16 %v1947
        %v1993 = vunpack.c.h.bf16 %v1947
        %v1994 = vunpack.c.l.bf16 %v1948
        %v1995 = vunpack.c.l.bf16 %v1949
        %v1996 = vunpack.c.h.bf16 %v1949
        %v1997 = vunpack.c.l.bf16 %v1950
        %v1998 = vunpack.c.l.bf16 %v1951
        %v1999 = vunpack.c.h.bf16 %v1951
        %v2000 = vunpack.c.l.bf16 %v1952
        %s2001 = scalar_lea.vmem [#allocation5], 3
        %v2002 = vld [vmem:[%s2001] sm:$0x7]
        %v2004 = vlaneseq
        %v2005 = vshrl.u32 %v2004, 7
        %v2006 = vsub.s32 0, %v2005
        %v2007 = vrot.slane %v2002, %v2006
        %v2008 = vlaneseq
        %v2009 = vshrl.u32 %v2008, 7
        %v2010 = vsub.s32 1, %v2009
        %v2011 = vrot.slane %v2002, %v2010
        %v2012 = vlaneseq
        %v2013 = vshrl.u32 %v2012, 7
        %v2014 = vsub.s32 2, %v2013
        %v2015 = vrot.slane %v2002, %v2014
        %2019 = vmatprep.subr.mxu0 %v1954
        %2020 = vmatpush1.msra.mxu0 %v1953
        %2021 = vmatprep.subr.mxu0 %v1957
        %2022 = vmatpush1.msra.mxu0 %v1956
        %2023 = vmatprep.subr.mxu0 %v1960
        %2024 = vmatpush1.msra.mxu0 %v1959
        %2025 = vmatprep.subr.mxu0 %v1963
        %2026 = vmatpush1.msra.mxu0 %v1962
        %2027 = vmatprep.subr.mxu0 %v1966
        %2028 = vmatpush1.msra.mxu0 %v1965
        %2029 = vmatprep.subr.mxu0 %v1969
        %2030 = vmatpush1.msra.mxu0 %v1968
        %2031 = vmatprep.subr.mxu0 %v1972
        %2032 = vmatpush1.msra.mxu0 %v1971
        %2033 = vmatprep.subr.mxu0 %v1975
        %2034 = vmatpush1.msra.mxu0 %v1974
        %2035 = vmatprep.subr.mxu0 %v1978
        %2036 = vmatpush1.msra.mxu0 %v1977
        %2037 = vmatprep.subr.mxu0 %v1981
        %2038 = vmatpush1.msra.mxu0 %v1980
        %2039 = vmatprep.subr.mxu0 %v1984
        %2040 = vmatpush1.msra.mxu0 %v1983
        %2041 = vmatprep.subr.mxu0 %v1987
        %2042 = vmatpush1.msra.mxu0 %v1986
        %2043 = vmatprep.subr.mxu0 %v1990
        %2044 = vmatpush1.msra.mxu0 %v1989
        %2045 = vmatprep.subr.mxu0 %v1993
        %2046 = vmatpush1.msra.mxu0 %v1992
        %2047 = vmatprep.subr.mxu0 %v1996
        %2048 = vmatpush1.msra.mxu0 %v1995
        %2049 = vmatprep.subr.mxu0 %v1999
        %2050 = vmatpush1.msra.mxu0 %v1998
        %2051 = vmatprep.subr.mxu0 0.0
        %2052 = vmatpush1.msra.mxu0 0.0
        %2053 = vmatprep.subr.mxu0 0.0
        %2054 = vmatpush1.msra.mxu0 0.0
        %2055 = vmatprep.subr.mxu0 0.0
        %2056 = vmatpush1.msra.mxu0 0.0
        %2057 = vmatprep.subr.mxu0 0.0
        %2058 = vmatpush1.msra.mxu0 0.0
        %2059 = vmatprep.subr.mxu0 0.0
        %2060 = vmatpush1.msra.mxu0 0.0
        %2061 = vmatprep.subr.mxu0 0.0
        %2062 = vmatpush1.msra.mxu0 0.0
        %2063 = vmatprep.subr.mxu0 0.0
        %2064 = vmatpush1.msra.mxu0 0.0
        %2065 = vmatprep.subr.mxu0 0.0
        %2066 = vmatpush1.msra.mxu0 0.0
        %2067 = vmatprep.subr.mxu0 0.0
        %2068 = vmatpush1.msra.mxu0 0.0
        %2069 = vmatprep.subr.mxu0 0.0
        %2070 = vmatpush1.msra.mxu0 0.0
        %2071 = vmatprep.subr.mxu0 0.0
        %2072 = vmatpush1.msra.mxu0 0.0
        %2073 = vmatprep.subr.mxu0 0.0
        %2074 = vmatpush1.msra.mxu0 0.0
        %2075 = vmatprep.subr.mxu0 0.0
        %2076 = vmatpush1.msra.mxu0 0.0
        %2077 = vmatprep.subr.mxu0 0.0
        %2078 = vmatpush1.msra.mxu0 0.0
        %2079 = vmatprep.subr.mxu0 0.0
        %2080 = vmatpush1.msra.mxu0 0.0
        %2081 = vmatprep.subr.mxu0 0.0
        %2082 = vmatpush1.msra.mxu0 0.0
        %2083 = vmatprep.mubr.f32.mxu0 0.0
        %2084 = vmatmul.mubr.f32.gmra.mrb[0].mxu0 %v1919
        %v2085 = vpop.f32.mrb[0].mxu0
        %v2086 = vadd.f32 %v2007, %v2085
        %v2087 = vpop.f32.mrb[0].mxu0
        %v2088 = vadd.f32 %v2011, %v2087
        %2089 = vdwg.mxu0
        %2090 = vmatprep.subr.mxu0 0.0
        %2091 = vmatpush1.msra.mxu0 %v1955
        %2092 = vmatprep.subr.mxu0 0.0
        %2093 = vmatpush1.msra.mxu0 %v1958
        %2094 = vmatprep.subr.mxu0 0.0
        %2095 = vmatpush1.msra.mxu0 %v1961
        %2096 = vmatprep.subr.mxu0 0.0
        %2097 = vmatpush1.msra.mxu0 %v1964
        %2098 = vmatprep.subr.mxu0 0.0
        %2099 = vmatpush1.msra.mxu0 %v1967
        %2100 = vmatprep.subr.mxu0 0.0
        %2101 = vmatpush1.msra.mxu0 %v1970
        %2102 = vmatprep.subr.mxu0 0.0
        %2103 = vmatpush1.msra.mxu0 %v1973
        %2104 = vmatprep.subr.mxu0 0.0
        %2105 = vmatpush1.msra.mxu0 %v1976
        %2106 = vmatprep.subr.mxu0 0.0
        %2107 = vmatpush1.msra.mxu0 %v1979
        %2108 = vmatprep.subr.mxu0 0.0
        %2109 = vmatpush1.msra.mxu0 %v1982
        %2110 = vmatprep.subr.mxu0 0.0
        %2111 = vmatpush1.msra.mxu0 %v1985
        %2112 = vmatprep.subr.mxu0 0.0
        %2113 = vmatpush1.msra.mxu0 %v1988
        %2114 = vmatprep.subr.mxu0 0.0
        %2115 = vmatpush1.msra.mxu0 %v1991
        %2116 = vmatprep.subr.mxu0 0.0
        %2117 = vmatpush1.msra.mxu0 %v1994
        %2118 = vmatprep.subr.mxu0 0.0
        %2119 = vmatpush1.msra.mxu0 %v1997
        %2120 = vmatprep.subr.mxu0 0.0
        %2121 = vmatpush1.msra.mxu0 %v2000
        %2122 = vmatprep.subr.mxu0 0.0
        %2123 = vmatpush1.msra.mxu0 0.0
        %2124 = vmatprep.subr.mxu0 0.0
        %2125 = vmatpush1.msra.mxu0 0.0
        %2126 = vmatprep.subr.mxu0 0.0
        %2127 = vmatpush1.msra.mxu0 0.0
        %2128 = vmatprep.subr.mxu0 0.0
        %2129 = vmatpush1.msra.mxu0 0.0
        %2130 = vmatprep.subr.mxu0 0.0
        %2131 = vmatpush1.msra.mxu0 0.0
        %2132 = vmatprep.subr.mxu0 0.0
        %2133 = vmatpush1.msra.mxu0 0.0
        %2134 = vmatprep.subr.mxu0 0.0
        %2135 = vmatpush1.msra.mxu0 0.0
        %2136 = vmatprep.subr.mxu0 0.0
        %2137 = vmatpush1.msra.mxu0 0.0
        %2138 = vmatprep.subr.mxu0 0.0
        %2139 = vmatpush1.msra.mxu0 0.0
        %2140 = vmatprep.subr.mxu0 0.0
        %2141 = vmatpush1.msra.mxu0 0.0
        %2142 = vmatprep.subr.mxu0 0.0
        %2143 = vmatpush1.msra.mxu0 0.0
        %2144 = vmatprep.subr.mxu0 0.0
        %2145 = vmatpush1.msra.mxu0 0.0
        %2146 = vmatprep.subr.mxu0 0.0
        %2147 = vmatpush1.msra.mxu0 0.0
        %2148 = vmatprep.subr.mxu0 0.0
        %2149 = vmatpush1.msra.mxu0 0.0
        %2150 = vmatprep.subr.mxu0 0.0
        %2151 = vmatpush1.msra.mxu0 0.0
        %2152 = vmatprep.subr.mxu0 0.0
        %2153 = vmatpush1.msra.mxu0 0.0
        %2154 = vmatprep.mubr.f32.mxu0 0.0
        %2155 = vmatmul.mubr.f32.gmra.mrb[0].mxu0 %v1919
        %v2156 = vpop.f32.mrb[0].mxu0
        %v2157 = vadd.f32 %v2015, %v2156
        %v2158 = vpop.f32.mrb[0].mxu0
        %2159 = vdwg.mxu0
        %2161 = vrot.lane.b32.xlu0 %v2086, 96
        %v2162 = vpop.permute.xlu0 %2161
        %2163 = vrot.lane.b32.xlu0 %v2086, 64
        %v2164 = vpop.permute.xlu0 %2163
        %2165 = vrot.lane.b32.xlu0 %v2086, 32
        %v2166 = vpop.permute.xlu0 %2165
        %2168 = vrot.lane.b32.xlu0 %v2088, 96
        %v2169 = vpop.permute.xlu0 %2168
        %2170 = vrot.lane.b32.xlu0 %v2088, 64
        %v2171 = vpop.permute.xlu0 %2170
        %2172 = vrot.lane.b32.xlu0 %v2088, 32
        %v2173 = vpop.permute.xlu0 %2172
        %2175 = vrot.lane.b32.xlu0 %v2157, 96
        %v2176 = vpop.permute.xlu0 %2175
        %2178 = vrot.lane.b32.xlu0 %v2157, 64
        %v2179 = vpop.permute.xlu0 %2178
        %2181 = vrot.lane.b32.xlu0 %v2157, 32
        %v2182 = vpop.permute.xlu0 %2181
        %v2184 = vsel %vm882, %v2086, 0
        %v2186 = vsel %vm882, %v2088, 0
        %2188 = vmatprep.subr.mxu0 0.0
        %2189 = vmatpush1.xpose.msra.mxu0 %v2186
        %2190 = vmatprep.subr.mxu0 0.0
        %2191 = vmatpush1.xpose.msra.mxu0 0.0
        %2192 = vmatprep.subr.mxu0 0.0
        %2193 = vmatpush1.xpose.msra.mxu0 0.0
        %2194 = vmatprep.subr.mxu0 0.0
        %2195 = vmatpush1.xpose.msra.mxu0 0.0
        %2196 = vmatprep.subr.mxu0 0.0
        %2197 = vmatpush1.xpose.msra.mxu0 0.0
        %2198 = vmatprep.subr.mxu0 0.0
        %2199 = vmatpush1.xpose.msra.mxu0 0.0
        %2200 = vmatprep.subr.mxu0 0.0
        %2201 = vmatpush1.xpose.msra.mxu0 0.0
        %2202 = vmatprep.subr.mxu0 0.0
        %2203 = vmatpush1.xpose.msra.mxu0 0.0
        %2204 = vmatprep.subr.mxu0 0.0
        %2205 = vmatpush1.xpose.msra.mxu0 0.0
        %2206 = vmatprep.subr.mxu0 0.0
        %2207 = vmatpush1.xpose.msra.mxu0 0.0
        %2208 = vmatprep.subr.mxu0 0.0
        %2209 = vmatpush1.xpose.msra.mxu0 0.0
        %2210 = vmatprep.subr.mxu0 0.0
        %2211 = vmatpush1.xpose.msra.mxu0 0.0
        %2212 = vmatprep.subr.mxu0 0.0
        %2213 = vmatpush1.xpose.msra.mxu0 0.0
        %2214 = vmatprep.subr.mxu0 0.0
        %2215 = vmatpush1.xpose.msra.mxu0 0.0
        %2216 = vmatprep.subr.mxu0 0.0
        %2217 = vmatpush1.xpose.msra.mxu0 0.0
        %2218 = vmatprep.subr.mxu0 0.0
        %2219 = vmatpush1.xpose.msra.mxu0 0.0
        %2220 = vmatprep.subr.mxu0 0.0
        %2221 = vmatpush1.xpose.msra.mxu0 0.0
        %2222 = vmatprep.subr.mxu0 0.0
        %2223 = vmatpush1.xpose.msra.mxu0 0.0
        %2224 = vmatprep.subr.mxu0 0.0
        %2225 = vmatpush1.xpose.msra.mxu0 0.0
        %2226 = vmatprep.subr.mxu0 0.0
        %2227 = vmatpush1.xpose.msra.mxu0 0.0
        %2228 = vmatprep.subr.mxu0 0.0
        %2229 = vmatpush1.xpose.msra.mxu0 0.0
        %2230 = vmatprep.subr.mxu0 0.0
        %2231 = vmatpush1.xpose.msra.mxu0 0.0
        %2232 = vmatprep.subr.mxu0 0.0
        %2233 = vmatpush1.xpose.msra.mxu0 0.0
        %2234 = vmatprep.subr.mxu0 0.0
        %2235 = vmatpush1.xpose.msra.mxu0 0.0
        %2236 = vmatprep.subr.mxu0 0.0
        %2237 = vmatpush1.xpose.msra.mxu0 0.0
        %2238 = vmatprep.subr.mxu0 0.0
        %2239 = vmatpush1.xpose.msra.mxu0 0.0
        %2240 = vmatprep.subr.mxu0 0.0
        %2241 = vmatpush1.xpose.msra.mxu0 0.0
        %2242 = vmatprep.subr.mxu0 0.0
        %2243 = vmatpush1.xpose.msra.mxu0 0.0
        %2244 = vmatprep.subr.mxu0 0.0
        %2245 = vmatpush1.xpose.msra.mxu0 0.0
        %2246 = vmatprep.subr.mxu0 0.0
        %2247 = vmatpush1.xpose.msra.mxu0 0.0
        %2248 = vmatprep.subr.mxu0 0.0
        %2249 = vmatpush1.xpose.msra.mxu0 0.0
        %2250 = vmatprep.subr.mxu0 0.0
        %2251 = vmatpush1.xpose.msra.mxu0 0.0
        %2252 = vmatprep.mubr.f32.mxu0 0.0
        %2253 = vmatmul.mubr.f32.gmra.mrb[0].mxu0 %v2184
        %v2254 = vpop.f32.mrb[0].mxu0
        %v2255 = vadd.f32 0.0, %v2254
        %v2256 = vpop.f32.mrb[0].mxu0
        %2257 = vdwg.mxu0
        %v2258 = vsel %vm882, %v2162, 0
        %v2260 = vsel %vm882, %v2169, 0
        %2262 = vmatprep.subr.mxu0 0.0
        %2263 = vmatpush1.xpose.msra.mxu0 %v2260
        %2264 = vmatprep.subr.mxu0 0.0
        %2265 = vmatpush1.xpose.msra.mxu0 0.0
        %2266 = vmatprep.subr.mxu0 0.0
        %2267 = vmatpush1.xpose.msra.mxu0 0.0
        %2268 = vmatprep.subr.mxu0 0.0
        %2269 = vmatpush1.xpose.msra.mxu0 0.0
        %2270 = vmatprep.subr.mxu0 0.0
        %2271 = vmatpush1.xpose.msra.mxu0 0.0
        %2272 = vmatprep.subr.mxu0 0.0
        %2273 = vmatpush1.xpose.msra.mxu0 0.0
        %2274 = vmatprep.subr.mxu0 0.0
        %2275 = vmatpush1.xpose.msra.mxu0 0.0
        %2276 = vmatprep.subr.mxu0 0.0
        %2277 = vmatpush1.xpose.msra.mxu0 0.0
        %2278 = vmatprep.subr.mxu0 0.0
        %2279 = vmatpush1.xpose.msra.mxu0 0.0
        %2280 = vmatprep.subr.mxu0 0.0
        %2281 = vmatpush1.xpose.msra.mxu0 0.0
        %2282 = vmatprep.subr.mxu0 0.0
        %2283 = vmatpush1.xpose.msra.mxu0 0.0
        %2284 = vmatprep.subr.mxu0 0.0
        %2285 = vmatpush1.xpose.msra.mxu0 0.0
        %2286 = vmatprep.subr.mxu0 0.0
        %2287 = vmatpush1.xpose.msra.mxu0 0.0
        %2288 = vmatprep.subr.mxu0 0.0
        %2289 = vmatpush1.xpose.msra.mxu0 0.0
        %2290 = vmatprep.subr.mxu0 0.0
        %2291 = vmatpush1.xpose.msra.mxu0 0.0
        %2292 = vmatprep.subr.mxu0 0.0
        %2293 = vmatpush1.xpose.msra.mxu0 0.0
        %2294 = vmatprep.subr.mxu0 0.0
        %2295 = vmatpush1.xpose.msra.mxu0 0.0
        %2296 = vmatprep.subr.mxu0 0.0
        %2297 = vmatpush1.xpose.msra.mxu0 0.0
        %2298 = vmatprep.subr.mxu0 0.0
        %2299 = vmatpush1.xpose.msra.mxu0 0.0
        %2300 = vmatprep.subr.mxu0 0.0
        %2301 = vmatpush1.xpose.msra.mxu0 0.0
        %2302 = vmatprep.subr.mxu0 0.0
        %2303 = vmatpush1.xpose.msra.mxu0 0.0
        %2304 = vmatprep.subr.mxu0 0.0
        %2305 = vmatpush1.xpose.msra.mxu0 0.0
        %2306 = vmatprep.subr.mxu0 0.0
        %2307 = vmatpush1.xpose.msra.mxu0 0.0
        %2308 = vmatprep.subr.mxu0 0.0
        %2309 = vmatpush1.xpose.msra.mxu0 0.0
        %2310 = vmatprep.subr.mxu0 0.0
        %2311 = vmatpush1.xpose.msra.mxu0 0.0
        %2312 = vmatprep.subr.mxu0 0.0
        %2313 = vmatpush1.xpose.msra.mxu0 0.0
        %2314 = vmatprep.subr.mxu0 0.0
        %2315 = vmatpush1.xpose.msra.mxu0 0.0
        %2316 = vmatprep.subr.mxu0 0.0
        %2317 = vmatpush1.xpose.msra.mxu0 0.0
        %2318 = vmatprep.subr.mxu0 0.0
        %2319 = vmatpush1.xpose.msra.mxu0 0.0
        %2320 = vmatprep.subr.mxu0 0.0
        %2321 = vmatpush1.xpose.msra.mxu0 0.0
        %2322 = vmatprep.subr.mxu0 0.0
        %2323 = vmatpush1.xpose.msra.mxu0 0.0
        %2324 = vmatprep.subr.mxu0 0.0
        %2325 = vmatpush1.xpose.msra.mxu0 0.0
        %2326 = vmatprep.mubr.f32.mxu0 0.0
        %2327 = vmatmul.mubr.f32.gmra.mrb[0].mxu0 %v2258
        %v2328 = vpop.f32.mrb[0].mxu0
        %v2329 = vadd.f32 0.0, %v2328
        %v2330 = vpop.f32.mrb[0].mxu0
        %2331 = vdwg.mxu0
        %v2332 = vsel %vm882, %v2164, 0
        %v2334 = vsel %vm882, %v2171, 0
        %2336 = vmatprep.subr.mxu0 0.0
        %2337 = vmatpush1.xpose.msra.mxu0 %v2334
        %2338 = vmatprep.subr.mxu0 0.0
        %2339 = vmatpush1.xpose.msra.mxu0 0.0
        %2340 = vmatprep.subr.mxu0 0.0
        %2341 = vmatpush1.xpose.msra.mxu0 0.0
        %2342 = vmatprep.subr.mxu0 0.0
        %2343 = vmatpush1.xpose.msra.mxu0 0.0
        %2344 = vmatprep.subr.mxu0 0.0
        %2345 = vmatpush1.xpose.msra.mxu0 0.0
        %2346 = vmatprep.subr.mxu0 0.0
        %2347 = vmatpush1.xpose.msra.mxu0 0.0
        %2348 = vmatprep.subr.mxu0 0.0
        %2349 = vmatpush1.xpose.msra.mxu0 0.0
        %2350 = vmatprep.subr.mxu0 0.0
        %2351 = vmatpush1.xpose.msra.mxu0 0.0
        %2352 = vmatprep.subr.mxu0 0.0
        %2353 = vmatpush1.xpose.msra.mxu0 0.0
        %2354 = vmatprep.subr.mxu0 0.0
        %2355 = vmatpush1.xpose.msra.mxu0 0.0
        %2356 = vmatprep.subr.mxu0 0.0
        %2357 = vmatpush1.xpose.msra.mxu0 0.0
        %2358 = vmatprep.subr.mxu0 0.0
        %2359 = vmatpush1.xpose.msra.mxu0 0.0
        %2360 = vmatprep.subr.mxu0 0.0
        %2361 = vmatpush1.xpose.msra.mxu0 0.0
        %2362 = vmatprep.subr.mxu0 0.0
        %2363 = vmatpush1.xpose.msra.mxu0 0.0
        %2364 = vmatprep.subr.mxu0 0.0
        %2365 = vmatpush1.xpose.msra.mxu0 0.0
        %2366 = vmatprep.subr.mxu0 0.0
        %2367 = vmatpush1.xpose.msra.mxu0 0.0
        %2368 = vmatprep.subr.mxu0 0.0
        %2369 = vmatpush1.xpose.msra.mxu0 0.0
        %2370 = vmatprep.subr.mxu0 0.0
        %2371 = vmatpush1.xpose.msra.mxu0 0.0
        %2372 = vmatprep.subr.mxu0 0.0
        %2373 = vmatpush1.xpose.msra.mxu0 0.0
        %2374 = vmatprep.subr.mxu0 0.0
        %2375 = vmatpush1.xpose.msra.mxu0 0.0
        %2376 = vmatprep.subr.mxu0 0.0
        %2377 = vmatpush1.xpose.msra.mxu0 0.0
        %2378 = vmatprep.subr.mxu0 0.0
        %2379 = vmatpush1.xpose.msra.mxu0 0.0
        %2380 = vmatprep.subr.mxu0 0.0
        %2381 = vmatpush1.xpose.msra.mxu0 0.0
        %2382 = vmatprep.subr.mxu0 0.0
        %2383 = vmatpush1.xpose.msra.mxu0 0.0
        %2384 = vmatprep.subr.mxu0 0.0
        %2385 = vmatpush1.xpose.msra.mxu0 0.0
        %2386 = vmatprep.subr.mxu0 0.0
        %2387 = vmatpush1.xpose.msra.mxu0 0.0
        %2388 = vmatprep.subr.mxu0 0.0
        %2389 = vmatpush1.xpose.msra.mxu0 0.0
        %2390 = vmatprep.subr.mxu0 0.0
        %2391 = vmatpush1.xpose.msra.mxu0 0.0
        %2392 = vmatprep.subr.mxu0 0.0
        %2393 = vmatpush1.xpose.msra.mxu0 0.0
        %2394 = vmatprep.subr.mxu0 0.0
        %2395 = vmatpush1.xpose.msra.mxu0 0.0
        %2396 = vmatprep.subr.mxu0 0.0
        %2397 = vmatpush1.xpose.msra.mxu0 0.0
        %2398 = vmatprep.subr.mxu0 0.0
        %2399 = vmatpush1.xpose.msra.mxu0 0.0
        %2400 = vmatprep.mubr.f32.mxu0 0.0
        %2401 = vmatmul.mubr.f32.gmra.mrb[0].mxu0 %v2332
        %v2402 = vpop.f32.mrb[0].mxu0
        %v2403 = vadd.f32 0.0, %v2402
        %v2404 = vpop.f32.mrb[0].mxu0
        %2405 = vdwg.mxu0
        %v2406 = vsel %vm882, %v2166, 0
        %v2408 = vsel %vm882, %v2173, 0
        %2410 = vmatprep.subr.mxu0 0.0
        %2411 = vmatpush1.xpose.msra.mxu0 %v2408
        %2412 = vmatprep.subr.mxu0 0.0
        %2413 = vmatpush1.xpose.msra.mxu0 0.0
        %2414 = vmatprep.subr.mxu0 0.0
        %2415 = vmatpush1.xpose.msra.mxu0 0.0
        %2416 = vmatprep.subr.mxu0 0.0
        %2417 = vmatpush1.xpose.msra.mxu0 0.0
        %2418 = vmatprep.subr.mxu0 0.0
        %2419 = vmatpush1.xpose.msra.mxu0 0.0
        %2420 = vmatprep.subr.mxu0 0.0
        %2421 = vmatpush1.xpose.msra.mxu0 0.0
        %2422 = vmatprep.subr.mxu0 0.0
        %2423 = vmatpush1.xpose.msra.mxu0 0.0
        %2424 = vmatprep.subr.mxu0 0.0
        %2425 = vmatpush1.xpose.msra.mxu0 0.0
        %2426 = vmatprep.subr.mxu0 0.0
        %2427 = vmatpush1.xpose.msra.mxu0 0.0
        %2428 = vmatprep.subr.mxu0 0.0
        %2429 = vmatpush1.xpose.msra.mxu0 0.0
        %2430 = vmatprep.subr.mxu0 0.0
        %2431 = vmatpush1.xpose.msra.mxu0 0.0
        %2432 = vmatprep.subr.mxu0 0.0
        %2433 = vmatpush1.xpose.msra.mxu0 0.0
        %2434 = vmatprep.subr.mxu0 0.0
        %2435 = vmatpush1.xpose.msra.mxu0 0.0
        %2436 = vmatprep.subr.mxu0 0.0
        %2437 = vmatpush1.xpose.msra.mxu0 0.0
        %2438 = vmatprep.subr.mxu0 0.0
        %2439 = vmatpush1.xpose.msra.mxu0 0.0
        %2440 = vmatprep.subr.mxu0 0.0
        %2441 = vmatpush1.xpose.msra.mxu0 0.0
        %2442 = vmatprep.subr.mxu0 0.0
        %2443 = vmatpush1.xpose.msra.mxu0 0.0
        %2444 = vmatprep.subr.mxu0 0.0
        %2445 = vmatpush1.xpose.msra.mxu0 0.0
        %2446 = vmatprep.subr.mxu0 0.0
        %2447 = vmatpush1.xpose.msra.mxu0 0.0
        %2448 = vmatprep.subr.mxu0 0.0
        %2449 = vmatpush1.xpose.msra.mxu0 0.0
        %2450 = vmatprep.subr.mxu0 0.0
        %2451 = vmatpush1.xpose.msra.mxu0 0.0
        %2452 = vmatprep.subr.mxu0 0.0
        %2453 = vmatpush1.xpose.msra.mxu0 0.0
        %2454 = vmatprep.subr.mxu0 0.0
        %2455 = vmatpush1.xpose.msra.mxu0 0.0
        %2456 = vmatprep.subr.mxu0 0.0
        %2457 = vmatpush1.xpose.msra.mxu0 0.0
        %2458 = vmatprep.subr.mxu0 0.0
        %2459 = vmatpush1.xpose.msra.mxu0 0.0
        %2460 = vmatprep.subr.mxu0 0.0
        %2461 = vmatpush1.xpose.msra.mxu0 0.0
        %2462 = vmatprep.subr.mxu0 0.0
        %2463 = vmatpush1.xpose.msra.mxu0 0.0
        %2464 = vmatprep.subr.mxu0 0.0
        %2465 = vmatpush1.xpose.msra.mxu0 0.0
        %2466 = vmatprep.subr.mxu0 0.0
        %2467 = vmatpush1.xpose.msra.mxu0 0.0
        %2468 = vmatprep.subr.mxu0 0.0
        %2469 = vmatpush1.xpose.msra.mxu0 0.0
        %2470 = vmatprep.subr.mxu0 0.0
        %2471 = vmatpush1.xpose.msra.mxu0 0.0
        %2472 = vmatprep.subr.mxu0 0.0
        %2473 = vmatpush1.xpose.msra.mxu0 0.0
        %2474 = vmatprep.mubr.f32.mxu0 0.0
        %2475 = vmatmul.mubr.f32.gmra.mrb[0].mxu0 %v2406
        %v2476 = vpop.f32.mrb[0].mxu0
        %v2477 = vadd.f32 0.0, %v2476
        %v2478 = vpop.f32.mrb[0].mxu0
        %2479 = vdwg.mxu0
        %v2480 = vsel %vm1179, %v2255, -inf
        %2481 = vmax.xlane.f32.xlu0 %v2480
        %v2482 = vpop.xlane.xlu0 %2481
        %v2483 = vsel %vm1179, %v2329, -inf
        %2484 = vmax.xlane.f32.xlu0 %v2483
        %v2485 = vpop.xlane.xlu0 %2484
        %v2486 = vsel %vm1179, %v2403, -inf
        %2487 = vmax.xlane.f32.xlu0 %v2486
        %v2488 = vpop.xlane.xlu0 %2487
        %v2489 = vsel %vm1179, %v2477, -inf
        %2490 = vmax.xlane.f32.xlu0 %v2489
        %v2491 = vpop.xlane.xlu0 %2490
        %v2492 = vsub.f32 %v2255, %v2482
        %v2493 = vsub.f32 %v2329, %v2485
        %v2494 = vsub.f32 %v2403, %v2488
        %v2495 = vsub.f32 %v2477, %v2491
        %v2496 = vmul.f32 %v2492, 1.442695
        %v2497 = vpow.pop %v2496
        %v2498 = vmul.f32 %v2493, 1.442695
        %v2499 = vpow.pop %v2498
        %v2500 = vmul.f32 %v2494, 1.442695
        %v2501 = vpow.pop %v2500
        %v2502 = vmul.f32 %v2495, 1.442695
        %v2503 = vpow.pop %v2502
        %v2504 = vsel %vm1179, %v2497, 0.0
        %2505 = vadd.xlane.f32.xlu0 %v2504
        %v2506 = vpop.xlane.xlu0 %2505
        %v2507 = vsel %vm1179, %v2499, 0.0
        %2508 = vadd.xlane.f32.xlu0 %v2507
        %v2509 = vpop.xlane.xlu0 %2508
        %v2510 = vsel %vm1179, %v2501, 0.0
        %2511 = vadd.xlane.f32.xlu0 %v2510
        %v2512 = vpop.xlane.xlu0 %2511
        %v2513 = vsel %vm1179, %v2503, 0.0
        %2514 = vadd.xlane.f32.xlu0 %v2513
        %v2515 = vpop.xlane.xlu0 %2514
        %v2516 = vrcp.pop %v2506
        %v2517 = vrcp.pop %v2509
        %v2518 = vrcp.pop %v2512
        %v2519 = vrcp.pop %v2515
        %v2520 = vmul.f32 %v2497, %v2516
        %v2521 = vmul.f32 %v2499, %v2517
        %v2522 = vmul.f32 %v2501, %v2518
        %v2523 = vmul.f32 %v2503, %v2519
        %v2525 = vsel %vm1179, %v2520, 0
        %2527 = vmatprep.subr.mxu0 0.0
        %2528 = vmatpush1.msra.mxu0 %v2157
        %2529 = vmatprep.subr.mxu0 0.0
        %2530 = vmatpush1.msra.mxu0 0.0
        %2531 = vmatprep.subr.mxu0 0.0
        %2532 = vmatpush1.msra.mxu0 0.0
        %2533 = vmatprep.subr.mxu0 0.0
        %2534 = vmatpush1.msra.mxu0 0.0
        %2535 = vmatprep.subr.mxu0 0.0
        %2536 = vmatpush1.msra.mxu0 0.0
        %2537 = vmatprep.subr.mxu0 0.0
        %2538 = vmatpush1.msra.mxu0 0.0
        %2539 = vmatprep.subr.mxu0 0.0
        %2540 = vmatpush1.msra.mxu0 0.0
        %2541 = vmatprep.subr.mxu0 0.0
        %2542 = vmatpush1.msra.mxu0 0.0
        %2543 = vmatprep.subr.mxu0 0.0
        %2544 = vmatpush1.msra.mxu0 0.0
        %2545 = vmatprep.subr.mxu0 0.0
        %2546 = vmatpush1.msra.mxu0 0.0
        %2547 = vmatprep.subr.mxu0 0.0
        %2548 = vmatpush1.msra.mxu0 0.0
        %2549 = vmatprep.subr.mxu0 0.0
        %2550 = vmatpush1.msra.mxu0 0.0
        %2551 = vmatprep.subr.mxu0 0.0
        %2552 = vmatpush1.msra.mxu0 0.0
        %2553 = vmatprep.subr.mxu0 0.0
        %2554 = vmatpush1.msra.mxu0 0.0
        %2555 = vmatprep.subr.mxu0 0.0
        %2556 = vmatpush1.msra.mxu0 0.0
        %2557 = vmatprep.subr.mxu0 0.0
        %2558 = vmatpush1.msra.mxu0 0.0
        %2559 = vmatprep.subr.mxu0 0.0
        %2560 = vmatpush1.msra.mxu0 0.0
        %2561 = vmatprep.subr.mxu0 0.0
        %2562 = vmatpush1.msra.mxu0 0.0
        %2563 = vmatprep.subr.mxu0 0.0
        %2564 = vmatpush1.msra.mxu0 0.0
        %2565 = vmatprep.subr.mxu0 0.0
        %2566 = vmatpush1.msra.mxu0 0.0
        %2567 = vmatprep.subr.mxu0 0.0
        %2568 = vmatpush1.msra.mxu0 0.0
        %2569 = vmatprep.subr.mxu0 0.0
        %2570 = vmatpush1.msra.mxu0 0.0
        %2571 = vmatprep.subr.mxu0 0.0
        %2572 = vmatpush1.msra.mxu0 0.0
        %2573 = vmatprep.subr.mxu0 0.0
        %2574 = vmatpush1.msra.mxu0 0.0
        %2575 = vmatprep.subr.mxu0 0.0
        %2576 = vmatpush1.msra.mxu0 0.0
        %2577 = vmatprep.subr.mxu0 0.0
        %2578 = vmatpush1.msra.mxu0 0.0
        %2579 = vmatprep.subr.mxu0 0.0
        %2580 = vmatpush1.msra.mxu0 0.0
        %2581 = vmatprep.subr.mxu0 0.0
        %2582 = vmatpush1.msra.mxu0 0.0
        %2583 = vmatprep.subr.mxu0 0.0
        %2584 = vmatpush1.msra.mxu0 0.0
        %2585 = vmatprep.subr.mxu0 0.0
        %2586 = vmatpush1.msra.mxu0 0.0
        %2587 = vmatprep.subr.mxu0 0.0
        %2588 = vmatpush1.msra.mxu0 0.0
        %2589 = vmatprep.subr.mxu0 0.0
        %2590 = vmatpush1.msra.mxu0 0.0
        %2591 = vmatprep.mubr.f32.mxu0 0.0
        %2592 = vmatmul.mubr.f32.gmra.mrb[0].mxu0 %v2525
        %v2593 = vpop.f32.mrb[0].mxu0
        %v2594 = vadd.f32 0.0, %v2593
        %v2595 = vpop.f32.mrb[0].mxu0
        %2596 = vdwg.mxu0
        %v2598 = vsel %vm1179, %v2521, 0
        %2600 = vmatprep.subr.mxu0 0.0
        %2601 = vmatpush1.msra.mxu0 %v2176
        %2602 = vmatprep.subr.mxu0 0.0
        %2603 = vmatpush1.msra.mxu0 0.0
        %2604 = vmatprep.subr.mxu0 0.0
        %2605 = vmatpush1.msra.mxu0 0.0
        %2606 = vmatprep.subr.mxu0 0.0
        %2607 = vmatpush1.msra.mxu0 0.0
        %2608 = vmatprep.subr.mxu0 0.0
        %2609 = vmatpush1.msra.mxu0 0.0
        %2610 = vmatprep.subr.mxu0 0.0
        %2611 = vmatpush1.msra.mxu0 0.0
        %2612 = vmatprep.subr.mxu0 0.0
        %2613 = vmatpush1.msra.mxu0 0.0
        %2614 = vmatprep.subr.mxu0 0.0
        %2615 = vmatpush1.msra.mxu0 0.0
        %2616 = vmatprep.subr.mxu0 0.0
        %2617 = vmatpush1.msra.mxu0 0.0
        %2618 = vmatprep.subr.mxu0 0.0
        %2619 = vmatpush1.msra.mxu0 0.0
        %2620 = vmatprep.subr.mxu0 0.0
        %2621 = vmatpush1.msra.mxu0 0.0
        %2622 = vmatprep.subr.mxu0 0.0
        %2623 = vmatpush1.msra.mxu0 0.0
        %2624 = vmatprep.subr.mxu0 0.0
        %2625 = vmatpush1.msra.mxu0 0.0
        %2626 = vmatprep.subr.mxu0 0.0
        %2627 = vmatpush1.msra.mxu0 0.0
        %2628 = vmatprep.subr.mxu0 0.0
        %2629 = vmatpush1.msra.mxu0 0.0
        %2630 = vmatprep.subr.mxu0 0.0
        %2631 = vmatpush1.msra.mxu0 0.0
        %2632 = vmatprep.subr.mxu0 0.0
        %2633 = vmatpush1.msra.mxu0 0.0
        %2634 = vmatprep.subr.mxu0 0.0
        %2635 = vmatpush1.msra.mxu0 0.0
        %2636 = vmatprep.subr.mxu0 0.0
        %2637 = vmatpush1.msra.mxu0 0.0
        %2638 = vmatprep.subr.mxu0 0.0
        %2639 = vmatpush1.msra.mxu0 0.0
        %2640 = vmatprep.subr.mxu0 0.0
        %2641 = vmatpush1.msra.mxu0 0.0
        %2642 = vmatprep.subr.mxu0 0.0
        %2643 = vmatpush1.msra.mxu0 0.0
        %2644 = vmatprep.subr.mxu0 0.0
        %2645 = vmatpush1.msra.mxu0 0.0
        %2646 = vmatprep.subr.mxu0 0.0
        %2647 = vmatpush1.msra.mxu0 0.0
        %2648 = vmatprep.subr.mxu0 0.0
        %2649 = vmatpush1.msra.mxu0 0.0
        %2650 = vmatprep.subr.mxu0 0.0
        %2651 = vmatpush1.msra.mxu0 0.0
        %2652 = vmatprep.subr.mxu0 0.0
        %2653 = vmatpush1.msra.mxu0 0.0
        %2654 = vmatprep.subr.mxu0 0.0
        %2655 = vmatpush1.msra.mxu0 0.0
        %2656 = vmatprep.subr.mxu0 0.0
        %2657 = vmatpush1.msra.mxu0 0.0
        %2658 = vmatprep.subr.mxu0 0.0
        %2659 = vmatpush1.msra.mxu0 0.0
        %2660 = vmatprep.subr.mxu0 0.0
        %2661 = vmatpush1.msra.mxu0 0.0
        %2662 = vmatprep.subr.mxu0 0.0
        %2663 = vmatpush1.msra.mxu0 0.0
        %2664 = vmatprep.mubr.f32.mxu0 0.0
        %2665 = vmatmul.mubr.f32.gmra.mrb[0].mxu0 %v2598
        %v2666 = vpop.f32.mrb[0].mxu0
        %v2667 = vadd.f32 0.0, %v2666
        %v2668 = vpop.f32.mrb[0].mxu0
        %2669 = vdwg.mxu0
        %v2671 = vsel %vm1179, %v2522, 0
        %2673 = vmatprep.subr.mxu0 0.0
        %2674 = vmatpush1.msra.mxu0 %v2179
        %2675 = vmatprep.subr.mxu0 0.0
        %2676 = vmatpush1.msra.mxu0 0.0
        %2677 = vmatprep.subr.mxu0 0.0
        %2678 = vmatpush1.msra.mxu0 0.0
        %2679 = vmatprep.subr.mxu0 0.0
        %2680 = vmatpush1.msra.mxu0 0.0
        %2681 = vmatprep.subr.mxu0 0.0
        %2682 = vmatpush1.msra.mxu0 0.0
        %2683 = vmatprep.subr.mxu0 0.0
        %2684 = vmatpush1.msra.mxu0 0.0
        %2685 = vmatprep.subr.mxu0 0.0
        %2686 = vmatpush1.msra.mxu0 0.0
        %2687 = vmatprep.subr.mxu0 0.0
        %2688 = vmatpush1.msra.mxu0 0.0
        %2689 = vmatprep.subr.mxu0 0.0
        %2690 = vmatpush1.msra.mxu0 0.0
        %2691 = vmatprep.subr.mxu0 0.0
        %2692 = vmatpush1.msra.mxu0 0.0
        %2693 = vmatprep.subr.mxu0 0.0
        %2694 = vmatpush1.msra.mxu0 0.0
        %2695 = vmatprep.subr.mxu0 0.0
        %2696 = vmatpush1.msra.mxu0 0.0
        %2697 = vmatprep.subr.mxu0 0.0
        %2698 = vmatpush1.msra.mxu0 0.0
        %2699 = vmatprep.subr.mxu0 0.0
        %2700 = vmatpush1.msra.mxu0 0.0
        %2701 = vmatprep.subr.mxu0 0.0
        %2702 = vmatpush1.msra.mxu0 0.0
        %2703 = vmatprep.subr.mxu0 0.0
        %2704 = vmatpush1.msra.mxu0 0.0
        %2705 = vmatprep.subr.mxu0 0.0
        %2706 = vmatpush1.msra.mxu0 0.0
        %2707 = vmatprep.subr.mxu0 0.0
        %2708 = vmatpush1.msra.mxu0 0.0
        %2709 = vmatprep.subr.mxu0 0.0
        %2710 = vmatpush1.msra.mxu0 0.0
        %2711 = vmatprep.subr.mxu0 0.0
        %2712 = vmatpush1.msra.mxu0 0.0
        %2713 = vmatprep.subr.mxu0 0.0
        %2714 = vmatpush1.msra.mxu0 0.0
        %2715 = vmatprep.subr.mxu0 0.0
        %2716 = vmatpush1.msra.mxu0 0.0
        %2717 = vmatprep.subr.mxu0 0.0
        %2718 = vmatpush1.msra.mxu0 0.0
        %2719 = vmatprep.subr.mxu0 0.0
        %2720 = vmatpush1.msra.mxu0 0.0
        %2721 = vmatprep.subr.mxu0 0.0
        %2722 = vmatpush1.msra.mxu0 0.0
        %2723 = vmatprep.subr.mxu0 0.0
        %2724 = vmatpush1.msra.mxu0 0.0
        %2725 = vmatprep.subr.mxu0 0.0
        %2726 = vmatpush1.msra.mxu0 0.0
        %2727 = vmatprep.subr.mxu0 0.0
        %2728 = vmatpush1.msra.mxu0 0.0
        %2729 = vmatprep.subr.mxu0 0.0
        %2730 = vmatpush1.msra.mxu0 0.0
        %2731 = vmatprep.subr.mxu0 0.0
        %2732 = vmatpush1.msra.mxu0 0.0
        %2733 = vmatprep.subr.mxu0 0.0
        %2734 = vmatpush1.msra.mxu0 0.0
        %2735 = vmatprep.subr.mxu0 0.0
        %2736 = vmatpush1.msra.mxu0 0.0
        %2737 = vmatprep.mubr.f32.mxu0 0.0
        %2738 = vmatmul.mubr.f32.gmra.mrb[0].mxu0 %v2671
        %v2739 = vpop.f32.mrb[0].mxu0
        %v2740 = vadd.f32 0.0, %v2739
        %v2741 = vpop.f32.mrb[0].mxu0
        %2742 = vdwg.mxu0
        %v2744 = vsel %vm1179, %v2523, 0
        %2746 = vmatprep.subr.mxu0 0.0
        %2747 = vmatpush1.msra.mxu0 %v2182
        %2748 = vmatprep.subr.mxu0 0.0
        %2749 = vmatpush1.msra.mxu0 0.0
        %2750 = vmatprep.subr.mxu0 0.0
        %2751 = vmatpush1.msra.mxu0 0.0
        %2752 = vmatprep.subr.mxu0 0.0
        %2753 = vmatpush1.msra.mxu0 0.0
        %2754 = vmatprep.subr.mxu0 0.0
        %2755 = vmatpush1.msra.mxu0 0.0
        %2756 = vmatprep.subr.mxu0 0.0
        %2757 = vmatpush1.msra.mxu0 0.0
        %2758 = vmatprep.subr.mxu0 0.0
        %2759 = vmatpush1.msra.mxu0 0.0
        %2760 = vmatprep.subr.mxu0 0.0
        %2761 = vmatpush1.msra.mxu0 0.0
        %2762 = vmatprep.subr.mxu0 0.0
        %2763 = vmatpush1.msra.mxu0 0.0
        %2764 = vmatprep.subr.mxu0 0.0
        %2765 = vmatpush1.msra.mxu0 0.0
        %2766 = vmatprep.subr.mxu0 0.0
        %2767 = vmatpush1.msra.mxu0 0.0
        %2768 = vmatprep.subr.mxu0 0.0
        %2769 = vmatpush1.msra.mxu0 0.0
        %2770 = vmatprep.subr.mxu0 0.0
        %2771 = vmatpush1.msra.mxu0 0.0
        %2772 = vmatprep.subr.mxu0 0.0
        %2773 = vmatpush1.msra.mxu0 0.0
        %2774 = vmatprep.subr.mxu0 0.0
        %2775 = vmatpush1.msra.mxu0 0.0
        %2776 = vmatprep.subr.mxu0 0.0
        %2777 = vmatpush1.msra.mxu0 0.0
        %2778 = vmatprep.subr.mxu0 0.0
        %2779 = vmatpush1.msra.mxu0 0.0
        %2780 = vmatprep.subr.mxu0 0.0
        %2781 = vmatpush1.msra.mxu0 0.0
        %2782 = vmatprep.subr.mxu0 0.0
        %2783 = vmatpush1.msra.mxu0 0.0
        %2784 = vmatprep.subr.mxu0 0.0
        %2785 = vmatpush1.msra.mxu0 0.0
        %2786 = vmatprep.subr.mxu0 0.0
        %2787 = vmatpush1.msra.mxu0 0.0
        %2788 = vmatprep.subr.mxu0 0.0
        %2789 = vmatpush1.msra.mxu0 0.0
        %2790 = vmatprep.subr.mxu0 0.0
        %2791 = vmatpush1.msra.mxu0 0.0
        %2792 = vmatprep.subr.mxu0 0.0
        %2793 = vmatpush1.msra.mxu0 0.0
        %2794 = vmatprep.subr.mxu0 0.0
        %2795 = vmatpush1.msra.mxu0 0.0
        %2796 = vmatprep.subr.mxu0 0.0
        %2797 = vmatpush1.msra.mxu0 0.0
        %2798 = vmatprep.subr.mxu0 0.0
        %2799 = vmatpush1.msra.mxu0 0.0
        %2800 = vmatprep.subr.mxu0 0.0
        %2801 = vmatpush1.msra.mxu0 0.0
        %2802 = vmatprep.subr.mxu0 0.0
        %2803 = vmatpush1.msra.mxu0 0.0
        %2804 = vmatprep.subr.mxu0 0.0
        %2805 = vmatpush1.msra.mxu0 0.0
        %2806 = vmatprep.subr.mxu0 0.0
        %2807 = vmatpush1.msra.mxu0 0.0
        %2808 = vmatprep.subr.mxu0 0.0
        %2809 = vmatpush1.msra.mxu0 0.0
        %2810 = vmatprep.mubr.f32.mxu0 0.0
        %2811 = vmatmul.mubr.f32.gmra.mrb[0].mxu0 %v2744
        %v2812 = vpop.f32.mrb[0].mxu0
        %v2813 = vadd.f32 0.0, %v2812
        %v2814 = vpop.f32.mrb[0].mxu0
        %2815 = vdwg.mxu0
        %2817 = vrot.lane.b32.xlu0 %v2667, 32
        %v2818 = vpop.permute.xlu0 %2817
        %2821 = vrot.lane.b32.xlu0 %v2740, 64
        %v2822 = vpop.permute.xlu0 %2821
        %2825 = vrot.lane.b32.xlu0 %v2813, 96
        %v2826 = vpop.permute.xlu0 %2825
        %v2828 = vsel %vm882, %v2594, %v2818
        %v2829 = vsel %vm1529, %v2828, %v2822
        %v2830 = vsel %vm1531, %v2829, %v2826
        %s2831 = scalar_lea.vmem [#allocation7], 1
        %v2832 = vld [vmem:[%s2831] sm:$0x1]
        %s2833 = scalar_lea.vmem [#allocation8], 1
        %v2834 = vld [vmem:[%s2833] sm:$0x1]
        %2835 = vadd.xlane.f32.xlu0 %v2830
        %v2836 = vpop.xlane.xlu0 %2835
        %v2837 = vmul.f32 %v2836, %v1537
        %v2838 = vmul.f32 %v2830, %v2830
        %2839 = vadd.xlane.f32.xlu0 %v2838
        %v2840 = vpop.xlane.xlu0 %2839
        %v2841 = vmul.f32 %v2840, %v1537
        %v2842 = vmul.f32 %v2837, %v2837
        %v2843 = vsub.f32 %v2841, %v2842
        %v2844 = vadd.f32 %v2843, 1e-05
        %v2845 = vrsqrt.pop %v2844
        %v2846 = vsub.f32 %v2830, %v2837
        %v2847 = vmul.f32 %v2846, %v2845
        %v2849 = vlaneseq
        %v2850 = vshrl.u32 %v2849, 7
        %v2851 = vsub.s32 0, %v2850
        %v2852 = vrot.slane %v2832, %v2851
        %v2854 = vmul.f32 %v2847, %v2852
        %v2856 = vlaneseq
        %v2857 = vshrl.u32 %v2856, 7
        %v2858 = vsub.s32 0, %v2857
        %v2859 = vrot.slane %v2834, %v2858
        %v2861 = vadd.f32 %v2854, %v2859
        %v2862 = vadd.f32 %v1919, %v2861
        %s2863 = scalar_lea.vmem %s5, 128
        %v2864 = vld [vmem:[%s2863] sm:$0xff]
        %v2865 = vld [vmem:[%s2863 + $0x8] sm:$0xff]
        %v2866 = vld [vmem:[%s2863 + $0x10] sm:$0xff]
        %v2867 = vld [vmem:[%s2863 + $0x18] sm:$0xff]
        %v2868 = vld [vmem:[%s2863 + $0x20] sm:$0xff]
        %v2869 = vld [vmem:[%s2863 + $0x28] sm:$0xff]
        %v2870 = vld [vmem:[%s2863 + $0x30] sm:$0xff]
        %v2871 = vld [vmem:[%s2863 + $0x38] sm:$0xff]
        %v2872 = vld [vmem:[%s2863 + $0x40] sm:$0xff]
        %v2873 = vld [vmem:[%s2863 + $0x48] sm:$0xff]
        %v2874 = vld [vmem:[%s2863 + $0x50] sm:$0xff]
        %v2875 = vld [vmem:[%s2863 + $0x58] sm:$0xff]
        %v2876 = vld [vmem:[%s2863 + $0x60] sm:$0xff]
        %v2877 = vld [vmem:[%s2863 + $0x68] sm:$0xff]
        %v2878 = vld [vmem:[%s2863 + $0x70] sm:$0xff]
        %v2879 = vld [vmem:[%s2863 + $0x78] sm:$0xff]
        %v2880 = vunpack.c.l.bf16 %v2864
        %v2881 = vunpack.c.h.bf16 %v2864
        %v2882 = vunpack.c.l.bf16 %v2865
        %v2883 = vunpack.c.h.bf16 %v2865
        %v2884 = vunpack.c.l.bf16 %v2866
        %v2885 = vunpack.c.h.bf16 %v2866
        %v2886 = vunpack.c.l.bf16 %v2867
        %v2887 = vunpack.c.h.bf16 %v2867
        %v2888 = vunpack.c.l.bf16 %v2868
        %v2889 = vunpack.c.h.bf16 %v2868
        %v2890 = vunpack.c.l.bf16 %v2869
        %v2891 = vunpack.c.h.bf16 %v2869
        %v2892 = vunpack.c.l.bf16 %v2870
        %v2893 = vunpack.c.h.bf16 %v2870
        %v2894 = vunpack.c.l.bf16 %v2871
        %v2895 = vunpack.c.h.bf16 %v2871
        %v2896 = vunpack.c.l.bf16 %v2872
        %v2897 = vunpack.c.h.bf16 %v2872
        %v2898 = vunpack.c.l.bf16 %v2873
        %v2899 = vunpack.c.h.bf16 %v2873
        %v2900 = vunpack.c.l.bf16 %v2874
        %v2901 = vunpack.c.h.bf16 %v2874
        %v2902 = vunpack.c.l.bf16 %v2875
        %v2903 = vunpack.c.h.bf16 %v2875
        %v2904 = vunpack.c.l.bf16 %v2876
        %v2905 = vunpack.c.h.bf16 %v2876
        %v2906 = vunpack.c.l.bf16 %v2877
        %v2907 = vunpack.c.h.bf16 %v2877
        %v2908 = vunpack.c.l.bf16 %v2878
        %v2909 = vunpack.c.h.bf16 %v2878
        %v2910 = vunpack.c.l.bf16 %v2879
        %v2911 = vunpack.c.h.bf16 %v2879
        %s2912 = scalar_lea.vmem [#allocation10], 2
        %v2913 = vld [vmem:[%s2912] sm:$0x3]
        %v2915 = vlaneseq
        %v2916 = vshrl.u32 %v2915, 7
        %v2917 = vsub.s32 0, %v2916
        %v2918 = vrot.slane %v2913, %v2917
        %v2919 = vlaneseq
        %v2920 = vshrl.u32 %v2919, 7
        %v2921 = vsub.s32 1, %v2920
        %v2922 = vrot.slane %v2913, %v2921
        %2925 = vmatprep.subr.mxu0 %v2881
        %2926 = vmatpush1.msra.mxu0 %v2880
        %2927 = vmatprep.subr.mxu0 %v2883
        %2928 = vmatpush1.msra.mxu0 %v2882
        %2929 = vmatprep.subr.mxu0 %v2885
        %2930 = vmatpush1.msra.mxu0 %v2884
        %2931 = vmatprep.subr.mxu0 %v2887
        %2932 = vmatpush1.msra.mxu0 %v2886
        %2933 = vmatprep.subr.mxu0 %v2889
        %2934 = vmatpush1.msra.mxu0 %v2888
        %2935 = vmatprep.subr.mxu0 %v2891
        %2936 = vmatpush1.msra.mxu0 %v2890
        %2937 = vmatprep.subr.mxu0 %v2893
        %2938 = vmatpush1.msra.mxu0 %v2892
        %2939 = vmatprep.subr.mxu0 %v2895
        %2940 = vmatpush1.msra.mxu0 %v2894
        %2941 = vmatprep.subr.mxu0 %v2897
        %2942 = vmatpush1.msra.mxu0 %v2896
        %2943 = vmatprep.subr.mxu0 %v2899
        %2944 = vmatpush1.msra.mxu0 %v2898
        %2945 = vmatprep.subr.mxu0 %v2901
        %2946 = vmatpush1.msra.mxu0 %v2900
        %2947 = vmatprep.subr.mxu0 %v2903
        %2948 = vmatpush1.msra.mxu0 %v2902
        %2949 = vmatprep.subr.mxu0 %v2905
        %2950 = vmatpush1.msra.mxu0 %v2904
        %2951 = vmatprep.subr.mxu0 %v2907
        %2952 = vmatpush1.msra.mxu0 %v2906
        %2953 = vmatprep.subr.mxu0 %v2909
        %2954 = vmatpush1.msra.mxu0 %v2908
        %2955 = vmatprep.subr.mxu0 %v2911
        %2956 = vmatpush1.msra.mxu0 %v2910
        %2957 = vmatprep.subr.mxu0 0.0
        %2958 = vmatpush1.msra.mxu0 0.0
        %2959 = vmatprep.subr.mxu0 0.0
        %2960 = vmatpush1.msra.mxu0 0.0
        %2961 = vmatprep.subr.mxu0 0.0
        %2962 = vmatpush1.msra.mxu0 0.0
        %2963 = vmatprep.subr.mxu0 0.0
        %2964 = vmatpush1.msra.mxu0 0.0
        %2965 = vmatprep.subr.mxu0 0.0
        %2966 = vmatpush1.msra.mxu0 0.0
        %2967 = vmatprep.subr.mxu0 0.0
        %2968 = vmatpush1.msra.mxu0 0.0
        %2969 = vmatprep.subr.mxu0 0.0
        %2970 = vmatpush1.msra.mxu0 0.0
        %2971 = vmatprep.subr.mxu0 0.0
        %2972 = vmatpush1.msra.mxu0 0.0
        %2973 = vmatprep.subr.mxu0 0.0
        %2974 = vmatpush1.msra.mxu0 0.0
        %2975 = vmatprep.subr.mxu0 0.0
        %2976 = vmatpush1.msra.mxu0 0.0
        %2977 = vmatprep.subr.mxu0 0.0
        %2978 = vmatpush1.msra.mxu0 0.0
        %2979 = vmatprep.subr.mxu0 0.0
        %2980 = vmatpush1.msra.mxu0 0.0
        %2981 = vmatprep.subr.mxu0 0.0
        %2982 = vmatpush1.msra.mxu0 0.0
        %2983 = vmatprep.subr.mxu0 0.0
        %2984 = vmatpush1.msra.mxu0 0.0
        %2985 = vmatprep.subr.mxu0 0.0
        %2986 = vmatpush1.msra.mxu0 0.0
        %2987 = vmatprep.subr.mxu0 0.0
        %2988 = vmatpush1.msra.mxu0 0.0
        %2989 = vmatprep.mubr.f32.mxu0 0.0
        %2990 = vmatmul.mubr.f32.gmra.mrb[0].mxu0 %v2862
        %v2991 = vpop.f32.mrb[0].mxu0
        %v2992 = vadd.f32 %v2918, %v2991
        %v2993 = vpop.f32.mrb[0].mxu0
        %v2994 = vadd.f32 %v2922, %v2993
        %2995 = vdwg.mxu0
        %v2996 = vmul.f32 %v2992, 0.5
        %v2997 = vmul.f32 %v2994, 0.5
        %v2998 = vmul.f32 %v2992, 0.70710677
        %v2999 = vmul.f32 %v2994, 0.70710677
        %v3000 = vand.u32 2147483647, %v2998
        %v3001 = vand.u32 2147483647, %v2999
        %v3002 = vmul.f32 %v3000, 0.3275911
        %v3003 = vmul.f32 %v3001, 0.3275911
        %v3004 = vadd.f32 %v3002, 1.0
        %v3005 = vadd.f32 %v3003, 1.0
        %v3006 = vrcp.pop %v3004
        %v3007 = vmul.f32 1.0, %v3006
        %v3008 = vrcp.pop %v3005
        %v3009 = vmul.f32 1.0, %v3008
        %v3010 = vmul.f32 %v3007, 1.0614054
        %v3011 = vmul.f32 %v3009, 1.0614054
        %v3012 = vadd.f32 %v3010, -1.4531521
        %v3013 = vadd.f32 %v3011, -1.4531521
        %v3014 = vmul.f32 %v3007, %v3012
        %v3015 = vmul.f32 %v3009, %v3013
        %v3016 = vadd.f32 %v3014, 1.4214138
        %v3017 = vadd.f32 %v3015, 1.4214138
        %v3018 = vmul.f32 %v3007, %v3016
        %v3019 = vmul.f32 %v3009, %v3017
        %v3020 = vadd.f32 %v3018, -0.28449672
        %v3021 = vadd.f32 %v3019, -0.28449672
        %v3022 = vmul.f32 %v3007, %v3020
        %v3023 = vmul.f32 %v3009, %v3021
        %v3024 = vadd.f32 %v3022, 0.2548296
        %v3025 = vadd.f32 %v3023, 0.2548296
        %v3026 = vmul.f32 %v3007, %v3024
        %v3027 = vmul.f32 %v3009, %v3025
        %v3028 = vsub.f32 0.0, %v3000
        %v3029 = vsub.f32 0.0, %v3001
        %v3030 = vmul.f32 %v3028, %v3000
        %v3031 = vmul.f32 %v3029, %v3001
        %v3032 = vmul.f32 %v3030, 1.442695
        %v3033 = vpow.pop %v3032
        %v3034 = vmul.f32 %v3031, 1.442695
        %v3035 = vpow.pop %v3034
        %v3036 = vmul.f32 %v3026, %v3033
        %v3037 = vmul.f32 %v3027, %v3035
        %v3038 = vsub.f32 1.0, %v3036
        %v3039 = vsub.f32 1.0, %v3037
        %vm3040 = vcmp.ge.f32.partialorder %v2998, 0.0
        %vm3041 = vcmp.ge.f32.partialorder %v2999, 0.0
        %v3042 = vsub.f32 0.0, %v3038
        %v3043 = vsub.f32 0.0, %v3039
        %v3044 = vsel %vm3040, %v3038, %v3042
        %v3045 = vsel %vm3041, %v3039, %v3043
        %v3046 = vadd.f32 %v3044, 1.0
        %v3047 = vadd.f32 %v3045, 1.0
        %v3048 = vmul.f32 %v2996, %v3046
        %v3049 = vmul.f32 %v2997, %v3047
        %s3050 = scalar_lea.vmem [#allocation11], 128
        %v3051 = vld [vmem:[%s3050] sm:$0xf]
        %v3052 = vld [vmem:[%s3050 + $0x4] sm:$0xf]
        %v3053 = vld [vmem:[%s3050 + $0x8] sm:$0xf]
        %v3054 = vld [vmem:[%s3050 + $0xc] sm:$0xf]
        %v3055 = vld [vmem:[%s3050 + $0x10] sm:$0xf]
        %v3056 = vld [vmem:[%s3050 + $0x14] sm:$0xf]
        %v3057 = vld [vmem:[%s3050 + $0x18] sm:$0xf]
        %v3058 = vld [vmem:[%s3050 + $0x1c] sm:$0xf]
        %v3059 = vld [vmem:[%s3050 + $0x20] sm:$0xf]
        %v3060 = vld [vmem:[%s3050 + $0x24] sm:$0xf]
        %v3061 = vld [vmem:[%s3050 + $0x28] sm:$0xf]
        %v3062 = vld [vmem:[%s3050 + $0x2c] sm:$0xf]
        %v3063 = vld [vmem:[%s3050 + $0x30] sm:$0xf]
        %v3064 = vld [vmem:[%s3050 + $0x34] sm:$0xf]
        %v3065 = vld [vmem:[%s3050 + $0x38] sm:$0xf]
        %v3066 = vld [vmem:[%s3050 + $0x3c] sm:$0xf]
        %v3067 = vld [vmem:[%s3050 + $0x40] sm:$0xf]
        %v3068 = vld [vmem:[%s3050 + $0x44] sm:$0xf]
        %v3069 = vld [vmem:[%s3050 + $0x48] sm:$0xf]
        %v3070 = vld [vmem:[%s3050 + $0x4c] sm:$0xf]
        %v3071 = vld [vmem:[%s3050 + $0x50] sm:$0xf]
        %v3072 = vld [vmem:[%s3050 + $0x54] sm:$0xf]
        %v3073 = vld [vmem:[%s3050 + $0x58] sm:$0xf]
        %v3074 = vld [vmem:[%s3050 + $0x5c] sm:$0xf]
        %v3075 = vld [vmem:[%s3050 + $0x60] sm:$0xf]
        %v3076 = vld [vmem:[%s3050 + $0x64] sm:$0xf]
        %v3077 = vld [vmem:[%s3050 + $0x68] sm:$0xf]
        %v3078 = vld [vmem:[%s3050 + $0x6c] sm:$0xf]
        %v3079 = vld [vmem:[%s3050 + $0x70] sm:$0xf]
        %v3080 = vld [vmem:[%s3050 + $0x74] sm:$0xf]
        %v3081 = vld [vmem:[%s3050 + $0x78] sm:$0xf]
        %v3082 = vld [vmem:[%s3050 + $0x7c] sm:$0xf]
        %v3083 = vunpack.c.l.bf16 %v3051
        %v3084 = vunpack.c.l.bf16 %v3052
        %v3085 = vunpack.c.l.bf16 %v3053
        %v3086 = vunpack.c.l.bf16 %v3054
        %v3087 = vunpack.c.l.bf16 %v3055
        %v3088 = vunpack.c.l.bf16 %v3056
        %v3089 = vunpack.c.l.bf16 %v3057
        %v3090 = vunpack.c.l.bf16 %v3058
        %v3091 = vunpack.c.l.bf16 %v3059
        %v3092 = vunpack.c.l.bf16 %v3060
        %v3093 = vunpack.c.l.bf16 %v3061
        %v3094 = vunpack.c.l.bf16 %v3062
        %v3095 = vunpack.c.l.bf16 %v3063
        %v3096 = vunpack.c.l.bf16 %v3064
        %v3097 = vunpack.c.l.bf16 %v3065
        %v3098 = vunpack.c.l.bf16 %v3066
        %v3099 = vunpack.c.l.bf16 %v3067
        %v3100 = vunpack.c.l.bf16 %v3068
        %v3101 = vunpack.c.l.bf16 %v3069
        %v3102 = vunpack.c.l.bf16 %v3070
        %v3103 = vunpack.c.l.bf16 %v3071
        %v3104 = vunpack.c.l.bf16 %v3072
        %v3105 = vunpack.c.l.bf16 %v3073
        %v3106 = vunpack.c.l.bf16 %v3074
        %v3107 = vunpack.c.l.bf16 %v3075
        %v3108 = vunpack.c.l.bf16 %v3076
        %v3109 = vunpack.c.l.bf16 %v3077
        %v3110 = vunpack.c.l.bf16 %v3078
        %v3111 = vunpack.c.l.bf16 %v3079
        %v3112 = vunpack.c.l.bf16 %v3080
        %v3113 = vunpack.c.l.bf16 %v3081
        %v3114 = vunpack.c.l.bf16 %v3082
        %s3115 = scalar_lea.vmem [#allocation13], 1
        %v3116 = vld [vmem:[%s3115] sm:$0x1]
        %v3118 = vlaneseq
        %v3119 = vshrl.u32 %v3118, 7
        %v3120 = vsub.s32 0, %v3119
        %v3121 = vrot.slane %v3116, %v3120
        %3123 = vmatprep.subr.mxu0 0.0
        %3124 = vmatpush1.msra.mxu0 %v3083
        %3125 = vmatprep.subr.mxu0 0.0
        %3126 = vmatpush1.msra.mxu0 %v3084
        %3127 = vmatprep.subr.mxu0 0.0
        %3128 = vmatpush1.msra.mxu0 %v3085
        %3129 = vmatprep.subr.mxu0 0.0
        %3130 = vmatpush1.msra.mxu0 %v3086
        %3131 = vmatprep.subr.mxu0 0.0
        %3132 = vmatpush1.msra.mxu0 %v3087
        %3133 = vmatprep.subr.mxu0 0.0
        %3134 = vmatpush1.msra.mxu0 %v3088
        %3135 = vmatprep.subr.mxu0 0.0
        %3136 = vmatpush1.msra.mxu0 %v3089
        %3137 = vmatprep.subr.mxu0 0.0
        %3138 = vmatpush1.msra.mxu0 %v3090
        %3139 = vmatprep.subr.mxu0 0.0
        %3140 = vmatpush1.msra.mxu0 %v3091
        %3141 = vmatprep.subr.mxu0 0.0
        %3142 = vmatpush1.msra.mxu0 %v3092
        %3143 = vmatprep.subr.mxu0 0.0
        %3144 = vmatpush1.msra.mxu0 %v3093
        %3145 = vmatprep.subr.mxu0 0.0
        %3146 = vmatpush1.msra.mxu0 %v3094
        %3147 = vmatprep.subr.mxu0 0.0
        %3148 = vmatpush1.msra.mxu0 %v3095
        %3149 = vmatprep.subr.mxu0 0.0
        %3150 = vmatpush1.msra.mxu0 %v3096
        %3151 = vmatprep.subr.mxu0 0.0
        %3152 = vmatpush1.msra.mxu0 %v3097
        %3153 = vmatprep.subr.mxu0 0.0
        %3154 = vmatpush1.msra.mxu0 %v3098
        %3155 = vmatprep.subr.mxu0 0.0
        %3156 = vmatpush1.msra.mxu0 %v3099
        %3157 = vmatprep.subr.mxu0 0.0
        %3158 = vmatpush1.msra.mxu0 %v3100
        %3159 = vmatprep.subr.mxu0 0.0
        %3160 = vmatpush1.msra.mxu0 %v3101
        %3161 = vmatprep.subr.mxu0 0.0
        %3162 = vmatpush1.msra.mxu0 %v3102
        %3163 = vmatprep.subr.mxu0 0.0
        %3164 = vmatpush1.msra.mxu0 %v3103
        %3165 = vmatprep.subr.mxu0 0.0
        %3166 = vmatpush1.msra.mxu0 %v3104
        %3167 = vmatprep.subr.mxu0 0.0
        %3168 = vmatpush1.msra.mxu0 %v3105
        %3169 = vmatprep.subr.mxu0 0.0
        %3170 = vmatpush1.msra.mxu0 %v3106
        %3171 = vmatprep.subr.mxu0 0.0
        %3172 = vmatpush1.msra.mxu0 %v3107
        %3173 = vmatprep.subr.mxu0 0.0
        %3174 = vmatpush1.msra.mxu0 %v3108
        %3175 = vmatprep.subr.mxu0 0.0
        %3176 = vmatpush1.msra.mxu0 %v3109
        %3177 = vmatprep.subr.mxu0 0.0
        %3178 = vmatpush1.msra.mxu0 %v3110
        %3179 = vmatprep.subr.mxu0 0.0
        %3180 = vmatpush1.msra.mxu0 %v3111
        %3181 = vmatprep.subr.mxu0 0.0
        %3182 = vmatpush1.msra.mxu0 %v3112
        %3183 = vmatprep.subr.mxu0 0.0
        %3184 = vmatpush1.msra.mxu0 %v3113
        %3185 = vmatprep.subr.mxu0 0.0
        %3186 = vmatpush1.msra.mxu0 %v3114
        %3187 = vmatprep.mubr.f32.mxu0 %v3049
        %3188 = vmatmul.mubr.f32.gmra.mrb[0].mxu0 %v3048
        %v3189 = vpop.f32.mrb[0].mxu0
        %v3190 = vadd.f32 %v3121, %v3189
        %v3191 = vpop.f32.mrb[0].mxu0
        %3192 = vdwg.mxu0
        %s3193 = scalar_lea.vmem [#allocation14], 1
        %v3194 = vld [vmem:[%s3193] sm:$0x1]
        %s3195 = scalar_lea.vmem [#allocation16], 1
        %v3196 = vld [vmem:[%s3195] sm:$0x1]
        %3197 = vadd.xlane.f32.xlu0 %v3190
        %v3198 = vpop.xlane.xlu0 %3197
        %v3199 = vmul.f32 %v3198, %v1537
        %v3200 = vmul.f32 %v3190, %v3190
        %3201 = vadd.xlane.f32.xlu0 %v3200
        %v3202 = vpop.xlane.xlu0 %3201
        %v3203 = vmul.f32 %v3202, %v1537
        %v3204 = vmul.f32 %v3199, %v3199
        %v3205 = vsub.f32 %v3203, %v3204
        %v3206 = vadd.f32 %v3205, 1e-05
        %v3207 = vrsqrt.pop %v3206
        %v3208 = vsub.f32 %v3190, %v3199
        %v3209 = vmul.f32 %v3208, %v3207
        %v3211 = vlaneseq
        %v3212 = vshrl.u32 %v3211, 7
        %v3213 = vsub.s32 0, %v3212
        %v3214 = vrot.slane %v3194, %v3213
        %v3216 = vmul.f32 %v3209, %v3214
        %v3218 = vlaneseq
        %v3219 = vshrl.u32 %v3218, 7
        %v3220 = vsub.s32 0, %v3219
        %v3221 = vrot.slane %v3196, %v3220
        %v3223 = vadd.f32 %v3216, %v3221
        %v3224 = vadd.f32 %v2862, %v3223
        %3225 = vst [vmem:[%s608] sm:$0xff] %v3224
        %v3226 = vld [vmem:[#allocation17] sm:$0xf]
        %v3227 = vld [vmem:[#allocation17 + $0x4] sm:$0xf]
        %v3228 = vld [vmem:[#allocation17 + $0x8] sm:$0xf]
        %v3229 = vld [vmem:[#allocation17 + $0xc] sm:$0xf]
        %v3230 = vld [vmem:[#allocation17 + $0x10] sm:$0xf]
        %v3231 = vld [vmem:[#allocation17 + $0x14] sm:$0xf]
        %v3232 = vld [vmem:[#allocation17 + $0x18] sm:$0xf]
        %v3233 = vld [vmem:[#allocation17 + $0x1c] sm:$0xf]
        %v3234 = vld [vmem:[#allocation17 + $0x20] sm:$0xf]
        %v3235 = vld [vmem:[#allocation17 + $0x24] sm:$0xf]
        %v3236 = vld [vmem:[#allocation17 + $0x28] sm:$0xf]
        %v3237 = vld [vmem:[#allocation17 + $0x2c] sm:$0xf]
        %v3238 = vld [vmem:[#allocation17 + $0x30] sm:$0xf]
        %v3239 = vld [vmem:[#allocation17 + $0x34] sm:$0xf]
        %v3240 = vld [vmem:[#allocation17 + $0x38] sm:$0xf]
        %v3241 = vld [vmem:[#allocation17 + $0x3c] sm:$0xf]
        %v3242 = vunpack.c.l.bf16 %v3226
        %v3243 = vunpack.c.l.bf16 %v3227
        %v3244 = vunpack.c.l.bf16 %v3228
        %v3245 = vunpack.c.l.bf16 %v3229
        %v3246 = vunpack.c.l.bf16 %v3230
        %v3247 = vunpack.c.l.bf16 %v3231
        %v3248 = vunpack.c.l.bf16 %v3232
        %v3249 = vunpack.c.l.bf16 %v3233
        %v3250 = vunpack.c.l.bf16 %v3234
        %v3251 = vunpack.c.l.bf16 %v3235
        %v3252 = vunpack.c.l.bf16 %v3236
        %v3253 = vunpack.c.l.bf16 %v3237
        %v3254 = vunpack.c.l.bf16 %v3238
        %v3255 = vunpack.c.l.bf16 %v3239
        %v3256 = vunpack.c.l.bf16 %v3240
        %v3257 = vunpack.c.l.bf16 %v3241
        %v3258 = vld [vmem:[%s12] sm:$0x1]
        %3259 = vmatprep.subr.mxu0 0.0
        %3260 = vmatpush1.msra.mxu0 %v3242
        %3261 = vmatprep.subr.mxu0 0.0
        %3262 = vmatpush1.msra.mxu0 %v3243
        %3263 = vmatprep.subr.mxu0 0.0
        %3264 = vmatpush1.msra.mxu0 %v3244
        %3265 = vmatprep.subr.mxu0 0.0
        %3266 = vmatpush1.msra.mxu0 %v3245
        %3267 = vmatprep.subr.mxu0 0.0
        %3268 = vmatpush1.msra.mxu0 %v3246
        %3269 = vmatprep.subr.mxu0 0.0
        %3270 = vmatpush1.msra.mxu0 %v3247
        %3271 = vmatprep.subr.mxu0 0.0
        %3272 = vmatpush1.msra.mxu0 %v3248
        %3273 = vmatprep.subr.mxu0 0.0
        %3274 = vmatpush1.msra.mxu0 %v3249
        %3275 = vmatprep.subr.mxu0 0.0
        %3276 = vmatpush1.msra.mxu0 %v3250
        %3277 = vmatprep.subr.mxu0 0.0
        %3278 = vmatpush1.msra.mxu0 %v3251
        %3279 = vmatprep.subr.mxu0 0.0
        %3280 = vmatpush1.msra.mxu0 %v3252
        %3281 = vmatprep.subr.mxu0 0.0
        %3282 = vmatpush1.msra.mxu0 %v3253
        %3283 = vmatprep.subr.mxu0 0.0
        %3284 = vmatpush1.msra.mxu0 %v3254
        %3285 = vmatprep.subr.mxu0 0.0
        %3286 = vmatpush1.msra.mxu0 %v3255
        %3287 = vmatprep.subr.mxu0 0.0
        %3288 = vmatpush1.msra.mxu0 %v3256
        %3289 = vmatprep.subr.mxu0 0.0
        %3290 = vmatpush1.msra.mxu0 %v3257
        %3291 = vmatprep.subr.mxu0 0.0
        %3292 = vmatpush1.msra.mxu0 0.0
        %3293 = vmatprep.subr.mxu0 0.0
        %3294 = vmatpush1.msra.mxu0 0.0
        %3295 = vmatprep.subr.mxu0 0.0
        %3296 = vmatpush1.msra.mxu0 0.0
        %3297 = vmatprep.subr.mxu0 0.0
        %3298 = vmatpush1.msra.mxu0 0.0
        %3299 = vmatprep.subr.mxu0 0.0
        %3300 = vmatpush1.msra.mxu0 0.0
        %3301 = vmatprep.subr.mxu0 0.0
        %3302 = vmatpush1.msra.mxu0 0.0
        %3303 = vmatprep.subr.mxu0 0.0
        %3304 = vmatpush1.msra.mxu0 0.0
        %3305 = vmatprep.subr.mxu0 0.0
        %3306 = vmatpush1.msra.mxu0 0.0
        %3307 = vmatprep.subr.mxu0 0.0
        %3308 = vmatpush1.msra.mxu0 0.0
        %3309 = vmatprep.subr.mxu0 0.0
        %3310 = vmatpush1.msra.mxu0 0.0
        %3311 = vmatprep.subr.mxu0 0.0
        %3312 = vmatpush1.msra.mxu0 0.0
        %3313 = vmatprep.subr.mxu0 0.0
        %3314 = vmatpush1.msra.mxu0 0.0
        %3315 = vmatprep.subr.mxu0 0.0
        %3316 = vmatpush1.msra.mxu0 0.0
        %3317 = vmatprep.subr.mxu0 0.0
        %3318 = vmatpush1.msra.mxu0 0.0
        %3319 = vmatprep.subr.mxu0 0.0
        %3320 = vmatpush1.msra.mxu0 0.0
        %3321 = vmatprep.subr.mxu0 0.0
        %3322 = vmatpush1.msra.mxu0 0.0
        %3323 = vmatprep.mubr.f32.mxu0 0.0
        %3324 = vmatmul.mubr.f32.gmra.mrb[0].mxu0 %v3224
        %v3325 = vpop.f32.mrb[0].mxu0
        %v3326 = vadd.f32 %v3258, %v3325
        %v3327 = vpop.f32.mrb[0].mxu0
        %3328 = vdwg.mxu0
        %v3329 = vtanh.pop %v3326
        %3330 = vst [vmem:[%s614] sm:$0x1] %v3329
        %s3331 = sand.u32 %s324, 1
        %s3332 = scalar_lea.sflag [#allocation4], %s3331
        %s3333 = sand.u32 %s324, 1
        %s3334 = smul.addr %s3333, 8
        %s3335 = scalar_lea.vmem [#allocation19], %s3334
        %s3336 = sand.u32 %s350, 1
        %s3337 = scalar_lea.sflag [#allocation21], %s3336
        %s3338 = sand.u32 %s350, 1
        %s3339 = scalar_lea.vmem [#allocation20], %s3338
        // Predicated region
        $region113: #{encoder_forward.1} parent=71 // pred_check
          %p3340 = pneg %p334
        $region114: #{encoder_forward.1} parent=71 // pred_check_branch
          %3342 = sbr.rel (%p3340) target = $region116
        $region115: #{encoder_forward.1} parent=71 // pred_region
          %s3344 = ssub.s32 128, 128
          %3345 = vsyncadd %s3332, %s3344
          %s3346 = smul.addr %s38, 128
          %s3347 = scalar_lea.hbm %s13, %s3346
          %s3349 = sshll.u32 %s3335, 4
          %s3350 = int_to_ptr.vmem [resolvable:$true] %s3349
          %3352 = dma.vmem_to_hbm [thread:$0]  %s3350, 128, %s3347, %s3332
        $region116: #{encoder_forward.1} parent=71 // pred_fallthru
          _
        // Predicated region
        $region117: #{encoder_forward.1} parent=71 // pred_check
          %p3353 = pneg %p360
        $region118: #{encoder_forward.1} parent=71 // pred_check_branch
          %3355 = sbr.rel (%p3353) target = $region120
        $region119: #{encoder_forward.1} parent=71 // pred_region
          %s3357 = ssub.s32 16, 16
          %3358 = vsyncadd %s3337, %s3357
          %s3359 = smul.addr %s38, 16
          %s3360 = scalar_lea.hbm %s14, %s3359
          %s3362 = sshll.u32 %s3339, 4
          %s3363 = int_to_ptr.vmem [resolvable:$true] %s3362
          %3365 = dma.vmem_to_hbm [thread:$0]  %s3363, 16, %s3360, %s3337
        $region120: #{encoder_forward.1} parent=71 // pred_fallthru
          _
      $region72: #{encoder_forward.1} parent=5 // pred_fallthru
        _
      %p3366 = scmp.le.s32.totalorder 2, %s33
      // Predicated region
      $region121: #{encoder_forward.1} parent=5 // pred_check
        %p3367 = pneg %p3366
      $region122: #{encoder_forward.1} parent=5 // pred_check_branch
        %3369 = sbr.rel (%p3367) target = $region124
      $region123: #{encoder_forward.1} parent=5 // pred_region
        %s3370 = ssub.s32 %s33, 2
        // Predicated region
        $region125: #{encoder_forward.1} parent=123 // pred_check
          %p3371 = pneg %p340
        $region126: #{encoder_forward.1} parent=123 // pred_check_branch
          %3373 = sbr.rel (%p3371) target = $region128
        $region127: #{encoder_forward.1} parent=123 // pred_region
          %s3374 = sand.u32 %s325, 1
          %s3375 = scalar_lea.sflag [#allocation4], %s3374
          %s3376 = sand.u32 %s325, 1
          %s3377 = smul.addr %s3376, 8
          %s3378 = scalar_lea.vmem [#allocation19], %s3377
          %3379 = dma.done %s3375, 128
        $region128: #{encoder_forward.1} parent=123 // pred_fallthru
          _
        // Predicated region
        $region129: #{encoder_forward.1} parent=123 // pred_check
          %p3380 = pneg %p366
        $region130: #{encoder_forward.1} parent=123 // pred_check_branch
          %3382 = sbr.rel (%p3380) target = $region132
        $region131: #{encoder_forward.1} parent=123 // pred_region
          %s3383 = sand.u32 %s351, 1
          %s3384 = scalar_lea.sflag [#allocation21], %s3383
          %s3385 = sand.u32 %s351, 1
          %s3386 = scalar_lea.vmem [#allocation20], %s3385
          %3387 = dma.done %s3384, 16
        $region132: #{encoder_forward.1} parent=123 // pred_fallthru
          _
      $region124: #{encoder_forward.1} parent=5 // pred_fallthru
        _
    $region6: #{encoder_forward.1} parent=1 // loop_footer
      %s37 = sadd.s32 1, %s33
    $region7: #{encoder_forward.1} parent=1 // loop_footer_branch
      %32 = sbr.rel target = $region3
    $region8: #{encoder_forward.1} parent=1 // loop_exit
      _
    %3388 = vsyncpa [#allocation3], 1
    %s3389 = scalar_lea.sflag [#allocation3], 1
    %3390 = vsyncpa %s3389, 1
    %3391 = vsyncpa [#allocation6], 1
    %3392 = vsyncpa [#allocation9], 1
    %3393 = vsyncpa [#allocation12], 1
    %3394 = vsyncpa [#allocation15], 1
    %3395 = vsyncpa [#allocation18], 1
    %3396 = vsyncpa [#allocation4], 1
    %s3397 = scalar_lea.sflag [#allocation4], 1
    %3398 = vsyncpa %s3397, 1
    %3399 = vsyncpa [#allocation21], 1
    %s3400 = scalar_lea.sflag [#allocation21], 1
    %3401 = vsyncpa %s3400, 1

</llo_original>
